<compile_context>
chip_gen: v7x
topology: tpu7x:2x2x1
jax: 0.10.0
libtpu: 0.0.40
codegen_flags: <defaults>
</compile_context>

<pallas_src>
import jax
import jax.numpy as jnp
from jax import lax
from jax.experimental import pallas as pl
from jax.experimental.pallas import tpu as pltpu

CHANNELS = 3
IMG_SIZE = 32
LATENT_DIM = 100
INIT_SIZE = IMG_SIZE // 4              # 8
C1 = 128                               # conv1 input channels
C2 = 64                                # conv1 output / conv2 input channels
HIDDEN = C1 * INIT_SIZE * INIT_SIZE    # 8192
K_PAD = 128                            # latent dim zero-padded to 128 for the MXU
LEAKY_SLOPE = 0.2
BN_EPS = 1e-5
_VMEM_LIMIT = 32 * 1024 * 1024


def _leaky(x):
    return jnp.where(x > 0, x, LEAKY_SLOPE * x)


def _batch_block(B, max_blk=4):
    """Largest divisor of B that is <= max_blk while keeping >= 2 grid steps
    (two parallel steps keep both v7x TensorCores busy; v5e/v6e don't care)."""
    if B <= 1:
        return 1
    best = 1
    for blk in range(1, min(B, max_blk) + 1):
        if B % blk == 0 and B // blk >= 2:
            best = blk
    return best


# ------------------- Kernel 1: Linear + bias + LeakyReLU --------------------
def _linear_kernel(z_ref, w_ref, b_ref, o_ref):
    acc = jnp.dot(z_ref[...], w_ref[...], preferred_element_type=jnp.float32)
    o_ref[...] = _leaky(acc + b_ref[...]).astype(o_ref.dtype)


def linear_bias_leaky(z_bf16, w_bf16, b, tn=2048):
    M, K = z_bf16.shape
    Kw, N = w_bf16.shape
    assert K == Kw and N % tn == 0
    return pl.pallas_call(
        _linear_kernel,
        out_shape=jax.ShapeDtypeStruct((M, N), jnp.bfloat16),
        grid_spec=pltpu.PrefetchScalarGridSpec(
            num_scalar_prefetch=0,
            grid=(N // tn,),
            in_specs=[
                pl.BlockSpec((M, K), lambda j: (0, 0)),
                pl.BlockSpec((K, tn), lambda j: (0, j)),
                pl.BlockSpec((1, tn), lambda j: (0, j)),
            ],
            out_specs=pl.BlockSpec((M, tn), lambda j: (0, j)),
        ),
        compiler_params=pltpu.CompilerParams(
            dimension_semantics=("parallel",),
            vmem_limit_bytes=_VMEM_LIMIT),
    )(z_bf16, w_bf16, b.reshape(1, N))


# -- Kernel 2: ConvTranspose2d(128->64, 4,2,1), taps folded into K, in-kernel
#    padding, packed bf16 output + per-step BatchNorm partial statistics ------
def _conv1_kernel(x_ref, w_ref, o_ref, st_ref, pad_ref):
    # x_ref : (Bb, 8, 8, 128) bf16 NHWC (unpadded)
    # w_ref : (2, 2, 4*128, 64) bf16 -- 4 taps folded into the contraction dim
    # o_ref : (Bb, 8, 2, 8, 128) bf16; o[b,i,py,j, px*64+c] = y[b,2i+py,2j+px,c]
    # st_ref: (1, 2, 64) f32 per-step partial (sum, sumsq) over pixels
    # pad_ref:(Bb, 10, 10, 128) f32 zero-padded copy of x (in-kernel padding)
    bb, H, W, cin = x_ref.shape
    cout = w_ref.shape[-1]
    M = bb * H * W

    pad_ref[...] = jnp.zeros_like(pad_ref)
    pad_ref[:, 1:H + 1, 1:W + 1, :] = x_ref[...].astype(pad_ref.dtype)

    # 9 distinct shifted windows shared by the 16 taps: slice/reshape/cast once
    win = [[pad_ref[:, r:r + H, c:c + W, :]
            .reshape(M, cin).astype(jnp.bfloat16)
            for c in range(3)] for r in range(3)]

    ch_sum = jnp.zeros((1, cout), jnp.float32)
    ch_sq = jnp.zeros((1, cout), jnp.float32)
    for py in range(2):
        parts = []
        for px in range(2):
            lhs = jnp.concatenate(
                [win[py + dy][px + dx] for dy in range(2) for dx in range(2)],
                axis=-1)                                          # (M, 512)
            acc = jnp.dot(lhs, w_ref[py, px],
                          preferred_element_type=jnp.float32)     # (M, 64)
            ch_sum = ch_sum + jnp.sum(acc, axis=0, keepdims=True)
            ch_sq = ch_sq + jnp.sum(acc * acc, axis=0, keepdims=True)
            parts.append(acc)
        # pack the two x-parities into one 128-wide lane-dense row
        val = jnp.concatenate(parts, axis=-1).reshape(bb, H, W, 2 * cout)
        o_ref[:, :, py, :, :] = val.astype(o_ref.dtype)
    st_ref[0] = jnp.concatenate([ch_sum, ch_sq], axis=0)


def conv_transpose1(x_nhwc, w_merged, b_blk):
    B, H, W, Cin = x_nhwc.shape
    Cout = w_merged.shape[-1]
    nsteps = B // b_blk
    return pl.pallas_call(
        _conv1_kernel,
        out_shape=(
            jax.ShapeDtypeStruct((B, H, 2, W, 2 * Cout), jnp.bfloat16),
            jax.ShapeDtypeStruct((nsteps, 2, Cout), jnp.float32),
        ),
        grid_spec=pltpu.PrefetchScalarGridSpec(
            num_scalar_prefetch=0,
            grid=(nsteps,),
            in_specs=[
                pl.BlockSpec((b_blk, H, W, Cin), lambda b: (b, 0, 0, 0)),
                pl.BlockSpec((2, 2, 4 * Cin, Cout), lambda b: (0, 0, 0, 0)),
            ],
            out_specs=[
                pl.BlockSpec((b_blk, H, 2, W, 2 * Cout),
                             lambda b: (b, 0, 0, 0, 0)),
                pl.BlockSpec((1, 2, Cout), lambda b: (b, 0, 0)),
            ],
            scratch_shapes=[
                pltpu.VMEM((b_blk, H + 2, W + 2, Cin), jnp.float32)],
        ),
        compiler_params=pltpu.CompilerParams(
            dimension_semantics=("parallel",),
            vmem_limit_bytes=_VMEM_LIMIT),
    )(x_nhwc, w_merged)


# -- Kernel 3: fused BatchNorm + LeakyReLU prologue, ConvTranspose2d(64->3,
#    4,2,1) with taps folded into K (channel-major, pixels on lanes), Tanh ----
def _conv2_kernel(x_ref, sc_ref, sh_ref, w_ref, o_ref, pad_ref):
    # x_ref : (Bb, 16, 16, 64) bf16 raw conv1 output (pre-BN)
    # sc/sh : (1, 64) f32 fused BatchNorm scale / shift
    # w_ref : (2, 2, 3, 4*64) bf16 channel-major merged weights
    # o_ref : (Bb, 2, 2, 3, 256) f32 -- lane axis = pixels (dense stores)
    # pad_ref:(Bb, 18, 18, 64) f32 zero-padded BN+LeakyReLU activations
    bb, H, W, cin = x_ref.shape
    cout = w_ref.shape[2]
    M = bb * H * W

    pad_ref[...] = jnp.zeros_like(pad_ref)
    y = x_ref[...].astype(jnp.float32) * sc_ref[...] + sh_ref[...]
    pad_ref[:, 1:H + 1, 1:W + 1, :] = _leaky(y)

    win = [[pad_ref[:, r:r + H, c:c + W, :]
            .reshape(M, cin).astype(jnp.bfloat16)
            for c in range(3)] for r in range(3)]

    for py in range(2):
        for px in range(2):
            rhs = jnp.concatenate(
                [win[py + dy][px + dx] for dy in range(2) for dx in range(2)],
                axis=-1)                                          # (M, 256)
            acc = lax.dot_general(                                # (cout, M)
                w_ref[py, px], rhs, (((1,), (1,)), ((), ())),
                preferred_element_type=jnp.float32)
            acc = jnp.tanh(acc).reshape(cout, bb, H * W)
            for b in range(bb):
                o_ref[b, py, px, :, :] = acc[:, b, :].astype(o_ref.dtype)


def conv_transpose2(x_nhwc, scale, shift, w_merged, b_blk):
    B, H, W, Cin = x_nhwc.shape
    Cout = w_merged.shape[2]
    nsteps = B // b_blk
    return pl.pallas_call(
        _conv2_kernel,
        out_shape=jax.ShapeDtypeStruct((B, 2, 2, Cout, H * W), jnp.float32),
        grid_spec=pltpu.PrefetchScalarGridSpec(
            num_scalar_prefetch=0,
            grid=(nsteps,),
            in_specs=[
                pl.BlockSpec((b_blk, H, W, Cin), lambda b: (b, 0, 0, 0)),
                pl.BlockSpec((1, Cin), lambda b: (0, 0)),
                pl.BlockSpec((1, Cin), lambda b: (0, 0)),
                pl.BlockSpec((2, 2, Cout, 4 * Cin), lambda b: (0, 0, 0, 0)),
            ],
            out_specs=pl.BlockSpec((b_blk, 2, 2, Cout, H * W),
                                   lambda b: (b, 0, 0, 0, 0)),
            scratch_shapes=[
                pltpu.VMEM((b_blk, H + 2, W + 2, Cin), jnp.float32)],
        ),
        compiler_params=pltpu.CompilerParams(
            dimension_semantics=("parallel",),
            vmem_limit_bytes=_VMEM_LIMIT),
    )(x_nhwc, scale, shift, w_merged)


# ------------------------------ parameter prep ------------------------------
def permute_linear_params(w_lin, b_lin):
    # Reorder Linear output features (c, i, j) -> (i, j, c) so the (B,8,8,128)
    # reshape of the Linear output is directly NHWC; pad K 100 -> 128 (zeros).
    w = w_lin.reshape(LATENT_DIM, C1, INIT_SIZE, INIT_SIZE)
    w = jnp.transpose(w, (0, 2, 3, 1)).reshape(LATENT_DIM, HIDDEN)
    w = jnp.pad(w, ((0, K_PAD - LATENT_DIM), (0, 0)))
    b = b_lin.reshape(C1, INIT_SIZE, INIT_SIZE)
    b = jnp.transpose(b, (1, 2, 0)).reshape(HIDDEN)
    return w.astype(jnp.bfloat16), b.astype(jnp.float32)


def prep_convt_weight(w, channel_major=False):
    # w: PyTorch ConvTranspose2d weight (Cin, Cout, 4, 4).
    # Fold the 4 (dy,dx) taps into the contraction dim:
    #   -> (2, 2, 4*Cin, Cout)        (conv1, row-major LHS form)
    #   -> (2, 2, Cout, 4*Cin)        (conv2, channel-major form)
    # Parity (py,px) tap (dy,dx) reads padded offset (py+dy, px+dx) and uses
    # kernel element (3-py-2*dy, 3-px-2*dx); the tap order matches the
    # in-kernel window concatenation order.
    py_rows = []
    for py in range(2):
        px_rows = []
        for px in range(2):
            taps = []
            for dy in range(2):
                for dx in range(2):
                    m = w[:, :, 3 - py - 2 * dy, 3 - px - 2 * dx]  # (Cin, Cout)
                    taps.append(m.T if channel_major else m)
            px_rows.append(jnp.concatenate(taps, axis=1 if channel_major else 0))
        py_rows.append(jnp.stack(px_rows))
    return jnp.stack(py_rows).astype(jnp.bfloat16)


# ------------------------------ Generator forward ---------------------------
def generator_forward(z, params):
    B = z.shape[0]
    b_blk = _batch_block(B)

    # Linear + LeakyReLU (bf16 output, features already in NHWC order)
    zp = jnp.pad(z, ((0, 0), (0, K_PAD - LATENT_DIM))).astype(jnp.bfloat16)
    h = linear_bias_leaky(zp, params["w_lin"], params["b_lin"])     # (B, 8192) bf16
    x = h.reshape(B, INIT_SIZE, INIT_SIZE, C1)                      # NHWC free view

    # ConvTranspose(128->64): packed bf16 output + per-step BN partial stats
    y1, stats = conv_transpose1(x, params["w1p"], b_blk)

    # BatchNorm batch statistics: tiny XLA reduction over per-step partials
    cnt = jnp.float32(B * (2 * INIT_SIZE) * (2 * INIT_SIZE))
    mean = jnp.sum(stats[:, 0, :], axis=0) / cnt
    # TODO(synk): E[x^2]-E[x]^2 can cancel for large channel means; switch to a
    # mean-centered second pass if tolerances are ever tightened.
    var = jnp.sum(stats[:, 1, :], axis=0) / cnt - mean * mean
    inv = lax.rsqrt(var + BN_EPS)
    scale = (inv * params["gamma"]).reshape(1, C2)
    shift = (params["beta"] - mean * inv * params["gamma"]).reshape(1, C2)

    # (B,8,2,8,128) packed -> (B,16,16,64) NHWC is a free contiguous view
    x2 = y1.reshape(B, 2 * INIT_SIZE, 2 * INIT_SIZE, C2)

    # fused BN apply + LeakyReLU + ConvTranspose(64->3) + Tanh
    y2 = conv_transpose2(x2, scale, shift, params["w2p"], b_blk)    # (B,2,2,3,256)

    out = y2.reshape(B, 2, 2, CHANNELS, 2 * INIT_SIZE, 2 * INIT_SIZE)
    out = jnp.transpose(out, (0, 3, 4, 1, 5, 2))                    # (B,3,16,2,16,2)
    return out.reshape(B, CHANNELS, IMG_SIZE, IMG_SIZE)             # NCHW


# -------------------------- pure-JAX reference (checking) -------------------
def _convT_ref(x_nchw, w):  # w: (Cin, Cout, 4, 4)
    w_oihw = jnp.transpose(w, (1, 0, 2, 3))[:, :, ::-1, ::-1]
    return lax.conv_general_dilated(
        x_nchw, w_oihw, window_strides=(1, 1),
        padding=[(2, 2), (2, 2)], lhs_dilation=(2, 2), rhs_dilation=(1, 1),
        dimension_numbers=("NCHW", "OIHW", "NCHW"))


def reference_forward(z, w_lin, b_lin, w1, w2, gamma, beta):
    h = z @ w_lin + b_lin
    h = jnp.where(h > 0, h, LEAKY_SLOPE * h)
    x = h.reshape(z.shape[0], C1, INIT_SIZE, INIT_SIZE)
    x = _convT_ref(x, w1)
    mean = jnp.mean(x, axis=(0, 2, 3), keepdims=True)
    var = jnp.mean((x - mean) ** 2, axis=(0, 2, 3), keepdims=True)
    x = (x - mean) * lax.rsqrt(var + BN_EPS)
    x = x * gamma.reshape(1, -1, 1, 1) + beta.reshape(1, -1, 1, 1)
    x = jnp.where(x > 0, x, LEAKY_SLOPE * x)
    x = _convT_ref(x, w2)
    return jnp.tanh(x)


if __name__ == "__main__":
    key = jax.random.PRNGKey(0)
    kz, k1, k2, k3, k4 = jax.random.split(key, 5)
    B = 2
    z = jax.random.normal(kz, (B, LATENT_DIM), jnp.float32)

    # synthetic parameters in PyTorch shapes:
    # Linear(100, 8192), ConvT(128->64, 4x4), BN(64), ConvT(64->3, 4x4)
    w_lin = jax.random.normal(k1, (LATENT_DIM, HIDDEN), jnp.float32) * 0.05
    b_lin = jax.random.normal(k2, (HIDDEN,), jnp.float32) * 0.05
    w1 = jax.random.normal(k3, (C1, C2, 4, 4), jnp.float32) * 0.05
    w2 = jax.random.normal(k4, (C2, CHANNELS, 4, 4), jnp.float32) * 0.05
    gamma = jnp.ones((C2,), jnp.float32)
    beta = jnp.zeros((C2,), jnp.float32)

    w_lin_p, b_lin_p = permute_linear_params(w_lin, b_lin)
    params = dict(
        w_lin=w_lin_p, b_lin=b_lin_p,
        w1p=prep_convt_weight(w1, channel_major=False),   # (2,2,512,64) bf16
        w2p=prep_convt_weight(w2, channel_major=True),    # (2,2,3,256)  bf16
        gamma=gamma, beta=beta,
    )

    out = jax.jit(generator_forward)(z, params)
    out = jax.block_until_ready(out)
    assert out.shape == (B, CHANNELS, IMG_SIZE, IMG_SIZE), out.shape

    ref = reference_forward(z, w_lin, b_lin, w1, w2, gamma, beta)
    max_err = float(jnp.max(jnp.abs(out - ref)))
    assert jnp.allclose(out, ref, atol=5e-2, rtol=5e-2), max_err

    print("KERNEL_OK")
</pallas_src>

<mosaic_0001>
module attributes {stable_mosaic.version = 11 : i64} {
  func.func @_linear_kernel(%arg0: i32, %arg1: memref<2x128xbf16, #tpu.memory_space<vmem>>, %arg2: memref<128x2048xbf16, #tpu.memory_space<vmem>>, %arg3: memref<1x2048xf32, #tpu.memory_space<vmem>>, %arg4: memref<2x2048xbf16, #tpu.memory_space<vmem>>) attributes {dimension_semantics = [#tpu.dimension_semantics<parallel>], iteration_bounds = array<i64: 4>, scalar_prefetch = 0 : i64, scratch_operands = 0 : i64, tpu.core_type = #tpu.core_type<tc>, window_params = [{pipeline_mode = #tpu.pipeline_mode<synchronous>, transform_indices = @transform_0, window_bounds = array<i64: 2, 128>}, {transform_indices = @transform_1, window_bounds = array<i64: 128, 2048>}, {transform_indices = @transform_2, window_bounds = array<i64: 1, 2048>}, {transform_indices = @transform_3, window_bounds = array<i64: 2, 2048>}]} {
    %c0 = arith.constant 0 : index
    %c0_0 = arith.constant 0 : index
    %0 = vector.load %arg1[%c0, %c0_0] : memref<2x128xbf16, #tpu.memory_space<vmem>>, vector<2x128xbf16>
    %c0_1 = arith.constant 0 : index
    %c0_2 = arith.constant 0 : index
    %1 = vector.load %arg2[%c0_1, %c0_2] : memref<128x2048xbf16, #tpu.memory_space<vmem>>, vector<128x2048xbf16>
    %cst = arith.constant dense<0.000000e+00> : vector<2x2048xf32>
    %2 = tpu.matmul %0, %1, %cst {dimension_numbers = #tpu.dot_dimension_numbers<[1], [0], [0], [1], [0, 0, 1, 1], [], []>} : vector<2x128xbf16>, vector<128x2048xbf16>, vector<2x2048xf32> -> vector<2x2048xf32>
    %c0_3 = arith.constant 0 : index
    %c0_4 = arith.constant 0 : index
    %3 = vector.load %arg3[%c0_3, %c0_4] : memref<1x2048xf32, #tpu.memory_space<vmem>>, vector<1x2048xf32>
    %4 = vector.broadcast %3 : vector<1x2048xf32> to vector<2x2048xf32>
    %5 = arith.addf %2, %4 : vector<2x2048xf32>
    %cst_5 = arith.constant 0.000000e+00 : f32
    %6 = vector.broadcast %cst_5 : f32 to vector<2x2048xf32>
    %7 = arith.cmpf ogt, %5, %6 : vector<2x2048xf32>
    %cst_6 = arith.constant 2.000000e-01 : f32
    %8 = vector.broadcast %cst_6 : f32 to vector<2x2048xf32>
    %9 = arith.mulf %8, %5 : vector<2x2048xf32>
    %10 = arith.select %7, %5, %9 : vector<2x2048xi1>, vector<2x2048xf32>
    %11 = arith.truncf %10 : vector<2x2048xf32> to vector<2x2048xbf16>
    %c0_7 = arith.constant 0 : index
    %c0_8 = arith.constant 0 : index
    %12 = vector.load %arg4[%c0_7, %c0_8] : memref<2x2048xbf16, #tpu.memory_space<vmem>>, vector<2x2048xbf16>
    tpu.vector_store %arg4[%c0_7, %c0_8], %11 {strides = array<i32>} : memref<2x2048xbf16, #tpu.memory_space<vmem>>, vector<2x2048xbf16>,
    return
  }
  func.func @transform_0(%arg0: i32) -> (i32, i32) {
    %c0_i32 = arith.constant 0 : i32
    %c0_i32_0 = arith.constant 0 : i32
    %c0_i32_1 = arith.constant 0 : i32
    return %c0_i32, %c0_i32_0 : i32, i32
  }
  func.func @transform_1(%arg0: i32) -> (i32, i32) {
    %c0_i32 = arith.constant 0 : i32
    %c0_i32_0 = arith.constant 0 : i32
    return %c0_i32, %arg0 : i32, i32
  }
  func.func @transform_2(%arg0: i32) -> (i32, i32) {
    %c0_i32 = arith.constant 0 : i32
    %c0_i32_0 = arith.constant 0 : i32
    return %c0_i32, %arg0 : i32, i32
  }
  func.func @transform_3(%arg0: i32) -> (i32, i32) {
    %c0_i32 = arith.constant 0 : i32
    %c0_i32_0 = arith.constant 0 : i32
    return %c0_i32, %arg0 : i32, i32
  }
}

module attributes {stable_mosaic.version = 11 : i64} {
  func.func @_conv1_kernel(%arg0: i32, %arg1: memref<1x8x8x128xbf16, #tpu.memory_space<vmem>>, %arg2: memref<2x2x512x64xbf16, #tpu.memory_space<vmem>>, %arg3: memref<1x8x2x8x128xbf16, #tpu.memory_space<vmem>>, %arg4: memref<1x2x64xf32, #tpu.memory_space<vmem>>, %arg5: memref<1x10x10x128xf32, #tpu.memory_space<vmem>>) attributes {dimension_semantics = [#tpu.dimension_semantics<parallel>], iteration_bounds = array<i64: 2>, scalar_prefetch = 0 : i64, scratch_operands = 1 : i64, tpu.core_type = #tpu.core_type<tc>, window_params = [{transform_indices = @transform_0, window_bounds = array<i64: 1, 8, 8, 128>}, {pipeline_mode = #tpu.pipeline_mode<synchronous>, transform_indices = @transform_1, window_bounds = array<i64: 2, 2, 512, 64>}, {transform_indices = @transform_2, window_bounds = array<i64: 1, 8, 2, 8, 128>}, {transform_indices = @transform_3, window_bounds = array<i64: 1, 2, 64>}]} {
    %cst = arith.constant 0.000000e+00 : f32
    %0 = vector.broadcast %cst : f32 to vector<1x10x10x128xf32>
    %c0 = arith.constant 0 : index
    %c0_0 = arith.constant 0 : index
    %c0_1 = arith.constant 0 : index
    %c0_2 = arith.constant 0 : index
    %1 = vector.load %arg5[%c0, %c0_0, %c0_1, %c0_2] : memref<1x10x10x128xf32, #tpu.memory_space<vmem>>, vector<1x10x10x128xf32>
    tpu.vector_store %arg5[%c0, %c0_0, %c0_1, %c0_2], %0 {strides = array<i32>} : memref<1x10x10x128xf32, #tpu.memory_space<vmem>>, vector<1x10x10x128xf32>,
    %c0_3 = arith.constant 0 : index
    %c0_4 = arith.constant 0 : index
    %c0_5 = arith.constant 0 : index
    %c0_6 = arith.constant 0 : index
    %2 = vector.load %arg1[%c0_3, %c0_4, %c0_5, %c0_6] : memref<1x8x8x128xbf16, #tpu.memory_space<vmem>>, vector<1x8x8x128xbf16>
    %3 = arith.extf %2 : vector<1x8x8x128xbf16> to vector<1x8x8x128xf32>
    %c0_7 = arith.constant 0 : index
    %c1 = arith.constant 1 : index
    %c1_8 = arith.constant 1 : index
    %c0_9 = arith.constant 0 : index
    %4 = vector.load %arg5[%c0_7, %c1, %c1_8, %c0_9] : memref<1x10x10x128xf32, #tpu.memory_space<vmem>>, vector<1x8x8x128xf32>
    tpu.vector_store %arg5[%c0_7, %c1, %c1_8, %c0_9], %3 {strides = array<i32>} : memref<1x10x10x128xf32, #tpu.memory_space<vmem>>, vector<1x8x8x128xf32>,
    %c0_10 = arith.constant 0 : index
    %c0_11 = arith.constant 0 : index
    %c0_12 = arith.constant 0 : index
    %c0_13 = arith.constant 0 : index
    %5 = vector.load %arg5[%c0_10, %c0_11, %c0_12, %c0_13] : memref<1x10x10x128xf32, #tpu.memory_space<vmem>>, vector<1x8x8x128xf32>
    %6 = vector.shape_cast %5 : vector<1x8x8x128xf32> to vector<64x128xf32>
    %7 = arith.truncf %6 : vector<64x128xf32> to vector<64x128xbf16>
    %c0_14 = arith.constant 0 : index
    %c0_15 = arith.constant 0 : index
    %c1_16 = arith.constant 1 : index
    %c0_17 = arith.constant 0 : index
    %8 = vector.load %arg5[%c0_14, %c0_15, %c1_16, %c0_17] : memref<1x10x10x128xf32, #tpu.memory_space<vmem>>, vector<1x8x8x128xf32>
    %9 = vector.shape_cast %8 : vector<1x8x8x128xf32> to vector<64x128xf32>
    %10 = arith.truncf %9 : vector<64x128xf32> to vector<64x128xbf16>
    %c0_18 = arith.constant 0 : index
    %c0_19 = arith.constant 0 : index
    %c2 = arith.constant 2 : index
    %c0_20 = arith.constant 0 : index
    %11 = vector.load %arg5[%c0_18, %c0_19, %c2, %c0_20] : memref<1x10x10x128xf32, #tpu.memory_space<vmem>>, vector<1x8x8x128xf32>
    %12 = vector.shape_cast %11 : vector<1x8x8x128xf32> to vector<64x128xf32>
    %13 = arith.truncf %12 : vector<64x128xf32> to vector<64x128xbf16>
    %c0_21 = arith.constant 0 : index
    %c1_22 = arith.constant 1 : index
    %c0_23 = arith.constant 0 : index
    %c0_24 = arith.constant 0 : index
    %14 = vector.load %arg5[%c0_21, %c1_22, %c0_23, %c0_24] : memref<1x10x10x128xf32, #tpu.memory_space<vmem>>, vector<1x8x8x128xf32>
    %15 = vector.shape_cast %14 : vector<1x8x8x128xf32> to vector<64x128xf32>
    %16 = arith.truncf %15 : vector<64x128xf32> to vector<64x128xbf16>
    %c0_25 = arith.constant 0 : index
    %c1_26 = arith.constant 1 : index
    %c1_27 = arith.constant 1 : index
    %c0_28 = arith.constant 0 : index
    %17 = vector.load %arg5[%c0_25, %c1_26, %c1_27, %c0_28] : memref<1x10x10x128xf32, #tpu.memory_space<vmem>>, vector<1x8x8x128xf32>
    %18 = vector.shape_cast %17 : vector<1x8x8x128xf32> to vector<64x128xf32>
    %19 = arith.truncf %18 : vector<64x128xf32> to vector<64x128xbf16>
    %c0_29 = arith.constant 0 : index
    %c1_30 = arith.constant 1 : index
    %c2_31 = arith.constant 2 : index
    %c0_32 = arith.constant 0 : index
    %20 = vector.load %arg5[%c0_29, %c1_30, %c2_31, %c0_32] : memref<1x10x10x128xf32, #tpu.memory_space<vmem>>, vector<1x8x8x128xf32>
    %21 = vector.shape_cast %20 : vector<1x8x8x128xf32> to vector<64x128xf32>
    %22 = arith.truncf %21 : vector<64x128xf32> to vector<64x128xbf16>
    %c0_33 = arith.constant 0 : index
    %c2_34 = arith.constant 2 : index
    %c0_35 = arith.constant 0 : index
    %c0_36 = arith.constant 0 : index
    %23 = vector.load %arg5[%c0_33, %c2_34, %c0_35, %c0_36] : memref<1x10x10x128xf32, #tpu.memory_space<vmem>>, vector<1x8x8x128xf32>
    %24 = vector.shape_cast %23 : vector<1x8x8x128xf32> to vector<64x128xf32>
    %25 = arith.truncf %24 : vector<64x128xf32> to vector<64x128xbf16>
    %c0_37 = arith.constant 0 : index
    %c2_38 = arith.constant 2 : index
    %c1_39 = arith.constant 1 : index
    %c0_40 = arith.constant 0 : index
    %26 = vector.load %arg5[%c0_37, %c2_38, %c1_39, %c0_40] : memref<1x10x10x128xf32, #tpu.memory_space<vmem>>, vector<1x8x8x128xf32>
    %27 = vector.shape_cast %26 : vector<1x8x8x128xf32> to vector<64x128xf32>
    %28 = arith.truncf %27 : vector<64x128xf32> to vector<64x128xbf16>
    %c0_41 = arith.constant 0 : index
    %c2_42 = arith.constant 2 : index
    %c2_43 = arith.constant 2 : index
    %c0_44 = arith.constant 0 : index
    %29 = vector.load %arg5[%c0_41, %c2_42, %c2_43, %c0_44] : memref<1x10x10x128xf32, #tpu.memory_space<vmem>>, vector<1x8x8x128xf32>
    %30 = vector.shape_cast %29 : vector<1x8x8x128xf32> to vector<64x128xf32>
    %31 = arith.truncf %30 : vector<64x128xf32> to vector<64x128xbf16>
    %cst_45 = arith.constant 0.000000e+00 : f32
    %32 = vector.broadcast %cst_45 : f32 to vector<1x64xf32>
    %cst_46 = arith.constant 0.000000e+00 : f32
    %33 = vector.broadcast %cst_46 : f32 to vector<1x64xf32>
    %34 = tpu.concatenate %7, %10, %16, %19 in 1 : vector<64x128xbf16>, vector<64x128xbf16>, vector<64x128xbf16>, vector<64x128xbf16> -> vector<64x512xbf16>
    %c0_47 = arith.constant 0 : index
    %c0_48 = arith.constant 0 : index
    %c0_49 = arith.constant 0 : index
    %c0_50 = arith.constant 0 : index
    %35 = vector.load %arg2[%c0_47, %c0_48, %c0_49, %c0_50] : memref<2x2x512x64xbf16, #tpu.memory_space<vmem>>, vector<1x1x512x64xbf16>
    %36 = vector.shape_cast %35 : vector<1x1x512x64xbf16> to vector<512x64xbf16>
    %cst_51 = arith.constant dense<0.000000e+00> : vector<64x64xf32>
    %37 = tpu.matmul %34, %36, %cst_51 {dimension_numbers = #tpu.dot_dimension_numbers<[1], [0], [0], [1], [0, 0, 1, 1], [], []>} : vector<64x512xbf16>, vector<512x64xbf16>, vector<64x64xf32> -> vector<64x64xf32>
    %cst_52 = arith.constant dense<0.000000e+00> : vector<64xf32>
    %38 = vector.multi_reduction <add>, %37, %cst_52 [0] : vector<64x64xf32> to vector<64xf32>
    %39 = vector.shape_cast %38 : vector<64xf32> to vector<1x64xf32>
    %40 = arith.addf %32, %39 : vector<1x64xf32>
    %41 = arith.mulf %37, %37 : vector<64x64xf32>
    %cst_53 = arith.constant dense<0.000000e+00> : vector<64xf32>
    %42 = vector.multi_reduction <add>, %41, %cst_53 [0] : vector<64x64xf32> to vector<64xf32>
    %43 = vector.shape_cast %42 : vector<64xf32> to vector<1x64xf32>
    %44 = arith.addf %33, %43 : vector<1x64xf32>
    %45 = tpu.concatenate %10, %13, %19, %22 in 1 : vector<64x128xbf16>, vector<64x128xbf16>, vector<64x128xbf16>, vector<64x128xbf16> -> vector<64x512xbf16>
    %c0_54 = arith.constant 0 : index
    %c1_55 = arith.constant 1 : index
    %c0_56 = arith.constant 0 : index
    %c0_57 = arith.constant 0 : index
    %46 = vector.load %arg2[%c0_54, %c1_55, %c0_56, %c0_57] : memref<2x2x512x64xbf16, #tpu.memory_space<vmem>>, vector<1x1x512x64xbf16>
    %47 = vector.shape_cast %46 : vector<1x1x512x64xbf16> to vector<512x64xbf16>
    %cst_58 = arith.constant dense<0.000000e+00> : vector<64x64xf32>
    %48 = tpu.matmul %45, %47, %cst_58 {dimension_numbers = #tpu.dot_dimension_numbers<[1], [0], [0], [1], [0, 0, 1, 1], [], []>} : vector<64x512xbf16>, vector<512x64xbf16>, vector<64x64xf32> -> vector<64x64xf32>
    %cst_59 = arith.constant dense<0.000000e+00> : vector<64xf32>
    %49 = vector.multi_reduction <add>, %48, %cst_59 [0] : vector<64x64xf32> to vector<64xf32>
    %50 = vector.shape_cast %49 : vector<64xf32> to vector<1x64xf32>
    %51 = arith.addf %40, %50 : vector<1x64xf32>
    %52 = arith.mulf %48, %48 : vector<64x64xf32>
    %cst_60 = arith.constant dense<0.000000e+00> : vector<64xf32>
    %53 = vector.multi_reduction <add>, %52, %cst_60 [0] : vector<64x64xf32> to vector<64xf32>
    %54 = vector.shape_cast %53 : vector<64xf32> to vector<1x64xf32>
    %55 = arith.addf %44, %54 : vector<1x64xf32>
    %56 = tpu.concatenate %37, %48 in 1 : vector<64x64xf32>, vector<64x64xf32> -> vector<64x128xf32>
    %57 = vector.shape_cast %56 : vector<64x128xf32> to vector<1x8x8x128xf32>
    %58 = arith.truncf %57 : vector<1x8x8x128xf32> to vector<1x8x8x128xbf16>
    %c0_61 = arith.constant 0 : index
    %c0_62 = arith.constant 0 : index
    %c0_63 = arith.constant 0 : index
    %c0_64 = arith.constant 0 : index
    %c0_65 = arith.constant 0 : index
    %59 = vector.load %arg3[%c0_61, %c0_62, %c0_63, %c0_64, %c0_65] : memref<1x8x2x8x128xbf16, #tpu.memory_space<vmem>>, vector<1x8x1x8x128xbf16>
    %60 = vector.shape_cast %59 : vector<1x8x1x8x128xbf16> to vector<1x8x8x128xbf16>
    %61 = vector.shape_cast %58 : vector<1x8x8x128xbf16> to vector<1x8x1x8x128xbf16>
    tpu.vector_store %arg3[%c0_61, %c0_62, %c0_63, %c0_64, %c0_65], %61 {strides = array<i32>} : memref<1x8x2x8x128xbf16, #tpu.memory_space<vmem>>, vector<1x8x1x8x128xbf16>,
    %62 = tpu.concatenate %16, %19, %25, %28 in 1 : vector<64x128xbf16>, vector<64x128xbf16>, vector<64x128xbf16>, vector<64x128xbf16> -> vector<64x512xbf16>
    %c1_66 = arith.constant 1 : index
    %c0_67 = arith.constant 0 : index
    %c0_68 = arith.constant 0 : index
    %c0_69 = arith.constant 0 : index
    %63 = vector.load %arg2[%c1_66, %c0_67, %c0_68, %c0_69] : memref<2x2x512x64xbf16, #tpu.memory_space<vmem>>, vector<1x1x512x64xbf16>
    %64 = vector.shape_cast %63 : vector<1x1x512x64xbf16> to vector<512x64xbf16>
    %cst_70 = arith.constant dense<0.000000e+00> : vector<64x64xf32>
    %65 = tpu.matmul %62, %64, %cst_70 {dimension_numbers = #tpu.dot_dimension_numbers<[1], [0], [0], [1], [0, 0, 1, 1], [], []>} : vector<64x512xbf16>, vector<512x64xbf16>, vector<64x64xf32> -> vector<64x64xf32>
    %cst_71 = arith.constant dense<0.000000e+00> : vector<64xf32>
    %66 = vector.multi_reduction <add>, %65, %cst_71 [0] : vector<64x64xf32> to vector<64xf32>
    %67 = vector.shape_cast %66 : vector<64xf32> to vector<1x64xf32>
    %68 = arith.addf %51, %67 : vector<1x64xf32>
    %69 = arith.mulf %65, %65 : vector<64x64xf32>
    %cst_72 = arith.constant dense<0.000000e+00> : vector<64xf32>
    %70 = vector.multi_reduction <add>, %69, %cst_72 [0] : vector<64x64xf32> to vector<64xf32>
    %71 = vector.shape_cast %70 : vector<64xf32> to vector<1x64xf32>
    %72 = arith.addf %55, %71 : vector<1x64xf32>
    %73 = tpu.concatenate %19, %22, %28, %31 in 1 : vector<64x128xbf16>, vector<64x128xbf16>, vector<64x128xbf16>, vector<64x128xbf16> -> vector<64x512xbf16>
    %c1_73 = arith.constant 1 : index
    %c1_74 = arith.constant 1 : index
    %c0_75 = arith.constant 0 : index
    %c0_76 = arith.constant 0 : index
    %74 = vector.load %arg2[%c1_73, %c1_74, %c0_75, %c0_76] : memref<2x2x512x64xbf16, #tpu.memory_space<vmem>>, vector<1x1x512x64xbf16>
    %75 = vector.shape_cast %74 : vector<1x1x512x64xbf16> to vector<512x64xbf16>
    %cst_77 = arith.constant dense<0.000000e+00> : vector<64x64xf32>
    %76 = tpu.matmul %73, %75, %cst_77 {dimension_numbers = #tpu.dot_dimension_numbers<[1], [0], [0], [1], [0, 0, 1, 1], [], []>} : vector<64x512xbf16>, vector<512x64xbf16>, vector<64x64xf32> -> vector<64x64xf32>
    %cst_78 = arith.constant dense<0.000000e+00> : vector<64xf32>
    %77 = vector.multi_reduction <add>, %76, %cst_78 [0] : vector<64x64xf32> to vector<64xf32>
    %78 = vector.shape_cast %77 : vector<64xf32> to vector<1x64xf32>
    %79 = arith.addf %68, %78 : vector<1x64xf32>
    %80 = arith.mulf %76, %76 : vector<64x64xf32>
    %cst_79 = arith.constant dense<0.000000e+00> : vector<64xf32>
    %81 = vector.multi_reduction <add>, %80, %cst_79 [0] : vector<64x64xf32> to vector<64xf32>
    %82 = vector.shape_cast %81 : vector<64xf32> to vector<1x64xf32>
    %83 = arith.addf %72, %82 : vector<1x64xf32>
    %84 = tpu.concatenate %65, %76 in 1 : vector<64x64xf32>, vector<64x64xf32> -> vector<64x128xf32>
    %85 = vector.shape_cast %84 : vector<64x128xf32> to vector<1x8x8x128xf32>
    %86 = arith.truncf %85 : vector<1x8x8x128xf32> to vector<1x8x8x128xbf16>
    %c0_80 = arith.constant 0 : index
    %c0_81 = arith.constant 0 : index
    %c1_82 = arith.constant 1 : index
    %c0_83 = arith.constant 0 : index
    %c0_84 = arith.constant 0 : index
    %87 = vector.load %arg3[%c0_80, %c0_81, %c1_82, %c0_83, %c0_84] : memref<1x8x2x8x128xbf16, #tpu.memory_space<vmem>>, vector<1x8x1x8x128xbf16>
    %88 = vector.shape_cast %87 : vector<1x8x1x8x128xbf16> to vector<1x8x8x128xbf16>
    %89 = vector.shape_cast %86 : vector<1x8x8x128xbf16> to vector<1x8x1x8x128xbf16>
    tpu.vector_store %arg3[%c0_80, %c0_81, %c1_82, %c0_83, %c0_84], %89 {strides = array<i32>} : memref<1x8x2x8x128xbf16, #tpu.memory_space<vmem>>, vector<1x8x1x8x128xbf16>,
    %90 = tpu.concatenate %79, %83 in 0 : vector<1x64xf32>, vector<1x64xf32> -> vector<2x64xf32>
    %c0_85 = arith.constant 0 : index
    %c0_86 = arith.constant 0 : index
    %c0_87 = arith.constant 0 : index
    %91 = vector.load %arg4[%c0_85, %c0_86, %c0_87] : memref<1x2x64xf32, #tpu.memory_space<vmem>>, vector<1x2x64xf32>
    %92 = vector.shape_cast %91 : vector<1x2x64xf32> to vector<2x64xf32>
    %93 = vector.shape_cast %90 : vector<2x64xf32> to vector<1x2x64xf32>
    tpu.vector_store %arg4[%c0_85, %c0_86, %c0_87], %93 {strides = array<i32>} : memref<1x2x64xf32, #tpu.memory_space<vmem>>, vector<1x2x64xf32>,
    return
  }
  func.func @transform_0(%arg0: i32) -> (i32, i32, i32, i32) {
    %c0_i32 = arith.constant 0 : i32
    %c0_i32_0 = arith.constant 0 : i32
    %c0_i32_1 = arith.constant 0 : i32
    %c0_i32_2 = arith.constant 0 : i32
    return %arg0, %c0_i32, %c0_i32_0, %c0_i32_1 : i32, i32, i32, i32
  }
  func.func @transform_1(%arg0: i32) -> (i32, i32, i32, i32) {
    %c0_i32 = arith.constant 0 : i32
    %c0_i32_0 = arith.constant 0 : i32
    %c0_i32_1 = arith.constant 0 : i32
    %c0_i32_2 = arith.constant 0 : i32
    %c0_i32_3 = arith.constant 0 : i32
    return %c0_i32, %c0_i32_0, %c0_i32_1, %c0_i32_2 : i32, i32, i32, i32
  }
  func.func @transform_2(%arg0: i32) -> (i32, i32, i32, i32, i32) {
    %c0_i32 = arith.constant 0 : i32
    %c0_i32_0 = arith.constant 0 : i32
    %c0_i32_1 = arith.constant 0 : i32
    %c0_i32_2 = arith.constant 0 : i32
    %c0_i32_3 = arith.constant 0 : i32
    return %arg0, %c0_i32, %c0_i32_0, %c0_i32_1, %c0_i32_2 : i32, i32, i32, i32, i32
  }
  func.func @transform_3(%arg0: i32) -> (i32, i32, i32) {
    %c0_i32 = arith.constant 0 : i32
    %c0_i32_0 = arith.constant 0 : i32
    %c0_i32_1 = arith.constant 0 : i32
    return %arg0, %c0_i32, %c0_i32_0 : i32, i32, i32
  }
}

module attributes {stable_mosaic.version = 11 : i64} {
  func.func @_conv2_kernel(%arg0: i32, %arg1: memref<1x16x16x64xbf16, #tpu.memory_space<vmem>>, %arg2: memref<1x64xf32, #tpu.memory_space<vmem>>, %arg3: memref<1x64xf32, #tpu.memory_space<vmem>>, %arg4: memref<2x2x3x256xbf16, #tpu.memory_space<vmem>>, %arg5: memref<1x2x2x3x256xf32, #tpu.memory_space<vmem>>, %arg6: memref<1x18x18x64xf32, #tpu.memory_space<vmem>>) attributes {dimension_semantics = [#tpu.dimension_semantics<parallel>], iteration_bounds = array<i64: 2>, scalar_prefetch = 0 : i64, scratch_operands = 1 : i64, tpu.core_type = #tpu.core_type<tc>, window_params = [{transform_indices = @transform_0, window_bounds = array<i64: 1, 16, 16, 64>}, {pipeline_mode = #tpu.pipeline_mode<synchronous>, transform_indices = @transform_1, window_bounds = array<i64: 1, 64>}, {pipeline_mode = #tpu.pipeline_mode<synchronous>, transform_indices = @transform_2, window_bounds = array<i64: 1, 64>}, {pipeline_mode = #tpu.pipeline_mode<synchronous>, transform_indices = @transform_3, window_bounds = array<i64: 2, 2, 3, 256>}, {transform_indices = @transform_4, window_bounds = array<i64: 1, 2, 2, 3, 256>}]} {
    %cst = arith.constant 0.000000e+00 : f32
    %0 = vector.broadcast %cst : f32 to vector<1x18x18x64xf32>
    %c0 = arith.constant 0 : index
    %c0_0 = arith.constant 0 : index
    %c0_1 = arith.constant 0 : index
    %c0_2 = arith.constant 0 : index
    %1 = vector.load %arg6[%c0, %c0_0, %c0_1, %c0_2] : memref<1x18x18x64xf32, #tpu.memory_space<vmem>>, vector<1x18x18x64xf32>
    tpu.vector_store %arg6[%c0, %c0_0, %c0_1, %c0_2], %0 {strides = array<i32>} : memref<1x18x18x64xf32, #tpu.memory_space<vmem>>, vector<1x18x18x64xf32>,
    %c0_3 = arith.constant 0 : index
    %c0_4 = arith.constant 0 : index
    %c0_5 = arith.constant 0 : index
    %c0_6 = arith.constant 0 : index
    %2 = vector.load %arg1[%c0_3, %c0_4, %c0_5, %c0_6] : memref<1x16x16x64xbf16, #tpu.memory_space<vmem>>, vector<1x16x16x64xbf16>
    %3 = arith.extf %2 : vector<1x16x16x64xbf16> to vector<1x16x16x64xf32>
    %c0_7 = arith.constant 0 : index
    %c0_8 = arith.constant 0 : index
    %4 = vector.load %arg2[%c0_7, %c0_8] : memref<1x64xf32, #tpu.memory_space<vmem>>, vector<1x64xf32>
    %5 = vector.shape_cast %4 : vector<1x64xf32> to vector<1x1x1x64xf32>
    %6 = vector.broadcast %5 : vector<1x1x1x64xf32> to vector<1x16x16x64xf32>
    %7 = arith.mulf %3, %6 : vector<1x16x16x64xf32>
    %c0_9 = arith.constant 0 : index
    %c0_10 = arith.constant 0 : index
    %8 = vector.load %arg3[%c0_9, %c0_10] : memref<1x64xf32, #tpu.memory_space<vmem>>, vector<1x64xf32>
    %9 = vector.shape_cast %8 : vector<1x64xf32> to vector<1x1x1x64xf32>
    %10 = vector.broadcast %9 : vector<1x1x1x64xf32> to vector<1x16x16x64xf32>
    %11 = arith.addf %7, %10 : vector<1x16x16x64xf32>
    %cst_11 = arith.constant 0.000000e+00 : f32
    %12 = vector.broadcast %cst_11 : f32 to vector<1x16x16x64xf32>
    %13 = arith.cmpf ogt, %11, %12 : vector<1x16x16x64xf32>
    %cst_12 = arith.constant 2.000000e-01 : f32
    %14 = vector.broadcast %cst_12 : f32 to vector<1x16x16x64xf32>
    %15 = arith.mulf %14, %11 : vector<1x16x16x64xf32>
    %16 = arith.select %13, %11, %15 : vector<1x16x16x64xi1>, vector<1x16x16x64xf32>
    %c0_13 = arith.constant 0 : index
    %c1 = arith.constant 1 : index
    %c1_14 = arith.constant 1 : index
    %c0_15 = arith.constant 0 : index
    %17 = vector.load %arg6[%c0_13, %c1, %c1_14, %c0_15] : memref<1x18x18x64xf32, #tpu.memory_space<vmem>>, vector<1x16x16x64xf32>
    tpu.vector_store %arg6[%c0_13, %c1, %c1_14, %c0_15], %16 {strides = array<i32>} : memref<1x18x18x64xf32, #tpu.memory_space<vmem>>, vector<1x16x16x64xf32>,
    %c0_16 = arith.constant 0 : index
    %c0_17 = arith.constant 0 : index
    %c0_18 = arith.constant 0 : index
    %c0_19 = arith.constant 0 : index
    %18 = vector.load %arg6[%c0_16, %c0_17, %c0_18, %c0_19] : memref<1x18x18x64xf32, #tpu.memory_space<vmem>>, vector<1x16x16x64xf32>
    %19 = vector.shape_cast %18 : vector<1x16x16x64xf32> to vector<256x64xf32>
    %20 = arith.truncf %19 : vector<256x64xf32> to vector<256x64xbf16>
    %c0_20 = arith.constant 0 : index
    %c0_21 = arith.constant 0 : index
    %c1_22 = arith.constant 1 : index
    %c0_23 = arith.constant 0 : index
    %21 = vector.load %arg6[%c0_20, %c0_21, %c1_22, %c0_23] : memref<1x18x18x64xf32, #tpu.memory_space<vmem>>, vector<1x16x16x64xf32>
    %22 = vector.shape_cast %21 : vector<1x16x16x64xf32> to vector<256x64xf32>
    %23 = arith.truncf %22 : vector<256x64xf32> to vector<256x64xbf16>
    %c0_24 = arith.constant 0 : index
    %c0_25 = arith.constant 0 : index
    %c2 = arith.constant 2 : index
    %c0_26 = arith.constant 0 : index
    %24 = vector.load %arg6[%c0_24, %c0_25, %c2, %c0_26] : memref<1x18x18x64xf32, #tpu.memory_space<vmem>>, vector<1x16x16x64xf32>
    %25 = vector.shape_cast %24 : vector<1x16x16x64xf32> to vector<256x64xf32>
    %26 = arith.truncf %25 : vector<256x64xf32> to vector<256x64xbf16>
    %c0_27 = arith.constant 0 : index
    %c1_28 = arith.constant 1 : index
    %c0_29 = arith.constant 0 : index
    %c0_30 = arith.constant 0 : index
    %27 = vector.load %arg6[%c0_27, %c1_28, %c0_29, %c0_30] : memref<1x18x18x64xf32, #tpu.memory_space<vmem>>, vector<1x16x16x64xf32>
    %28 = vector.shape_cast %27 : vector<1x16x16x64xf32> to vector<256x64xf32>
    %29 = arith.truncf %28 : vector<256x64xf32> to vector<256x64xbf16>
    %c0_31 = arith.constant 0 : index
    %c1_32 = arith.constant 1 : index
    %c1_33 = arith.constant 1 : index
    %c0_34 = arith.constant 0 : index
    %30 = vector.load %arg6[%c0_31, %c1_32, %c1_33, %c0_34] : memref<1x18x18x64xf32, #tpu.memory_space<vmem>>, vector<1x16x16x64xf32>
    %31 = vector.shape_cast %30 : vector<1x16x16x64xf32> to vector<256x64xf32>
    %32 = arith.truncf %31 : vector<256x64xf32> to vector<256x64xbf16>
    %c0_35 = arith.constant 0 : index
    %c1_36 = arith.constant 1 : index
    %c2_37 = arith.constant 2 : index
    %c0_38 = arith.constant 0 : index
    %33 = vector.load %arg6[%c0_35, %c1_36, %c2_37, %c0_38] : memref<1x18x18x64xf32, #tpu.memory_space<vmem>>, vector<1x16x16x64xf32>
    %34 = vector.shape_cast %33 : vector<1x16x16x64xf32> to vector<256x64xf32>
    %35 = arith.truncf %34 : vector<256x64xf32> to vector<256x64xbf16>
    %c0_39 = arith.constant 0 : index
    %c2_40 = arith.constant 2 : index
    %c0_41 = arith.constant 0 : index
    %c0_42 = arith.constant 0 : index
    %36 = vector.load %arg6[%c0_39, %c2_40, %c0_41, %c0_42] : memref<1x18x18x64xf32, #tpu.memory_space<vmem>>, vector<1x16x16x64xf32>
    %37 = vector.shape_cast %36 : vector<1x16x16x64xf32> to vector<256x64xf32>
    %38 = arith.truncf %37 : vector<256x64xf32> to vector<256x64xbf16>
    %c0_43 = arith.constant 0 : index
    %c2_44 = arith.constant 2 : index
    %c1_45 = arith.constant 1 : index
    %c0_46 = arith.constant 0 : index
    %39 = vector.load %arg6[%c0_43, %c2_44, %c1_45, %c0_46] : memref<1x18x18x64xf32, #tpu.memory_space<vmem>>, vector<1x16x16x64xf32>
    %40 = vector.shape_cast %39 : vector<1x16x16x64xf32> to vector<256x64xf32>
    %41 = arith.truncf %40 : vector<256x64xf32> to vector<256x64xbf16>
    %c0_47 = arith.constant 0 : index
    %c2_48 = arith.constant 2 : index
    %c2_49 = arith.constant 2 : index
    %c0_50 = arith.constant 0 : index
    %42 = vector.load %arg6[%c0_47, %c2_48, %c2_49, %c0_50] : memref<1x18x18x64xf32, #tpu.memory_space<vmem>>, vector<1x16x16x64xf32>
    %43 = vector.shape_cast %42 : vector<1x16x16x64xf32> to vector<256x64xf32>
    %44 = arith.truncf %43 : vector<256x64xf32> to vector<256x64xbf16>
    %45 = tpu.concatenate %20, %23, %29, %32 in 1 : vector<256x64xbf16>, vector<256x64xbf16>, vector<256x64xbf16>, vector<256x64xbf16> -> vector<256x256xbf16>
    %c0_51 = arith.constant 0 : index
    %c0_52 = arith.constant 0 : index
    %c0_53 = arith.constant 0 : index
    %c0_54 = arith.constant 0 : index
    %46 = vector.load %arg4[%c0_51, %c0_52, %c0_53, %c0_54] : memref<2x2x3x256xbf16, #tpu.memory_space<vmem>>, vector<1x1x3x256xbf16>
    %47 = vector.shape_cast %46 : vector<1x1x3x256xbf16> to vector<3x256xbf16>
    %cst_55 = arith.constant dense<0.000000e+00> : vector<3x256xf32>
    %48 = tpu.matmul %47, %45, %cst_55 {dimension_numbers = #tpu.dot_dimension_numbers<[1], [1], [0], [0], [0, 0, 1, 0], [], []>} : vector<3x256xbf16>, vector<256x256xbf16>, vector<3x256xf32> -> vector<3x256xf32>
    %49 = math.tanh %48 : vector<3x256xf32>
    %50 = vector.shape_cast %49 : vector<3x256xf32> to vector<3x1x256xf32>
    %51 = vector.shape_cast %50 : vector<3x1x256xf32> to vector<3x256xf32>
    %c0_56 = arith.constant 0 : index
    %c0_57 = arith.constant 0 : index
    %c0_58 = arith.constant 0 : index
    %c0_59 = arith.constant 0 : index
    %c0_60 = arith.constant 0 : index
    %52 = vector.load %arg5[%c0_56, %c0_57, %c0_58, %c0_59, %c0_60] : memref<1x2x2x3x256xf32, #tpu.memory_space<vmem>>, vector<1x1x1x3x256xf32>
    %53 = vector.shape_cast %52 : vector<1x1x1x3x256xf32> to vector<3x256xf32>
    %54 = vector.shape_cast %51 : vector<3x256xf32> to vector<1x1x1x3x256xf32>
    tpu.vector_store %arg5[%c0_56, %c0_57, %c0_58, %c0_59, %c0_60], %54 {strides = array<i32>} : memref<1x2x2x3x256xf32, #tpu.memory_space<vmem>>, vector<1x1x1x3x256xf32>,
    %55 = tpu.concatenate %23, %26, %32, %35 in 1 : vector<256x64xbf16>, vector<256x64xbf16>, vector<256x64xbf16>, vector<256x64xbf16> -> vector<256x256xbf16>
    %c0_61 = arith.constant 0 : index
    %c1_62 = arith.constant 1 : index
    %c0_63 = arith.constant 0 : index
    %c0_64 = arith.constant 0 : index
    %56 = vector.load %arg4[%c0_61, %c1_62, %c0_63, %c0_64] : memref<2x2x3x256xbf16, #tpu.memory_space<vmem>>, vector<1x1x3x256xbf16>
    %57 = vector.shape_cast %56 : vector<1x1x3x256xbf16> to vector<3x256xbf16>
    %cst_65 = arith.constant dense<0.000000e+00> : vector<3x256xf32>
    %58 = tpu.matmul %57, %55, %cst_65 {dimension_numbers = #tpu.dot_dimension_numbers<[1], [1], [0], [0], [0, 0, 1, 0], [], []>} : vector<3x256xbf16>, vector<256x256xbf16>, vector<3x256xf32> -> vector<3x256xf32>
    %59 = math.tanh %58 : vector<3x256xf32>
    %60 = vector.shape_cast %59 : vector<3x256xf32> to vector<3x1x256xf32>
    %61 = vector.shape_cast %60 : vector<3x1x256xf32> to vector<3x256xf32>
    %c0_66 = arith.constant 0 : index
    %c0_67 = arith.constant 0 : index
    %c1_68 = arith.constant 1 : index
    %c0_69 = arith.constant 0 : index
    %c0_70 = arith.constant 0 : index
    %62 = vector.load %arg5[%c0_66, %c0_67, %c1_68, %c0_69, %c0_70] : memref<1x2x2x3x256xf32, #tpu.memory_space<vmem>>, vector<1x1x1x3x256xf32>
    %63 = vector.shape_cast %62 : vector<1x1x1x3x256xf32> to vector<3x256xf32>
    %64 = vector.shape_cast %61 : vector<3x256xf32> to vector<1x1x1x3x256xf32>
    tpu.vector_store %arg5[%c0_66, %c0_67, %c1_68, %c0_69, %c0_70], %64 {strides = array<i32>} : memref<1x2x2x3x256xf32, #tpu.memory_space<vmem>>, vector<1x1x1x3x256xf32>,
    %65 = tpu.concatenate %29, %32, %38, %41 in 1 : vector<256x64xbf16>, vector<256x64xbf16>, vector<256x64xbf16>, vector<256x64xbf16> -> vector<256x256xbf16>
    %c1_71 = arith.constant 1 : index
    %c0_72 = arith.constant 0 : index
    %c0_73 = arith.constant 0 : index
    %c0_74 = arith.constant 0 : index
    %66 = vector.load %arg4[%c1_71, %c0_72, %c0_73, %c0_74] : memref<2x2x3x256xbf16, #tpu.memory_space<vmem>>, vector<1x1x3x256xbf16>
    %67 = vector.shape_cast %66 : vector<1x1x3x256xbf16> to vector<3x256xbf16>
    %cst_75 = arith.constant dense<0.000000e+00> : vector<3x256xf32>
    %68 = tpu.matmul %67, %65, %cst_75 {dimension_numbers = #tpu.dot_dimension_numbers<[1], [1], [0], [0], [0, 0, 1, 0], [], []>} : vector<3x256xbf16>, vector<256x256xbf16>, vector<3x256xf32> -> vector<3x256xf32>
    %69 = math.tanh %68 : vector<3x256xf32>
    %70 = vector.shape_cast %69 : vector<3x256xf32> to vector<3x1x256xf32>
    %71 = vector.shape_cast %70 : vector<3x1x256xf32> to vector<3x256xf32>
    %c0_76 = arith.constant 0 : index
    %c1_77 = arith.constant 1 : index
    %c0_78 = arith.constant 0 : index
    %c0_79 = arith.constant 0 : index
    %c0_80 = arith.constant 0 : index
    %72 = vector.load %arg5[%c0_76, %c1_77, %c0_78, %c0_79, %c0_80] : memref<1x2x2x3x256xf32, #tpu.memory_space<vmem>>, vector<1x1x1x3x256xf32>
    %73 = vector.shape_cast %72 : vector<1x1x1x3x256xf32> to vector<3x256xf32>
    %74 = vector.shape_cast %71 : vector<3x256xf32> to vector<1x1x1x3x256xf32>
    tpu.vector_store %arg5[%c0_76, %c1_77, %c0_78, %c0_79, %c0_80], %74 {strides = array<i32>} : memref<1x2x2x3x256xf32, #tpu.memory_space<vmem>>, vector<1x1x1x3x256xf32>,
    %75 = tpu.concatenate %32, %35, %41, %44 in 1 : vector<256x64xbf16>, vector<256x64xbf16>, vector<256x64xbf16>, vector<256x64xbf16> -> vector<256x256xbf16>
    %c1_81 = arith.constant 1 : index
    %c1_82 = arith.constant 1 : index
    %c0_83 = arith.constant 0 : index
    %c0_84 = arith.constant 0 : index
    %76 = vector.load %arg4[%c1_81, %c1_82, %c0_83, %c0_84] : memref<2x2x3x256xbf16, #tpu.memory_space<vmem>>, vector<1x1x3x256xbf16>
    %77 = vector.shape_cast %76 : vector<1x1x3x256xbf16> to vector<3x256xbf16>
    %cst_85 = arith.constant dense<0.000000e+00> : vector<3x256xf32>
    %78 = tpu.matmul %77, %75, %cst_85 {dimension_numbers = #tpu.dot_dimension_numbers<[1], [1], [0], [0], [0, 0, 1, 0], [], []>} : vector<3x256xbf16>, vector<256x256xbf16>, vector<3x256xf32> -> vector<3x256xf32>
    %79 = math.tanh %78 : vector<3x256xf32>
    %80 = vector.shape_cast %79 : vector<3x256xf32> to vector<3x1x256xf32>
    %81 = vector.shape_cast %80 : vector<3x1x256xf32> to vector<3x256xf32>
    %c0_86 = arith.constant 0 : index
    %c1_87 = arith.constant 1 : index
    %c1_88 = arith.constant 1 : index
    %c0_89 = arith.constant 0 : index
    %c0_90 = arith.constant 0 : index
    %82 = vector.load %arg5[%c0_86, %c1_87, %c1_88, %c0_89, %c0_90] : memref<1x2x2x3x256xf32, #tpu.memory_space<vmem>>, vector<1x1x1x3x256xf32>
    %83 = vector.shape_cast %82 : vector<1x1x1x3x256xf32> to vector<3x256xf32>
    %84 = vector.shape_cast %81 : vector<3x256xf32> to vector<1x1x1x3x256xf32>
    tpu.vector_store %arg5[%c0_86, %c1_87, %c1_88, %c0_89, %c0_90], %84 {strides = array<i32>} : memref<1x2x2x3x256xf32, #tpu.memory_space<vmem>>, vector<1x1x1x3x256xf32>,
    return
  }
  func.func @transform_0(%arg0: i32) -> (i32, i32, i32, i32) {
    %c0_i32 = arith.constant 0 : i32
    %c0_i32_0 = arith.constant 0 : i32
    %c0_i32_1 = arith.constant 0 : i32
    %c0_i32_2 = arith.constant 0 : i32
    return %arg0, %c0_i32, %c0_i32_0, %c0_i32_1 : i32, i32, i32, i32
  }
  func.func @transform_1(%arg0: i32) -> (i32, i32) {
    %c0_i32 = arith.constant 0 : i32
    %c0_i32_0 = arith.constant 0 : i32
    %c0_i32_1 = arith.constant 0 : i32
    return %c0_i32, %c0_i32_0 : i32, i32
  }
  func.func @transform_2(%arg0: i32) -> (i32, i32) {
    %c0_i32 = arith.constant 0 : i32
    %c0_i32_0 = arith.constant 0 : i32
    %c0_i32_1 = arith.constant 0 : i32
    return %c0_i32, %c0_i32_0 : i32, i32
  }
  func.func @transform_3(%arg0: i32) -> (i32, i32, i32, i32) {
    %c0_i32 = arith.constant 0 : i32
    %c0_i32_0 = arith.constant 0 : i32
    %c0_i32_1 = arith.constant 0 : i32
    %c0_i32_2 = arith.constant 0 : i32
    %c0_i32_3 = arith.constant 0 : i32
    return %c0_i32, %c0_i32_0, %c0_i32_1, %c0_i32_2 : i32, i32, i32, i32
  }
  func.func @transform_4(%arg0: i32) -> (i32, i32, i32, i32, i32) {
    %c0_i32 = arith.constant 0 : i32
    %c0_i32_0 = arith.constant 0 : i32
    %c0_i32_1 = arith.constant 0 : i32
    %c0_i32_2 = arith.constant 0 : i32
    %c0_i32_3 = arith.constant 0 : i32
    return %arg0, %c0_i32, %c0_i32_0, %c0_i32_1, %c0_i32_2 : i32, i32, i32, i32, i32
  }
}

</mosaic_0001>

<llo_original>
// kernel: generator_forward.3
$region0: #{generator_forward.3}
  #allocation0 [shape = 'u32[]', space=smem, size = 0x4, offset = 0x4, fixed_abs, tag = 'smem constant byte address 0x4 - core index']
  #allocation1 [shape = 'u32[144,128]{1,0:T(1,128)}', space=vmem, size = 0x12000, scoped, tag = 'internal scratch']
  %s0 = inlined_call_operand.vmem [shape: bf16[2,128], index: 0, kind: input, shape index: {}]
  %s1 = inlined_call_operand.hbm [shape: bf16[128,8192], index: 1, kind: input, shape index: {}]
  %s2 = inlined_call_operand.hbm [shape: f32[1,8192], index: 2, kind: input, shape index: {}]
  %s3 = inlined_call_operand.vmem [shape: bf16[2,8192], index: 3, kind: output, shape index: {}]
  %s4 = sld [smem:[#allocation0]]
  $region53: #{generator_forward.3} parent=0
    _
  %s6 = ssub.s32 1, %s4
  %s7 = scalar_select 0, %s6, %s4
  $region1: #{generator_forward.3} parent=0
    #allocation2 [shape = 'u8[1048576]{0}', space=vmem, size = 0x100000, scoped, tag = 'input window, operand 1']
    #allocation3 [shape = 's32[2]{0}', space=sflag, size = 0x8, scoped, tag = 'scoped memory for generator_forward.3']
    #allocation4 [shape = 'u8[16384]{0}', space=vmem, size = 0x4000, scoped, tag = 'input window, operand 2']
    #allocation5 [shape = 's32[2]{0}', space=sflag, size = 0x8, scoped, tag = 'scoped memory for generator_forward.3']
    %8 = vsyncpa [#allocation3], 0
    %s9 = scalar_lea.sflag [#allocation3], 1
    %10 = vsyncpa %s9, 0
    %11 = vsyncpa [#allocation5], 0
    %s12 = scalar_lea.sflag [#allocation5], 1
    %13 = vsyncpa %s12, 0
    loop: start=0, step=1, limit=6
    $region2: #{generator_forward.3} parent=1 // loop_pre_header
      _
    $region3: #{generator_forward.3} parent=1 // loop_header
      %s15 = sphi 0, %s19
      %p16 = scmp.ge.s32.totalorder %s15, 6
      %s23 = sphi 0, %s23
      %s25 = sphi 0, %s23
      %s26 = sphi 0, %s25
      %s40 = sphi 0, %s26
      %s46 = sphi 0, %s48
      %s49 = sphi 0, %s46
      %s50 = sphi 0, %s49
      %s66 = sphi 0, %s50
      %s72 = sphi 0, %s74
      %s75 = sphi 0, %s72
      %s76 = sphi 0, %s75
      %s92 = sphi 0, %s76
      %s98 = sphi 0, %s100
      %s101 = sphi 0, %s98
      %s102 = sphi 0, %s101
      %s118 = sphi 0, %s102
    $region4: #{generator_forward.3} parent=1 // loop_header_branch
      %18 = sbr.rel (%p16) target = $region8
    $region5: #{generator_forward.3} parent=1 // loop_body
      %s20 = ssub.s32 %s15, 1
      %s21 = ssub.s32 %s15, 2
      %s22 = sadd.s32 %s15, 1
      %s24 = sadd.s32 %s23, 1
      %p27 = scmp.eq.s32.totalorder %s15, 3
      %p28 = scmp.ne.s32.totalorder %s23, %s25
      %p29 = scmp.eq.s32.totalorder %s15, 0
      %p30 = por %p28, %p29
      %p31 = scmp.ne.s32.totalorder %s23, %s25
      %p32 = scmp.eq.s32.totalorder %s20, 3
      %p33 = por %p31, %p32
      %p34 = scmp.ne.s32.totalorder %s25, %s26
      %p35 = scmp.eq.s32.totalorder %s20, 0
      %p36 = por %p34, %p35
      %p37 = scmp.ne.s32.totalorder %s25, %s26
      %p38 = scmp.eq.s32.totalorder %s21, 3
      %p39 = por %p37, %p38
      %p41 = scmp.ne.s32.totalorder %s26, %s40
      %p42 = scmp.eq.s32.totalorder %s21, 0
      %p43 = por %p41, %p42
      %s44 = ssub.s32 %s15, %s22
      %p45 = scmp.eq.s32.totalorder %s44, 0
      %s47 = sadd.s32 %s46, 1
      %s48 = scalar_select %p45, %s46, %s47
      %p51 = pneg %p45
      %p52 = scmp.eq.s32.totalorder %s15, 3
      %p53 = por %p51, %p52
      %p54 = scmp.ne.s32.totalorder %s46, %s49
      %p55 = scmp.eq.s32.totalorder %s15, 0
      %p56 = por %p54, %p55
      %p57 = scmp.ne.s32.totalorder %s46, %s49
      %p58 = scmp.eq.s32.totalorder %s20, 3
      %p59 = por %p57, %p58
      %p60 = scmp.ne.s32.totalorder %s49, %s50
      %p61 = scmp.eq.s32.totalorder %s20, 0
      %p62 = por %p60, %p61
      %p63 = scmp.ne.s32.totalorder %s49, %s50
      %p64 = scmp.eq.s32.totalorder %s21, 3
      %p65 = por %p63, %p64
      %p67 = scmp.ne.s32.totalorder %s50, %s66
      %p68 = scmp.eq.s32.totalorder %s21, 0
      %p69 = por %p67, %p68
      %s70 = ssub.s32 %s15, %s22
      %p71 = scmp.eq.s32.totalorder %s70, 0
      %s73 = sadd.s32 %s72, 1
      %s74 = scalar_select %p71, %s72, %s73
      %p77 = pneg %p71
      %p78 = scmp.eq.s32.totalorder %s15, 3
      %p79 = por %p77, %p78
      %p80 = scmp.ne.s32.totalorder %s72, %s75
      %p81 = scmp.eq.s32.totalorder %s15, 0
      %p82 = por %p80, %p81
      %p83 = scmp.ne.s32.totalorder %s72, %s75
      %p84 = scmp.eq.s32.totalorder %s20, 3
      %p85 = por %p83, %p84
      %p86 = scmp.ne.s32.totalorder %s75, %s76
      %p87 = scmp.eq.s32.totalorder %s20, 0
      %p88 = por %p86, %p87
      %p89 = scmp.ne.s32.totalorder %s75, %s76
      %p90 = scmp.eq.s32.totalorder %s21, 3
      %p91 = por %p89, %p90
      %p93 = scmp.ne.s32.totalorder %s76, %s92
      %p94 = scmp.eq.s32.totalorder %s21, 0
      %p95 = por %p93, %p94
      %s96 = ssub.s32 %s15, %s22
      %p97 = scmp.eq.s32.totalorder %s96, 0
      %s99 = sadd.s32 %s98, 1
      %s100 = scalar_select %p97, %s98, %s99
      %p103 = pneg %p97
      %p104 = scmp.eq.s32.totalorder %s15, 3
      %p105 = por %p103, %p104
      %p106 = scmp.ne.s32.totalorder %s98, %s101
      %p107 = scmp.eq.s32.totalorder %s15, 0
      %p108 = por %p106, %p107
      %p109 = scmp.ne.s32.totalorder %s98, %s101
      %p110 = scmp.eq.s32.totalorder %s20, 3
      %p111 = por %p109, %p110
      %p112 = scmp.ne.s32.totalorder %s101, %s102
      %p113 = scmp.eq.s32.totalorder %s20, 0
      %p114 = por %p112, %p113
      %p115 = scmp.ne.s32.totalorder %s101, %s102
      %p116 = scmp.eq.s32.totalorder %s21, 3
      %p117 = por %p115, %p116
      %p119 = scmp.ne.s32.totalorder %s102, %s118
      %p120 = scmp.eq.s32.totalorder %s21, 0
      %p121 = por %p119, %p120
      %p122 = scmp.le.s32.totalorder 1, %s15
      %p123 = scmp.lt.s32.totalorder %s15, 5
      %p124 = pnand %p122, %p123
      %p125 = pneg %p124
      // Predicated region
      $region9: #{generator_forward.3} parent=5 // pred_check
        _
      $region10: #{generator_forward.3} parent=5 // pred_check_branch
        %127 = sbr.rel (%p124) target = $region12
      $region11: #{generator_forward.3} parent=5 // pred_region
        %s128 = ssub.s32 %s15, 1
        // Predicated region
        $region13: #{generator_forward.3} parent=11 // pred_check
          %p129 = pneg %p36
        $region14: #{generator_forward.3} parent=11 // pred_check_branch
          %131 = sbr.rel (%p129) target = $region16
        $region15: #{generator_forward.3} parent=11 // pred_region
          _
        $region16: #{generator_forward.3} parent=11 // pred_fallthru
          _
      $region12: #{generator_forward.3} parent=5 // pred_fallthru
        _
      %p132 = scmp.lt.s32.totalorder %s15, 4
      // Predicated region
      $region17: #{generator_forward.3} parent=5 // pred_check
        %p133 = pneg %p132
      $region18: #{generator_forward.3} parent=5 // pred_check_branch
        %135 = sbr.rel (%p133) target = $region20
      $region19: #{generator_forward.3} parent=5 // pred_region
        // Predicated region
        $region21: #{generator_forward.3} parent=19 // pred_check
          %p136 = pneg %p56
        $region22: #{generator_forward.3} parent=19 // pred_check_branch
          %138 = sbr.rel (%p136) target = $region24
        $region23: #{generator_forward.3} parent=19 // pred_region
          %s139 = sand.u32 %s46, 1
          %s140 = scalar_lea.sflag [#allocation3], %s139
          %s141 = sand.u32 %s46, 1
          %s142 = smul.addr %s141, 1024
          %s143 = scalar_lea.vmem [#allocation2], %s142
          %s144 = smul.u32 16, %s15
          %s146 = ssub.s32 16384, 16384
          %147 = vsyncadd %s140, %s146
          %s148 = smul.addr %s144, 64
          %s149 = scalar_lea.hbm %s1, %s148
          %s150 = sshll.u32 %s143, 4
          %s151 = int_to_ptr.vmem [resolvable:$true] %s150
          %156 = dma.hbm_to_vmem [thread:$0]  %s149, 16384, %s151, %s140, 4096, 1024, 64
        $region24: #{generator_forward.3} parent=19 // pred_fallthru
          _
        // Predicated region
        $region25: #{generator_forward.3} parent=19 // pred_check
          %p157 = pneg %p82
        $region26: #{generator_forward.3} parent=19 // pred_check_branch
          %159 = sbr.rel (%p157) target = $region28
        $region27: #{generator_forward.3} parent=19 // pred_region
          %s160 = sand.u32 %s72, 1
          %s161 = scalar_lea.sflag [#allocation5], %s160
          %s162 = sand.u32 %s72, 1
          %s163 = smul.addr %s162, 16
          %s164 = scalar_lea.vmem [#allocation4], %s163
          %s165 = smul.u32 16, %s15
          %s167 = ssub.s32 256, 256
          %168 = vsyncadd %s161, %s167
          %s169 = smul.addr %s165, 16
          %s170 = scalar_lea.hbm %s2, %s169
          %s172 = sshll.u32 %s164, 4
          %s173 = int_to_ptr.vmem [resolvable:$true] %s172
          %175 = dma.hbm_to_vmem [thread:$0]  %s170, 256, %s173, %s161
        $region28: #{generator_forward.3} parent=19 // pred_fallthru
          _
      $region20: #{generator_forward.3} parent=5 // pred_fallthru
        _
      %p176 = scmp.le.s32.totalorder 1, %s15
      %p177 = scmp.lt.s32.totalorder %s15, 5
      %p178 = pnand %p176, %p177
      %p179 = pneg %p178
      // Predicated region
      $region29: #{generator_forward.3} parent=5 // pred_check
        _
      $region30: #{generator_forward.3} parent=5 // pred_check_branch
        %181 = sbr.rel (%p178) target = $region32
      $region31: #{generator_forward.3} parent=5 // pred_region
        %s182 = ssub.s32 %s15, 1
        %s183 = sand.u32 %s49, 1
        %s184 = scalar_lea.sflag [#allocation3], %s183
        %s185 = sand.u32 %s49, 1
        %s186 = smul.addr %s185, 1024
        %s187 = scalar_lea.vmem [#allocation2], %s186
        // Predicated region
        $region33: #{generator_forward.3} parent=31 // pred_check
          %p188 = pneg %p62
        $region34: #{generator_forward.3} parent=31 // pred_check_branch
          %190 = sbr.rel (%p188) target = $region36
        $region35: #{generator_forward.3} parent=31 // pred_region
          %191 = dma.done %s184, 16384
        $region36: #{generator_forward.3} parent=31 // pred_fallthru
          _
        %s192 = sand.u32 %s75, 1
        %s193 = scalar_lea.sflag [#allocation5], %s192
        %s194 = sand.u32 %s75, 1
        %s195 = smul.addr %s194, 16
        %s196 = scalar_lea.vmem [#allocation4], %s195
        // Predicated region
        $region37: #{generator_forward.3} parent=31 // pred_check
          %p197 = pneg %p88
        $region38: #{generator_forward.3} parent=31 // pred_check_branch
          %199 = sbr.rel (%p197) target = $region40
        $region39: #{generator_forward.3} parent=31 // pred_region
          %200 = dma.done %s193, 256
        $region40: #{generator_forward.3} parent=31 // pred_fallthru
          _
        %p201 = pneg %p36
        %p202 = pneg %p33
        %s203 = sand.u32 %s49, 1
        %s204 = scalar_lea.sflag [#allocation3], %s203
        %s205 = sand.u32 %s49, 1
        %s206 = smul.addr %s205, 1024
        %s207 = scalar_lea.vmem [#allocation2], %s206
        %p208 = pneg %p62
        %p209 = pneg %p59
        %s210 = sand.u32 %s75, 1
        %s211 = scalar_lea.sflag [#allocation5], %s210
        %s212 = sand.u32 %s75, 1
        %s213 = smul.addr %s212, 16
        %s214 = scalar_lea.vmem [#allocation4], %s213
        %p215 = pneg %p88
        %p216 = pneg %p85
        %p217 = pneg %p114
        %p218 = pneg %p111
        %s219 = smul.u32 16, %s20
        %p220 = scmp.lt.s32.totalorder %s219, 63
        %s221 = scalar_select %p220, %s219, 63
        %s222 = scalar_lea.vmem %s3, %s221
        %s223 = smul.u32 16, %s20
        %s224 = smul.u32 16, %s20
        %s225 = smul.u32 16, %s20
        %p226 = scmp.lt.s32.totalorder %s225, 63
        %s227 = scalar_select %p226, %s225, 63
        %s228 = scalar_lea.vmem %s3, %s227
        %s229 = smul.u32 16, %s20
        %v231 = vld [vmem:[%s0] sm:$0x1]
        %v232 = vld [vmem:[%s187] sm:$0xff]
        %v233 = vld [vmem:[%s187 + $0x8] sm:$0xff]
        %v234 = vld [vmem:[%s187 + $0x10] sm:$0xff]
        %v235 = vld [vmem:[%s187 + $0x18] sm:$0xff]
        %v236 = vld [vmem:[%s187 + $0x20] sm:$0xff]
        %v237 = vld [vmem:[%s187 + $0x28] sm:$0xff]
        %v238 = vld [vmem:[%s187 + $0x30] sm:$0xff]
        %v239 = vld [vmem:[%s187 + $0x38] sm:$0xff]
        %v240 = vld [vmem:[%s187 + $0x40] sm:$0xff]
        %v241 = vld [vmem:[%s187 + $0x48] sm:$0xff]
        %v242 = vld [vmem:[%s187 + $0x50] sm:$0xff]
        %v243 = vld [vmem:[%s187 + $0x58] sm:$0xff]
        %v244 = vld [vmem:[%s187 + $0x60] sm:$0xff]
        %v245 = vld [vmem:[%s187 + $0x68] sm:$0xff]
        %v246 = vld [vmem:[%s187 + $0x70] sm:$0xff]
        %v247 = vld [vmem:[%s187 + $0x78] sm:$0xff]
        %v248 = vld [vmem:[%s187 + $0x80] sm:$0xff]
        %v249 = vld [vmem:[%s187 + $0x88] sm:$0xff]
        %v250 = vld [vmem:[%s187 + $0x90] sm:$0xff]
        %v251 = vld [vmem:[%s187 + $0x98] sm:$0xff]
        %v252 = vld [vmem:[%s187 + $0xa0] sm:$0xff]
        %v253 = vld [vmem:[%s187 + $0xa8] sm:$0xff]
        %v254 = vld [vmem:[%s187 + $0xb0] sm:$0xff]
        %v255 = vld [vmem:[%s187 + $0xb8] sm:$0xff]
        %v256 = vld [vmem:[%s187 + $0xc0] sm:$0xff]
        %v257 = vld [vmem:[%s187 + $0xc8] sm:$0xff]
        %v258 = vld [vmem:[%s187 + $0xd0] sm:$0xff]
        %v259 = vld [vmem:[%s187 + $0xd8] sm:$0xff]
        %v260 = vld [vmem:[%s187 + $0xe0] sm:$0xff]
        %v261 = vld [vmem:[%s187 + $0xe8] sm:$0xff]
        %v262 = vld [vmem:[%s187 + $0xf0] sm:$0xff]
        %v263 = vld [vmem:[%s187 + $0xf8] sm:$0xff]
        %v264 = vld [vmem:[%s187 + $0x100] sm:$0xff]
        %v265 = vld [vmem:[%s187 + $0x108] sm:$0xff]
        %v266 = vld [vmem:[%s187 + $0x110] sm:$0xff]
        %v267 = vld [vmem:[%s187 + $0x118] sm:$0xff]
        %v268 = vld [vmem:[%s187 + $0x120] sm:$0xff]
        %v269 = vld [vmem:[%s187 + $0x128] sm:$0xff]
        %v270 = vld [vmem:[%s187 + $0x130] sm:$0xff]
        %v271 = vld [vmem:[%s187 + $0x138] sm:$0xff]
        %v272 = vld [vmem:[%s187 + $0x140] sm:$0xff]
        %v273 = vld [vmem:[%s187 + $0x148] sm:$0xff]
        %v274 = vld [vmem:[%s187 + $0x150] sm:$0xff]
        %v275 = vld [vmem:[%s187 + $0x158] sm:$0xff]
        %v276 = vld [vmem:[%s187 + $0x160] sm:$0xff]
        %v277 = vld [vmem:[%s187 + $0x168] sm:$0xff]
        %v278 = vld [vmem:[%s187 + $0x170] sm:$0xff]
        %v279 = vld [vmem:[%s187 + $0x178] sm:$0xff]
        %v280 = vld [vmem:[%s187 + $0x180] sm:$0xff]
        %v281 = vld [vmem:[%s187 + $0x188] sm:$0xff]
        %v282 = vld [vmem:[%s187 + $0x190] sm:$0xff]
        %v283 = vld [vmem:[%s187 + $0x198] sm:$0xff]
        %v284 = vld [vmem:[%s187 + $0x1a0] sm:$0xff]
        %v285 = vld [vmem:[%s187 + $0x1a8] sm:$0xff]
        %v286 = vld [vmem:[%s187 + $0x1b0] sm:$0xff]
        %v287 = vld [vmem:[%s187 + $0x1b8] sm:$0xff]
        %v288 = vld [vmem:[%s187 + $0x1c0] sm:$0xff]
        %v289 = vld [vmem:[%s187 + $0x1c8] sm:$0xff]
        %v290 = vld [vmem:[%s187 + $0x1d0] sm:$0xff]
        %v291 = vld [vmem:[%s187 + $0x1d8] sm:$0xff]
        %v292 = vld [vmem:[%s187 + $0x1e0] sm:$0xff]
        %v293 = vld [vmem:[%s187 + $0x1e8] sm:$0xff]
        %v294 = vld [vmem:[%s187 + $0x1f0] sm:$0xff]
        %v295 = vld [vmem:[%s187 + $0x1f8] sm:$0xff]
        %v296 = vld [vmem:[%s187 + $0x200] sm:$0xff]
        %v297 = vld [vmem:[%s187 + $0x208] sm:$0xff]
        %v298 = vld [vmem:[%s187 + $0x210] sm:$0xff]
        %v299 = vld [vmem:[%s187 + $0x218] sm:$0xff]
        %v300 = vld [vmem:[%s187 + $0x220] sm:$0xff]
        %v301 = vld [vmem:[%s187 + $0x228] sm:$0xff]
        %v302 = vld [vmem:[%s187 + $0x230] sm:$0xff]
        %v303 = vld [vmem:[%s187 + $0x238] sm:$0xff]
        %v304 = vld [vmem:[%s187 + $0x240] sm:$0xff]
        %v305 = vld [vmem:[%s187 + $0x248] sm:$0xff]
        %v306 = vld [vmem:[%s187 + $0x250] sm:$0xff]
        %v307 = vld [vmem:[%s187 + $0x258] sm:$0xff]
        %v308 = vld [vmem:[%s187 + $0x260] sm:$0xff]
        %v309 = vld [vmem:[%s187 + $0x268] sm:$0xff]
        %v310 = vld [vmem:[%s187 + $0x270] sm:$0xff]
        %v311 = vld [vmem:[%s187 + $0x278] sm:$0xff]
        %v312 = vld [vmem:[%s187 + $0x280] sm:$0xff]
        %v313 = vld [vmem:[%s187 + $0x288] sm:$0xff]
        %v314 = vld [vmem:[%s187 + $0x290] sm:$0xff]
        %v315 = vld [vmem:[%s187 + $0x298] sm:$0xff]
        %v316 = vld [vmem:[%s187 + $0x2a0] sm:$0xff]
        %v317 = vld [vmem:[%s187 + $0x2a8] sm:$0xff]
        %v318 = vld [vmem:[%s187 + $0x2b0] sm:$0xff]
        %v319 = vld [vmem:[%s187 + $0x2b8] sm:$0xff]
        %v320 = vld [vmem:[%s187 + $0x2c0] sm:$0xff]
        %v321 = vld [vmem:[%s187 + $0x2c8] sm:$0xff]
        %v322 = vld [vmem:[%s187 + $0x2d0] sm:$0xff]
        %v323 = vld [vmem:[%s187 + $0x2d8] sm:$0xff]
        %v324 = vld [vmem:[%s187 + $0x2e0] sm:$0xff]
        %v325 = vld [vmem:[%s187 + $0x2e8] sm:$0xff]
        %v326 = vld [vmem:[%s187 + $0x2f0] sm:$0xff]
        %v327 = vld [vmem:[%s187 + $0x2f8] sm:$0xff]
        %v328 = vld [vmem:[%s187 + $0x300] sm:$0xff]
        %v329 = vld [vmem:[%s187 + $0x308] sm:$0xff]
        %v330 = vld [vmem:[%s187 + $0x310] sm:$0xff]
        %v331 = vld [vmem:[%s187 + $0x318] sm:$0xff]
        %v332 = vld [vmem:[%s187 + $0x320] sm:$0xff]
        %v333 = vld [vmem:[%s187 + $0x328] sm:$0xff]
        %v334 = vld [vmem:[%s187 + $0x330] sm:$0xff]
        %v335 = vld [vmem:[%s187 + $0x338] sm:$0xff]
        %v336 = vld [vmem:[%s187 + $0x340] sm:$0xff]
        %v337 = vld [vmem:[%s187 + $0x348] sm:$0xff]
        %v338 = vld [vmem:[%s187 + $0x350] sm:$0xff]
        %v339 = vld [vmem:[%s187 + $0x358] sm:$0xff]
        %v340 = vld [vmem:[%s187 + $0x360] sm:$0xff]
        %v341 = vld [vmem:[%s187 + $0x368] sm:$0xff]
        %v342 = vld [vmem:[%s187 + $0x370] sm:$0xff]
        %v343 = vld [vmem:[%s187 + $0x378] sm:$0xff]
        %v344 = vld [vmem:[%s187 + $0x380] sm:$0xff]
        %v345 = vld [vmem:[%s187 + $0x388] sm:$0xff]
        %v346 = vld [vmem:[%s187 + $0x390] sm:$0xff]
        %v347 = vld [vmem:[%s187 + $0x398] sm:$0xff]
        %v348 = vld [vmem:[%s187 + $0x3a0] sm:$0xff]
        %v349 = vld [vmem:[%s187 + $0x3a8] sm:$0xff]
        %v350 = vld [vmem:[%s187 + $0x3b0] sm:$0xff]
        %v351 = vld [vmem:[%s187 + $0x3b8] sm:$0xff]
        %v352 = vld [vmem:[%s187 + $0x3c0] sm:$0xff]
        %v353 = vld [vmem:[%s187 + $0x3c8] sm:$0xff]
        %v354 = vld [vmem:[%s187 + $0x3d0] sm:$0xff]
        %v355 = vld [vmem:[%s187 + $0x3d8] sm:$0xff]
        %v356 = vld [vmem:[%s187 + $0x3e0] sm:$0xff]
        %v357 = vld [vmem:[%s187 + $0x3e8] sm:$0xff]
        %v358 = vld [vmem:[%s187 + $0x3f0] sm:$0xff]
        %v359 = vld [vmem:[%s187 + $0x3f8] sm:$0xff]
        %v360 = vld [vmem:[%s196] sm:$0xff]
        %v361 = vld [vmem:[%s196 + $0x8] sm:$0xff]
        %v364 = vlaneseq
        %v365 = vshrl.u32 %v364, 7
        %v366 = vsub.s32 0, %v365
        %v367 = vrot.slane %v360, %v366
        %v368 = vlaneseq
        %v369 = vshrl.u32 %v368, 7
        %v370 = vsub.s32 1, %v369
        %v371 = vrot.slane %v360, %v370
        %v372 = vlaneseq
        %v373 = vshrl.u32 %v372, 7
        %v374 = vsub.s32 2, %v373
        %v375 = vrot.slane %v360, %v374
        %v376 = vlaneseq
        %v377 = vshrl.u32 %v376, 7
        %v378 = vsub.s32 3, %v377
        %v379 = vrot.slane %v360, %v378
        %v380 = vlaneseq
        %v381 = vshrl.u32 %v380, 7
        %v382 = vsub.s32 4, %v381
        %v383 = vrot.slane %v360, %v382
        %v384 = vlaneseq
        %v385 = vshrl.u32 %v384, 7
        %v386 = vsub.s32 5, %v385
        %v387 = vrot.slane %v360, %v386
        %v388 = vlaneseq
        %v389 = vshrl.u32 %v388, 7
        %v390 = vsub.s32 6, %v389
        %v391 = vrot.slane %v360, %v390
        %v392 = vlaneseq
        %v393 = vshrl.u32 %v392, 7
        %v394 = vsub.s32 7, %v393
        %v395 = vrot.slane %v360, %v394
        %v396 = vlaneseq
        %v397 = vshrl.u32 %v396, 7
        %v398 = vsub.s32 0, %v397
        %v399 = vrot.slane %v361, %v398
        %v400 = vlaneseq
        %v401 = vshrl.u32 %v400, 7
        %v402 = vsub.s32 1, %v401
        %v403 = vrot.slane %v361, %v402
        %v404 = vlaneseq
        %v405 = vshrl.u32 %v404, 7
        %v406 = vsub.s32 2, %v405
        %v407 = vrot.slane %v361, %v406
        %v408 = vlaneseq
        %v409 = vshrl.u32 %v408, 7
        %v410 = vsub.s32 3, %v409
        %v411 = vrot.slane %v361, %v410
        %v412 = vlaneseq
        %v413 = vshrl.u32 %v412, 7
        %v414 = vsub.s32 4, %v413
        %v415 = vrot.slane %v361, %v414
        %v416 = vlaneseq
        %v417 = vshrl.u32 %v416, 7
        %v418 = vsub.s32 5, %v417
        %v419 = vrot.slane %v361, %v418
        %v420 = vlaneseq
        %v421 = vshrl.u32 %v420, 7
        %v422 = vsub.s32 6, %v421
        %v423 = vrot.slane %v361, %v422
        %v424 = vlaneseq
        %v425 = vshrl.u32 %v424, 7
        %v426 = vsub.s32 7, %v425
        %v427 = vrot.slane %v361, %v426
        %v572 = vunpack.c.l.b16 %v232
        %v573 = vunpack.c.h.b16 %v232
        %v574 = vunpack.c.l.b16 %v233
        %v575 = vunpack.c.h.b16 %v233
        %v576 = vunpack.c.l.b16 %v234
        %v577 = vunpack.c.h.b16 %v234
        %v578 = vunpack.c.l.b16 %v235
        %v579 = vunpack.c.h.b16 %v235
        %v580 = vunpack.c.l.b16 %v236
        %v581 = vunpack.c.h.b16 %v236
        %v582 = vunpack.c.l.b16 %v237
        %v583 = vunpack.c.h.b16 %v237
        %v584 = vunpack.c.l.b16 %v238
        %v585 = vunpack.c.h.b16 %v238
        %v586 = vunpack.c.l.b16 %v239
        %v587 = vunpack.c.h.b16 %v239
        %v588 = vunpack.c.l.b16 %v240
        %v589 = vunpack.c.h.b16 %v240
        %v590 = vunpack.c.l.b16 %v241
        %v591 = vunpack.c.h.b16 %v241
        %v592 = vunpack.c.l.b16 %v242
        %v593 = vunpack.c.h.b16 %v242
        %v594 = vunpack.c.l.b16 %v243
        %v595 = vunpack.c.h.b16 %v243
        %v596 = vunpack.c.l.b16 %v244
        %v597 = vunpack.c.h.b16 %v244
        %v598 = vunpack.c.l.b16 %v245
        %v599 = vunpack.c.h.b16 %v245
        %v600 = vunpack.c.l.b16 %v246
        %v601 = vunpack.c.h.b16 %v246
        %v602 = vunpack.c.l.b16 %v247
        %v603 = vunpack.c.h.b16 %v247
        %v604 = vunpack.c.l.b16 %v248
        %v605 = vunpack.c.h.b16 %v248
        %v606 = vunpack.c.l.b16 %v249
        %v607 = vunpack.c.h.b16 %v249
        %v608 = vunpack.c.l.b16 %v250
        %v609 = vunpack.c.h.b16 %v250
        %v610 = vunpack.c.l.b16 %v251
        %v611 = vunpack.c.h.b16 %v251
        %v612 = vunpack.c.l.b16 %v252
        %v613 = vunpack.c.h.b16 %v252
        %v614 = vunpack.c.l.b16 %v253
        %v615 = vunpack.c.h.b16 %v253
        %v616 = vunpack.c.l.b16 %v254
        %v617 = vunpack.c.h.b16 %v254
        %v618 = vunpack.c.l.b16 %v255
        %v619 = vunpack.c.h.b16 %v255
        %v620 = vunpack.c.l.b16 %v256
        %v621 = vunpack.c.h.b16 %v256
        %v622 = vunpack.c.l.b16 %v257
        %v623 = vunpack.c.h.b16 %v257
        %v624 = vunpack.c.l.b16 %v258
        %v625 = vunpack.c.h.b16 %v258
        %v626 = vunpack.c.l.b16 %v259
        %v627 = vunpack.c.h.b16 %v259
        %v628 = vunpack.c.l.b16 %v260
        %v629 = vunpack.c.h.b16 %v260
        %v630 = vunpack.c.l.b16 %v261
        %v631 = vunpack.c.h.b16 %v261
        %v632 = vunpack.c.l.b16 %v262
        %v633 = vunpack.c.h.b16 %v262
        %v634 = vunpack.c.l.b16 %v263
        %v635 = vunpack.c.h.b16 %v263
        %v636 = vunpack.c.l.b16 %v264
        %v637 = vunpack.c.h.b16 %v264
        %v638 = vunpack.c.l.b16 %v265
        %v639 = vunpack.c.h.b16 %v265
        %v640 = vunpack.c.l.b16 %v266
        %v641 = vunpack.c.h.b16 %v266
        %v642 = vunpack.c.l.b16 %v267
        %v643 = vunpack.c.h.b16 %v267
        %v644 = vunpack.c.l.b16 %v268
        %v645 = vunpack.c.h.b16 %v268
        %v646 = vunpack.c.l.b16 %v269
        %v647 = vunpack.c.h.b16 %v269
        %v648 = vunpack.c.l.b16 %v270
        %v649 = vunpack.c.h.b16 %v270
        %v650 = vunpack.c.l.b16 %v271
        %v651 = vunpack.c.h.b16 %v271
        %v652 = vunpack.c.l.b16 %v272
        %v653 = vunpack.c.h.b16 %v272
        %v654 = vunpack.c.l.b16 %v273
        %v655 = vunpack.c.h.b16 %v273
        %v656 = vunpack.c.l.b16 %v274
        %v657 = vunpack.c.h.b16 %v274
        %v658 = vunpack.c.l.b16 %v275
        %v659 = vunpack.c.h.b16 %v275
        %v660 = vunpack.c.l.b16 %v276
        %v661 = vunpack.c.h.b16 %v276
        %v662 = vunpack.c.l.b16 %v277
        %v663 = vunpack.c.h.b16 %v277
        %v664 = vunpack.c.l.b16 %v278
        %v665 = vunpack.c.h.b16 %v278
        %v666 = vunpack.c.l.b16 %v279
        %v667 = vunpack.c.h.b16 %v279
        %v668 = vunpack.c.l.b16 %v280
        %v669 = vunpack.c.h.b16 %v280
        %v670 = vunpack.c.l.b16 %v281
        %v671 = vunpack.c.h.b16 %v281
        %v672 = vunpack.c.l.b16 %v282
        %v673 = vunpack.c.h.b16 %v282
        %v674 = vunpack.c.l.b16 %v283
        %v675 = vunpack.c.h.b16 %v283
        %v676 = vunpack.c.l.b16 %v284
        %v677 = vunpack.c.h.b16 %v284
        %v678 = vunpack.c.l.b16 %v285
        %v679 = vunpack.c.h.b16 %v285
        %v680 = vunpack.c.l.b16 %v286
        %v681 = vunpack.c.h.b16 %v286
        %v682 = vunpack.c.l.b16 %v287
        %v683 = vunpack.c.h.b16 %v287
        %v684 = vunpack.c.l.b16 %v288
        %v685 = vunpack.c.h.b16 %v288
        %v686 = vunpack.c.l.b16 %v289
        %v687 = vunpack.c.h.b16 %v289
        %v688 = vunpack.c.l.b16 %v290
        %v689 = vunpack.c.h.b16 %v290
        %v690 = vunpack.c.l.b16 %v291
        %v691 = vunpack.c.h.b16 %v291
        %v692 = vunpack.c.l.b16 %v292
        %v693 = vunpack.c.h.b16 %v292
        %v694 = vunpack.c.l.b16 %v293
        %v695 = vunpack.c.h.b16 %v293
        %v696 = vunpack.c.l.b16 %v294
        %v697 = vunpack.c.h.b16 %v294
        %v698 = vunpack.c.l.b16 %v295
        %v699 = vunpack.c.h.b16 %v295
        %v700 = vunpack.c.l.b16 %v296
        %v701 = vunpack.c.h.b16 %v296
        %v702 = vunpack.c.l.b16 %v297
        %v703 = vunpack.c.h.b16 %v297
        %v704 = vunpack.c.l.b16 %v298
        %v705 = vunpack.c.h.b16 %v298
        %v706 = vunpack.c.l.b16 %v299
        %v707 = vunpack.c.h.b16 %v299
        %v708 = vunpack.c.l.b16 %v300
        %v709 = vunpack.c.h.b16 %v300
        %v710 = vunpack.c.l.b16 %v301
        %v711 = vunpack.c.h.b16 %v301
        %v712 = vunpack.c.l.b16 %v302
        %v713 = vunpack.c.h.b16 %v302
        %v714 = vunpack.c.l.b16 %v303
        %v715 = vunpack.c.h.b16 %v303
        %v716 = vunpack.c.l.b16 %v304
        %v717 = vunpack.c.h.b16 %v304
        %v718 = vunpack.c.l.b16 %v305
        %v719 = vunpack.c.h.b16 %v305
        %v720 = vunpack.c.l.b16 %v306
        %v721 = vunpack.c.h.b16 %v306
        %v722 = vunpack.c.l.b16 %v307
        %v723 = vunpack.c.h.b16 %v307
        %v724 = vunpack.c.l.b16 %v308
        %v725 = vunpack.c.h.b16 %v308
        %v726 = vunpack.c.l.b16 %v309
        %v727 = vunpack.c.h.b16 %v309
        %v728 = vunpack.c.l.b16 %v310
        %v729 = vunpack.c.h.b16 %v310
        %v730 = vunpack.c.l.b16 %v311
        %v731 = vunpack.c.h.b16 %v311
        %v732 = vunpack.c.l.b16 %v312
        %v733 = vunpack.c.h.b16 %v312
        %v734 = vunpack.c.l.b16 %v313
        %v735 = vunpack.c.h.b16 %v313
        %v736 = vunpack.c.l.b16 %v314
        %v737 = vunpack.c.h.b16 %v314
        %v738 = vunpack.c.l.b16 %v315
        %v739 = vunpack.c.h.b16 %v315
        %v740 = vunpack.c.l.b16 %v316
        %v741 = vunpack.c.h.b16 %v316
        %v742 = vunpack.c.l.b16 %v317
        %v743 = vunpack.c.h.b16 %v317
        %v744 = vunpack.c.l.b16 %v318
        %v745 = vunpack.c.h.b16 %v318
        %v746 = vunpack.c.l.b16 %v319
        %v747 = vunpack.c.h.b16 %v319
        %v748 = vunpack.c.l.b16 %v320
        %v749 = vunpack.c.h.b16 %v320
        %v750 = vunpack.c.l.b16 %v321
        %v751 = vunpack.c.h.b16 %v321
        %v752 = vunpack.c.l.b16 %v322
        %v753 = vunpack.c.h.b16 %v322
        %v754 = vunpack.c.l.b16 %v323
        %v755 = vunpack.c.h.b16 %v323
        %v756 = vunpack.c.l.b16 %v324
        %v757 = vunpack.c.h.b16 %v324
        %v758 = vunpack.c.l.b16 %v325
        %v759 = vunpack.c.h.b16 %v325
        %v760 = vunpack.c.l.b16 %v326
        %v761 = vunpack.c.h.b16 %v326
        %v762 = vunpack.c.l.b16 %v327
        %v763 = vunpack.c.h.b16 %v327
        %v764 = vunpack.c.l.b16 %v328
        %v765 = vunpack.c.h.b16 %v328
        %v766 = vunpack.c.l.b16 %v329
        %v767 = vunpack.c.h.b16 %v329
        %v768 = vunpack.c.l.b16 %v330
        %v769 = vunpack.c.h.b16 %v330
        %v770 = vunpack.c.l.b16 %v331
        %v771 = vunpack.c.h.b16 %v331
        %v772 = vunpack.c.l.b16 %v332
        %v773 = vunpack.c.h.b16 %v332
        %v774 = vunpack.c.l.b16 %v333
        %v775 = vunpack.c.h.b16 %v333
        %v776 = vunpack.c.l.b16 %v334
        %v777 = vunpack.c.h.b16 %v334
        %v778 = vunpack.c.l.b16 %v335
        %v779 = vunpack.c.h.b16 %v335
        %v780 = vunpack.c.l.b16 %v336
        %v781 = vunpack.c.h.b16 %v336
        %v782 = vunpack.c.l.b16 %v337
        %v783 = vunpack.c.h.b16 %v337
        %v784 = vunpack.c.l.b16 %v338
        %v785 = vunpack.c.h.b16 %v338
        %v786 = vunpack.c.l.b16 %v339
        %v787 = vunpack.c.h.b16 %v339
        %v788 = vunpack.c.l.b16 %v340
        %v789 = vunpack.c.h.b16 %v340
        %v790 = vunpack.c.l.b16 %v341
        %v791 = vunpack.c.h.b16 %v341
        %v792 = vunpack.c.l.b16 %v342
        %v793 = vunpack.c.h.b16 %v342
        %v794 = vunpack.c.l.b16 %v343
        %v795 = vunpack.c.h.b16 %v343
        %v796 = vunpack.c.l.b16 %v344
        %v797 = vunpack.c.h.b16 %v344
        %v798 = vunpack.c.l.b16 %v345
        %v799 = vunpack.c.h.b16 %v345
        %v800 = vunpack.c.l.b16 %v346
        %v801 = vunpack.c.h.b16 %v346
        %v802 = vunpack.c.l.b16 %v347
        %v803 = vunpack.c.h.b16 %v347
        %v804 = vunpack.c.l.b16 %v348
        %v805 = vunpack.c.h.b16 %v348
        %v806 = vunpack.c.l.b16 %v349
        %v807 = vunpack.c.h.b16 %v349
        %v808 = vunpack.c.l.b16 %v350
        %v809 = vunpack.c.h.b16 %v350
        %v810 = vunpack.c.l.b16 %v351
        %v811 = vunpack.c.h.b16 %v351
        %v812 = vunpack.c.l.b16 %v352
        %v813 = vunpack.c.h.b16 %v352
        %v814 = vunpack.c.l.b16 %v353
        %v815 = vunpack.c.h.b16 %v353
        %v816 = vunpack.c.l.b16 %v354
        %v817 = vunpack.c.h.b16 %v354
        %v818 = vunpack.c.l.b16 %v355
        %v819 = vunpack.c.h.b16 %v355
        %v820 = vunpack.c.l.b16 %v356
        %v821 = vunpack.c.h.b16 %v356
        %v822 = vunpack.c.l.b16 %v357
        %v823 = vunpack.c.h.b16 %v357
        %v824 = vunpack.c.l.b16 %v358
        %v825 = vunpack.c.h.b16 %v358
        %v826 = vunpack.c.l.b16 %v359
        %v827 = vunpack.c.h.b16 %v359
        %v828 = vpack.c.b16 %v588, %v572
        %v829 = vpack.c.b16 %v589, %v573
        %v830 = vpack.c.b16 %v590, %v574
        %v831 = vpack.c.b16 %v591, %v575
        %v832 = vpack.c.b16 %v592, %v576
        %v833 = vpack.c.b16 %v593, %v577
        %v834 = vpack.c.b16 %v594, %v578
        %v835 = vpack.c.b16 %v595, %v579
        %v836 = vpack.c.b16 %v596, %v580
        %v837 = vpack.c.b16 %v597, %v581
        %v838 = vpack.c.b16 %v598, %v582
        %v839 = vpack.c.b16 %v599, %v583
        %v840 = vpack.c.b16 %v600, %v584
        %v841 = vpack.c.b16 %v601, %v585
        %v842 = vpack.c.b16 %v602, %v586
        %v843 = vpack.c.b16 %v603, %v587
        %v844 = vpack.c.b16 %v620, %v604
        %v845 = vpack.c.b16 %v621, %v605
        %v846 = vpack.c.b16 %v622, %v606
        %v847 = vpack.c.b16 %v623, %v607
        %v848 = vpack.c.b16 %v624, %v608
        %v849 = vpack.c.b16 %v625, %v609
        %v850 = vpack.c.b16 %v626, %v610
        %v851 = vpack.c.b16 %v627, %v611
        %v852 = vpack.c.b16 %v628, %v612
        %v853 = vpack.c.b16 %v629, %v613
        %v854 = vpack.c.b16 %v630, %v614
        %v855 = vpack.c.b16 %v631, %v615
        %v856 = vpack.c.b16 %v632, %v616
        %v857 = vpack.c.b16 %v633, %v617
        %v858 = vpack.c.b16 %v634, %v618
        %v859 = vpack.c.b16 %v635, %v619
        %v860 = vpack.c.b16 %v652, %v636
        %v861 = vpack.c.b16 %v653, %v637
        %v862 = vpack.c.b16 %v654, %v638
        %v863 = vpack.c.b16 %v655, %v639
        %v864 = vpack.c.b16 %v656, %v640
        %v865 = vpack.c.b16 %v657, %v641
        %v866 = vpack.c.b16 %v658, %v642
        %v867 = vpack.c.b16 %v659, %v643
        %v868 = vpack.c.b16 %v660, %v644
        %v869 = vpack.c.b16 %v661, %v645
        %v870 = vpack.c.b16 %v662, %v646
        %v871 = vpack.c.b16 %v663, %v647
        %v872 = vpack.c.b16 %v664, %v648
        %v873 = vpack.c.b16 %v665, %v649
        %v874 = vpack.c.b16 %v666, %v650
        %v875 = vpack.c.b16 %v667, %v651
        %v876 = vpack.c.b16 %v684, %v668
        %v877 = vpack.c.b16 %v685, %v669
        %v878 = vpack.c.b16 %v686, %v670
        %v879 = vpack.c.b16 %v687, %v671
        %v880 = vpack.c.b16 %v688, %v672
        %v881 = vpack.c.b16 %v689, %v673
        %v882 = vpack.c.b16 %v690, %v674
        %v883 = vpack.c.b16 %v691, %v675
        %v884 = vpack.c.b16 %v692, %v676
        %v885 = vpack.c.b16 %v693, %v677
        %v886 = vpack.c.b16 %v694, %v678
        %v887 = vpack.c.b16 %v695, %v679
        %v888 = vpack.c.b16 %v696, %v680
        %v889 = vpack.c.b16 %v697, %v681
        %v890 = vpack.c.b16 %v698, %v682
        %v891 = vpack.c.b16 %v699, %v683
        %v892 = vpack.c.b16 %v716, %v700
        %v893 = vpack.c.b16 %v717, %v701
        %v894 = vpack.c.b16 %v718, %v702
        %v895 = vpack.c.b16 %v719, %v703
        %v896 = vpack.c.b16 %v720, %v704
        %v897 = vpack.c.b16 %v721, %v705
        %v898 = vpack.c.b16 %v722, %v706
        %v899 = vpack.c.b16 %v723, %v707
        %v900 = vpack.c.b16 %v724, %v708
        %v901 = vpack.c.b16 %v725, %v709
        %v902 = vpack.c.b16 %v726, %v710
        %v903 = vpack.c.b16 %v727, %v711
        %v904 = vpack.c.b16 %v728, %v712
        %v905 = vpack.c.b16 %v729, %v713
        %v906 = vpack.c.b16 %v730, %v714
        %v907 = vpack.c.b16 %v731, %v715
        %v908 = vpack.c.b16 %v748, %v732
        %v909 = vpack.c.b16 %v749, %v733
        %v910 = vpack.c.b16 %v750, %v734
        %v911 = vpack.c.b16 %v751, %v735
        %v912 = vpack.c.b16 %v752, %v736
        %v913 = vpack.c.b16 %v753, %v737
        %v914 = vpack.c.b16 %v754, %v738
        %v915 = vpack.c.b16 %v755, %v739
        %v916 = vpack.c.b16 %v756, %v740
        %v917 = vpack.c.b16 %v757, %v741
        %v918 = vpack.c.b16 %v758, %v742
        %v919 = vpack.c.b16 %v759, %v743
        %v920 = vpack.c.b16 %v760, %v744
        %v921 = vpack.c.b16 %v761, %v745
        %v922 = vpack.c.b16 %v762, %v746
        %v923 = vpack.c.b16 %v763, %v747
        %v924 = vpack.c.b16 %v780, %v764
        %v925 = vpack.c.b16 %v781, %v765
        %v926 = vpack.c.b16 %v782, %v766
        %v927 = vpack.c.b16 %v783, %v767
        %v928 = vpack.c.b16 %v784, %v768
        %v929 = vpack.c.b16 %v785, %v769
        %v930 = vpack.c.b16 %v786, %v770
        %v931 = vpack.c.b16 %v787, %v771
        %v932 = vpack.c.b16 %v788, %v772
        %v933 = vpack.c.b16 %v789, %v773
        %v934 = vpack.c.b16 %v790, %v774
        %v935 = vpack.c.b16 %v791, %v775
        %v936 = vpack.c.b16 %v792, %v776
        %v937 = vpack.c.b16 %v793, %v777
        %v938 = vpack.c.b16 %v794, %v778
        %v939 = vpack.c.b16 %v795, %v779
        %v940 = vpack.c.b16 %v812, %v796
        %v941 = vpack.c.b16 %v813, %v797
        %v942 = vpack.c.b16 %v814, %v798
        %v943 = vpack.c.b16 %v815, %v799
        %v944 = vpack.c.b16 %v816, %v800
        %v945 = vpack.c.b16 %v817, %v801
        %v946 = vpack.c.b16 %v818, %v802
        %v947 = vpack.c.b16 %v819, %v803
        %v948 = vpack.c.b16 %v820, %v804
        %v949 = vpack.c.b16 %v821, %v805
        %v950 = vpack.c.b16 %v822, %v806
        %v951 = vpack.c.b16 %v823, %v807
        %v952 = vpack.c.b16 %v824, %v808
        %v953 = vpack.c.b16 %v825, %v809
        %v954 = vpack.c.b16 %v826, %v810
        %v955 = vpack.c.b16 %v827, %v811
        %1084 = vmatprep.subr.bf16.mxu0 %v829
        %1085 = vmatpush1.bf16.msra.mxu0 %v828
        %1086 = vmatprep.subr.bf16.mxu0 %v845
        %1087 = vmatpush1.bf16.msra.mxu0 %v844
        %1088 = vmatprep.subr.bf16.mxu0 %v861
        %1089 = vmatpush1.bf16.msra.mxu0 %v860
        %1090 = vmatprep.subr.bf16.mxu0 %v877
        %1091 = vmatpush1.bf16.msra.mxu0 %v876
        %1092 = vmatprep.subr.bf16.mxu0 %v893
        %1093 = vmatpush1.bf16.msra.mxu0 %v892
        %1094 = vmatprep.subr.bf16.mxu0 %v909
        %1095 = vmatpush1.bf16.msra.mxu0 %v908
        %1096 = vmatprep.subr.bf16.mxu0 %v925
        %1097 = vmatpush1.bf16.msra.mxu0 %v924
        %1098 = vmatprep.subr.bf16.mxu0 %v941
        %1099 = vmatpush1.bf16.msra.mxu0 %v940
        %1100 = vmatprep.subr.bf16.mxu0 0
        %1101 = vmatpush1.bf16.msra.mxu0 0
        %1102 = vmatprep.subr.bf16.mxu0 0
        %1103 = vmatpush1.bf16.msra.mxu0 0
        %1104 = vmatprep.subr.bf16.mxu0 0
        %1105 = vmatpush1.bf16.msra.mxu0 0
        %1106 = vmatprep.subr.bf16.mxu0 0
        %1107 = vmatpush1.bf16.msra.mxu0 0
        %1108 = vmatprep.subr.bf16.mxu0 0
        %1109 = vmatpush1.bf16.msra.mxu0 0
        %1110 = vmatprep.subr.bf16.mxu0 0
        %1111 = vmatpush1.bf16.msra.mxu0 0
        %1112 = vmatprep.subr.bf16.mxu0 0
        %1113 = vmatpush1.bf16.msra.mxu0 0
        %1114 = vmatprep.subr.bf16.mxu0 0
        %1115 = vmatpush1.bf16.msra.mxu0 0
        %1116 = vmatprep.mubr.bf16.mxu0 0
        %1117 = vmatmul.mubr.bf16.gmra.mrb[0].mxu0 %v231
        %v1118 = vpop.f32.mrb[0].mxu0
        %v1119 = vadd.f32 %v367, %v1118
        %v1120 = vpop.f32.mrb[0].mxu0
        %v1121 = vadd.f32 %v371, %v1120
        %v1122 = vpop.f32.mrb[0].mxu0
        %v1123 = vpop.f32.mrb[0].mxu0
        %1124 = vdwg.mxu0
        %1125 = vmatprep.subr.bf16.mxu0 %v831
        %1126 = vmatpush1.bf16.msra.mxu0 %v830
        %1127 = vmatprep.subr.bf16.mxu0 %v847
        %1128 = vmatpush1.bf16.msra.mxu0 %v846
        %1129 = vmatprep.subr.bf16.mxu0 %v863
        %1130 = vmatpush1.bf16.msra.mxu0 %v862
        %1131 = vmatprep.subr.bf16.mxu0 %v879
        %1132 = vmatpush1.bf16.msra.mxu0 %v878
        %1133 = vmatprep.subr.bf16.mxu0 %v895
        %1134 = vmatpush1.bf16.msra.mxu0 %v894
        %1135 = vmatprep.subr.bf16.mxu0 %v911
        %1136 = vmatpush1.bf16.msra.mxu0 %v910
        %1137 = vmatprep.subr.bf16.mxu0 %v927
        %1138 = vmatpush1.bf16.msra.mxu0 %v926
        %1139 = vmatprep.subr.bf16.mxu0 %v943
        %1140 = vmatpush1.bf16.msra.mxu0 %v942
        %1141 = vmatprep.subr.bf16.mxu0 0
        %1142 = vmatpush1.bf16.msra.mxu0 0
        %1143 = vmatprep.subr.bf16.mxu0 0
        %1144 = vmatpush1.bf16.msra.mxu0 0
        %1145 = vmatprep.subr.bf16.mxu0 0
        %1146 = vmatpush1.bf16.msra.mxu0 0
        %1147 = vmatprep.subr.bf16.mxu0 0
        %1148 = vmatpush1.bf16.msra.mxu0 0
        %1149 = vmatprep.subr.bf16.mxu0 0
        %1150 = vmatpush1.bf16.msra.mxu0 0
        %1151 = vmatprep.subr.bf16.mxu0 0
        %1152 = vmatpush1.bf16.msra.mxu0 0
        %1153 = vmatprep.subr.bf16.mxu0 0
        %1154 = vmatpush1.bf16.msra.mxu0 0
        %1155 = vmatprep.subr.bf16.mxu0 0
        %1156 = vmatpush1.bf16.msra.mxu0 0
        %1157 = vmatprep.mubr.bf16.mxu0 0
        %1158 = vmatmul.mubr.bf16.gmra.mrb[0].mxu0 %v231
        %v1159 = vpop.f32.mrb[0].mxu0
        %v1160 = vadd.f32 %v375, %v1159
        %v1161 = vpop.f32.mrb[0].mxu0
        %v1162 = vadd.f32 %v379, %v1161
        %v1163 = vpop.f32.mrb[0].mxu0
        %v1164 = vpop.f32.mrb[0].mxu0
        %1165 = vdwg.mxu0
        %1166 = vmatprep.subr.bf16.mxu0 %v833
        %1167 = vmatpush1.bf16.msra.mxu0 %v832
        %1168 = vmatprep.subr.bf16.mxu0 %v849
        %1169 = vmatpush1.bf16.msra.mxu0 %v848
        %1170 = vmatprep.subr.bf16.mxu0 %v865
        %1171 = vmatpush1.bf16.msra.mxu0 %v864
        %1172 = vmatprep.subr.bf16.mxu0 %v881
        %1173 = vmatpush1.bf16.msra.mxu0 %v880
        %1174 = vmatprep.subr.bf16.mxu0 %v897
        %1175 = vmatpush1.bf16.msra.mxu0 %v896
        %1176 = vmatprep.subr.bf16.mxu0 %v913
        %1177 = vmatpush1.bf16.msra.mxu0 %v912
        %1178 = vmatprep.subr.bf16.mxu0 %v929
        %1179 = vmatpush1.bf16.msra.mxu0 %v928
        %1180 = vmatprep.subr.bf16.mxu0 %v945
        %1181 = vmatpush1.bf16.msra.mxu0 %v944
        %1182 = vmatprep.subr.bf16.mxu0 0
        %1183 = vmatpush1.bf16.msra.mxu0 0
        %1184 = vmatprep.subr.bf16.mxu0 0
        %1185 = vmatpush1.bf16.msra.mxu0 0
        %1186 = vmatprep.subr.bf16.mxu0 0
        %1187 = vmatpush1.bf16.msra.mxu0 0
        %1188 = vmatprep.subr.bf16.mxu0 0
        %1189 = vmatpush1.bf16.msra.mxu0 0
        %1190 = vmatprep.subr.bf16.mxu0 0
        %1191 = vmatpush1.bf16.msra.mxu0 0
        %1192 = vmatprep.subr.bf16.mxu0 0
        %1193 = vmatpush1.bf16.msra.mxu0 0
        %1194 = vmatprep.subr.bf16.mxu0 0
        %1195 = vmatpush1.bf16.msra.mxu0 0
        %1196 = vmatprep.subr.bf16.mxu0 0
        %1197 = vmatpush1.bf16.msra.mxu0 0
        %1198 = vmatprep.mubr.bf16.mxu0 0
        %1199 = vmatmul.mubr.bf16.gmra.mrb[0].mxu0 %v231
        %v1200 = vpop.f32.mrb[0].mxu0
        %v1201 = vadd.f32 %v383, %v1200
        %v1202 = vpop.f32.mrb[0].mxu0
        %v1203 = vadd.f32 %v387, %v1202
        %v1204 = vpop.f32.mrb[0].mxu0
        %v1205 = vpop.f32.mrb[0].mxu0
        %1206 = vdwg.mxu0
        %1207 = vmatprep.subr.bf16.mxu0 %v835
        %1208 = vmatpush1.bf16.msra.mxu0 %v834
        %1209 = vmatprep.subr.bf16.mxu0 %v851
        %1210 = vmatpush1.bf16.msra.mxu0 %v850
        %1211 = vmatprep.subr.bf16.mxu0 %v867
        %1212 = vmatpush1.bf16.msra.mxu0 %v866
        %1213 = vmatprep.subr.bf16.mxu0 %v883
        %1214 = vmatpush1.bf16.msra.mxu0 %v882
        %1215 = vmatprep.subr.bf16.mxu0 %v899
        %1216 = vmatpush1.bf16.msra.mxu0 %v898
        %1217 = vmatprep.subr.bf16.mxu0 %v915
        %1218 = vmatpush1.bf16.msra.mxu0 %v914
        %1219 = vmatprep.subr.bf16.mxu0 %v931
        %1220 = vmatpush1.bf16.msra.mxu0 %v930
        %1221 = vmatprep.subr.bf16.mxu0 %v947
        %1222 = vmatpush1.bf16.msra.mxu0 %v946
        %1223 = vmatprep.subr.bf16.mxu0 0
        %1224 = vmatpush1.bf16.msra.mxu0 0
        %1225 = vmatprep.subr.bf16.mxu0 0
        %1226 = vmatpush1.bf16.msra.mxu0 0
        %1227 = vmatprep.subr.bf16.mxu0 0
        %1228 = vmatpush1.bf16.msra.mxu0 0
        %1229 = vmatprep.subr.bf16.mxu0 0
        %1230 = vmatpush1.bf16.msra.mxu0 0
        %1231 = vmatprep.subr.bf16.mxu0 0
        %1232 = vmatpush1.bf16.msra.mxu0 0
        %1233 = vmatprep.subr.bf16.mxu0 0
        %1234 = vmatpush1.bf16.msra.mxu0 0
        %1235 = vmatprep.subr.bf16.mxu0 0
        %1236 = vmatpush1.bf16.msra.mxu0 0
        %1237 = vmatprep.subr.bf16.mxu0 0
        %1238 = vmatpush1.bf16.msra.mxu0 0
        %1239 = vmatprep.mubr.bf16.mxu0 0
        %1240 = vmatmul.mubr.bf16.gmra.mrb[0].mxu0 %v231
        %v1241 = vpop.f32.mrb[0].mxu0
        %v1242 = vadd.f32 %v391, %v1241
        %v1243 = vpop.f32.mrb[0].mxu0
        %v1244 = vadd.f32 %v395, %v1243
        %v1245 = vpop.f32.mrb[0].mxu0
        %v1246 = vpop.f32.mrb[0].mxu0
        %1247 = vdwg.mxu0
        %1248 = vmatprep.subr.bf16.mxu0 %v837
        %1249 = vmatpush1.bf16.msra.mxu0 %v836
        %1250 = vmatprep.subr.bf16.mxu0 %v853
        %1251 = vmatpush1.bf16.msra.mxu0 %v852
        %1252 = vmatprep.subr.bf16.mxu0 %v869
        %1253 = vmatpush1.bf16.msra.mxu0 %v868
        %1254 = vmatprep.subr.bf16.mxu0 %v885
        %1255 = vmatpush1.bf16.msra.mxu0 %v884
        %1256 = vmatprep.subr.bf16.mxu0 %v901
        %1257 = vmatpush1.bf16.msra.mxu0 %v900
        %1258 = vmatprep.subr.bf16.mxu0 %v917
        %1259 = vmatpush1.bf16.msra.mxu0 %v916
        %1260 = vmatprep.subr.bf16.mxu0 %v933
        %1261 = vmatpush1.bf16.msra.mxu0 %v932
        %1262 = vmatprep.subr.bf16.mxu0 %v949
        %1263 = vmatpush1.bf16.msra.mxu0 %v948
        %1264 = vmatprep.subr.bf16.mxu0 0
        %1265 = vmatpush1.bf16.msra.mxu0 0
        %1266 = vmatprep.subr.bf16.mxu0 0
        %1267 = vmatpush1.bf16.msra.mxu0 0
        %1268 = vmatprep.subr.bf16.mxu0 0
        %1269 = vmatpush1.bf16.msra.mxu0 0
        %1270 = vmatprep.subr.bf16.mxu0 0
        %1271 = vmatpush1.bf16.msra.mxu0 0
        %1272 = vmatprep.subr.bf16.mxu0 0
        %1273 = vmatpush1.bf16.msra.mxu0 0
        %1274 = vmatprep.subr.bf16.mxu0 0
        %1275 = vmatpush1.bf16.msra.mxu0 0
        %1276 = vmatprep.subr.bf16.mxu0 0
        %1277 = vmatpush1.bf16.msra.mxu0 0
        %1278 = vmatprep.subr.bf16.mxu0 0
        %1279 = vmatpush1.bf16.msra.mxu0 0
        %1280 = vmatprep.mubr.bf16.mxu0 0
        %1281 = vmatmul.mubr.bf16.gmra.mrb[0].mxu0 %v231
        %v1282 = vpop.f32.mrb[0].mxu0
        %v1283 = vadd.f32 %v399, %v1282
        %v1284 = vpop.f32.mrb[0].mxu0
        %v1285 = vadd.f32 %v403, %v1284
        %v1286 = vpop.f32.mrb[0].mxu0
        %v1287 = vpop.f32.mrb[0].mxu0
        %1288 = vdwg.mxu0
        %1289 = vmatprep.subr.bf16.mxu0 %v839
        %1290 = vmatpush1.bf16.msra.mxu0 %v838
        %1291 = vmatprep.subr.bf16.mxu0 %v855
        %1292 = vmatpush1.bf16.msra.mxu0 %v854
        %1293 = vmatprep.subr.bf16.mxu0 %v871
        %1294 = vmatpush1.bf16.msra.mxu0 %v870
        %1295 = vmatprep.subr.bf16.mxu0 %v887
        %1296 = vmatpush1.bf16.msra.mxu0 %v886
        %1297 = vmatprep.subr.bf16.mxu0 %v903
        %1298 = vmatpush1.bf16.msra.mxu0 %v902
        %1299 = vmatprep.subr.bf16.mxu0 %v919
        %1300 = vmatpush1.bf16.msra.mxu0 %v918
        %1301 = vmatprep.subr.bf16.mxu0 %v935
        %1302 = vmatpush1.bf16.msra.mxu0 %v934
        %1303 = vmatprep.subr.bf16.mxu0 %v951
        %1304 = vmatpush1.bf16.msra.mxu0 %v950
        %1305 = vmatprep.subr.bf16.mxu0 0
        %1306 = vmatpush1.bf16.msra.mxu0 0
        %1307 = vmatprep.subr.bf16.mxu0 0
        %1308 = vmatpush1.bf16.msra.mxu0 0
        %1309 = vmatprep.subr.bf16.mxu0 0
        %1310 = vmatpush1.bf16.msra.mxu0 0
        %1311 = vmatprep.subr.bf16.mxu0 0
        %1312 = vmatpush1.bf16.msra.mxu0 0
        %1313 = vmatprep.subr.bf16.mxu0 0
        %1314 = vmatpush1.bf16.msra.mxu0 0
        %1315 = vmatprep.subr.bf16.mxu0 0
        %1316 = vmatpush1.bf16.msra.mxu0 0
        %1317 = vmatprep.subr.bf16.mxu0 0
        %1318 = vmatpush1.bf16.msra.mxu0 0
        %1319 = vmatprep.subr.bf16.mxu0 0
        %1320 = vmatpush1.bf16.msra.mxu0 0
        %1321 = vmatprep.mubr.bf16.mxu0 0
        %1322 = vmatmul.mubr.bf16.gmra.mrb[0].mxu0 %v231
        %v1323 = vpop.f32.mrb[0].mxu0
        %v1324 = vadd.f32 %v407, %v1323
        %v1325 = vpop.f32.mrb[0].mxu0
        %v1326 = vadd.f32 %v411, %v1325
        %v1327 = vpop.f32.mrb[0].mxu0
        %v1328 = vpop.f32.mrb[0].mxu0
        %1329 = vdwg.mxu0
        %1330 = vmatprep.subr.bf16.mxu0 %v841
        %1331 = vmatpush1.bf16.msra.mxu0 %v840
        %1332 = vmatprep.subr.bf16.mxu0 %v857
        %1333 = vmatpush1.bf16.msra.mxu0 %v856
        %1334 = vmatprep.subr.bf16.mxu0 %v873
        %1335 = vmatpush1.bf16.msra.mxu0 %v872
        %1336 = vmatprep.subr.bf16.mxu0 %v889
        %1337 = vmatpush1.bf16.msra.mxu0 %v888
        %1338 = vmatprep.subr.bf16.mxu0 %v905
        %1339 = vmatpush1.bf16.msra.mxu0 %v904
        %1340 = vmatprep.subr.bf16.mxu0 %v921
        %1341 = vmatpush1.bf16.msra.mxu0 %v920
        %1342 = vmatprep.subr.bf16.mxu0 %v937
        %1343 = vmatpush1.bf16.msra.mxu0 %v936
        %1344 = vmatprep.subr.bf16.mxu0 %v953
        %1345 = vmatpush1.bf16.msra.mxu0 %v952
        %1346 = vmatprep.subr.bf16.mxu0 0
        %1347 = vmatpush1.bf16.msra.mxu0 0
        %1348 = vmatprep.subr.bf16.mxu0 0
        %1349 = vmatpush1.bf16.msra.mxu0 0
        %1350 = vmatprep.subr.bf16.mxu0 0
        %1351 = vmatpush1.bf16.msra.mxu0 0
        %1352 = vmatprep.subr.bf16.mxu0 0
        %1353 = vmatpush1.bf16.msra.mxu0 0
        %1354 = vmatprep.subr.bf16.mxu0 0
        %1355 = vmatpush1.bf16.msra.mxu0 0
        %1356 = vmatprep.subr.bf16.mxu0 0
        %1357 = vmatpush1.bf16.msra.mxu0 0
        %1358 = vmatprep.subr.bf16.mxu0 0
        %1359 = vmatpush1.bf16.msra.mxu0 0
        %1360 = vmatprep.subr.bf16.mxu0 0
        %1361 = vmatpush1.bf16.msra.mxu0 0
        %1362 = vmatprep.mubr.bf16.mxu0 0
        %1363 = vmatmul.mubr.bf16.gmra.mrb[0].mxu0 %v231
        %v1364 = vpop.f32.mrb[0].mxu0
        %v1365 = vadd.f32 %v415, %v1364
        %v1366 = vpop.f32.mrb[0].mxu0
        %v1367 = vadd.f32 %v419, %v1366
        %v1368 = vpop.f32.mrb[0].mxu0
        %v1369 = vpop.f32.mrb[0].mxu0
        %1370 = vdwg.mxu0
        %1371 = vmatprep.subr.bf16.mxu0 %v843
        %1372 = vmatpush1.bf16.msra.mxu0 %v842
        %1373 = vmatprep.subr.bf16.mxu0 %v859
        %1374 = vmatpush1.bf16.msra.mxu0 %v858
        %1375 = vmatprep.subr.bf16.mxu0 %v875
        %1376 = vmatpush1.bf16.msra.mxu0 %v874
        %1377 = vmatprep.subr.bf16.mxu0 %v891
        %1378 = vmatpush1.bf16.msra.mxu0 %v890
        %1379 = vmatprep.subr.bf16.mxu0 %v907
        %1380 = vmatpush1.bf16.msra.mxu0 %v906
        %1381 = vmatprep.subr.bf16.mxu0 %v923
        %1382 = vmatpush1.bf16.msra.mxu0 %v922
        %1383 = vmatprep.subr.bf16.mxu0 %v939
        %1384 = vmatpush1.bf16.msra.mxu0 %v938
        %1385 = vmatprep.subr.bf16.mxu0 %v955
        %1386 = vmatpush1.bf16.msra.mxu0 %v954
        %1387 = vmatprep.subr.bf16.mxu0 0
        %1388 = vmatpush1.bf16.msra.mxu0 0
        %1389 = vmatprep.subr.bf16.mxu0 0
        %1390 = vmatpush1.bf16.msra.mxu0 0
        %1391 = vmatprep.subr.bf16.mxu0 0
        %1392 = vmatpush1.bf16.msra.mxu0 0
        %1393 = vmatprep.subr.bf16.mxu0 0
        %1394 = vmatpush1.bf16.msra.mxu0 0
        %1395 = vmatprep.subr.bf16.mxu0 0
        %1396 = vmatpush1.bf16.msra.mxu0 0
        %1397 = vmatprep.subr.bf16.mxu0 0
        %1398 = vmatpush1.bf16.msra.mxu0 0
        %1399 = vmatprep.subr.bf16.mxu0 0
        %1400 = vmatpush1.bf16.msra.mxu0 0
        %1401 = vmatprep.subr.bf16.mxu0 0
        %1402 = vmatpush1.bf16.msra.mxu0 0
        %1403 = vmatprep.mubr.bf16.mxu0 0
        %1404 = vmatmul.mubr.bf16.gmra.mrb[0].mxu0 %v231
        %v1405 = vpop.f32.mrb[0].mxu0
        %v1406 = vadd.f32 %v423, %v1405
        %v1407 = vpop.f32.mrb[0].mxu0
        %v1408 = vadd.f32 %v427, %v1407
        %v1409 = vpop.f32.mrb[0].mxu0
        %v1410 = vpop.f32.mrb[0].mxu0
        %1411 = vdwg.mxu0
        %vm1412 = vcmp.gt.f32.partialorder %v1119, 0.0
        %vm1413 = vcmp.gt.f32.partialorder %v1121, 0.0
        %vm1414 = vcmp.gt.f32.partialorder %v1160, 0.0
        %vm1415 = vcmp.gt.f32.partialorder %v1162, 0.0
        %vm1416 = vcmp.gt.f32.partialorder %v1201, 0.0
        %vm1417 = vcmp.gt.f32.partialorder %v1203, 0.0
        %vm1418 = vcmp.gt.f32.partialorder %v1242, 0.0
        %vm1419 = vcmp.gt.f32.partialorder %v1244, 0.0
        %vm1420 = vcmp.gt.f32.partialorder %v1283, 0.0
        %vm1421 = vcmp.gt.f32.partialorder %v1285, 0.0
        %vm1422 = vcmp.gt.f32.partialorder %v1324, 0.0
        %vm1423 = vcmp.gt.f32.partialorder %v1326, 0.0
        %vm1424 = vcmp.gt.f32.partialorder %v1365, 0.0
        %vm1425 = vcmp.gt.f32.partialorder %v1367, 0.0
        %vm1426 = vcmp.gt.f32.partialorder %v1406, 0.0
        %vm1427 = vcmp.gt.f32.partialorder %v1408, 0.0
        %v1428 = vmul.f32 %v1119, 0.2
        %v1429 = vmul.f32 %v1121, 0.2
        %v1430 = vmul.f32 %v1160, 0.2
        %v1431 = vmul.f32 %v1162, 0.2
        %v1432 = vmul.f32 %v1201, 0.2
        %v1433 = vmul.f32 %v1203, 0.2
        %v1434 = vmul.f32 %v1242, 0.2
        %v1435 = vmul.f32 %v1244, 0.2
        %v1436 = vmul.f32 %v1283, 0.2
        %v1437 = vmul.f32 %v1285, 0.2
        %v1438 = vmul.f32 %v1324, 0.2
        %v1439 = vmul.f32 %v1326, 0.2
        %v1440 = vmul.f32 %v1365, 0.2
        %v1441 = vmul.f32 %v1367, 0.2
        %v1442 = vmul.f32 %v1406, 0.2
        %v1443 = vmul.f32 %v1408, 0.2
        %v1444 = vsel %vm1412, %v1119, %v1428
        %v1445 = vsel %vm1413, %v1121, %v1429
        %v1446 = vsel %vm1414, %v1160, %v1430
        %v1447 = vsel %vm1415, %v1162, %v1431
        %v1448 = vsel %vm1416, %v1201, %v1432
        %v1449 = vsel %vm1417, %v1203, %v1433
        %v1450 = vsel %vm1418, %v1242, %v1434
        %v1451 = vsel %vm1419, %v1244, %v1435
        %v1452 = vsel %vm1420, %v1283, %v1436
        %v1453 = vsel %vm1421, %v1285, %v1437
        %v1454 = vsel %vm1422, %v1324, %v1438
        %v1455 = vsel %vm1423, %v1326, %v1439
        %v1456 = vsel %vm1424, %v1365, %v1440
        %v1457 = vsel %vm1425, %v1367, %v1441
        %v1458 = vsel %vm1426, %v1406, %v1442
        %v1459 = vsel %vm1427, %v1408, %v1443
        %v1460 = vpack.c.bf16 %v1444, %v1444
        %v1461 = vpack.c.bf16 %v1445, %v1445
        %v1462 = vpack.c.bf16 %v1446, %v1446
        %v1463 = vpack.c.bf16 %v1447, %v1447
        %v1464 = vpack.c.bf16 %v1448, %v1448
        %v1465 = vpack.c.bf16 %v1449, %v1449
        %v1466 = vpack.c.bf16 %v1450, %v1450
        %v1467 = vpack.c.bf16 %v1451, %v1451
        %v1468 = vpack.c.bf16 %v1452, %v1452
        %v1469 = vpack.c.bf16 %v1453, %v1453
        %v1470 = vpack.c.bf16 %v1454, %v1454
        %v1471 = vpack.c.bf16 %v1455, %v1455
        %v1472 = vpack.c.bf16 %v1456, %v1456
        %v1473 = vpack.c.bf16 %v1457, %v1457
        %v1474 = vpack.c.bf16 %v1458, %v1458
        %v1475 = vpack.c.bf16 %v1459, %v1459
        %v1492 = vcombine.low %v1460, %v1461
        %v1493 = vcombine.low %v1462, %v1463
        %v1494 = vcombine.low %v1464, %v1465
        %v1495 = vcombine.low %v1466, %v1467
        %v1497 = vunpack.c.l.s4 1966171168
        %v1498 = vunpack.c.0.s8 %v1497
        %v1499 = vlaneseq
        %v1500 = vshrl.u32 %v1499, 7
        %v1501 = vsub.s32 %v1498, %v1500
        %v1502 = vrot.slane %v1492, %v1501
        %v1504 = vunpack.c.l.s4 1966171168
        %v1505 = vunpack.c.0.s8 %v1504
        %v1506 = vlaneseq
        %v1507 = vshrl.u32 %v1506, 7
        %v1508 = vsub.s32 %v1505, %v1507
        %v1509 = vrot.slane %v1493, %v1508
        %v1511 = vunpack.c.l.s4 1966171168
        %v1512 = vunpack.c.0.s8 %v1511
        %v1513 = vlaneseq
        %v1514 = vshrl.u32 %v1513, 7
        %v1515 = vsub.s32 %v1512, %v1514
        %v1516 = vrot.slane %v1494, %v1515
        %v1518 = vunpack.c.l.s4 1966171168
        %v1519 = vunpack.c.0.s8 %v1518
        %v1520 = vlaneseq
        %v1521 = vshrl.u32 %v1520, 7
        %v1522 = vsub.s32 %v1519, %v1521
        %v1523 = vrot.slane %v1495, %v1522
        %v1524 = vcombine.low %v1502, %v1509
        %v1525 = vcombine.low %v1516, %v1523
        %v1527 = vunpack.c.l.s4 1966171168
        %v1528 = vunpack.c.0.s8 %v1527
        %v1529 = vlaneseq
        %v1530 = vshrl.u32 %v1529, 7
        %v1531 = vsub.s32 %v1528, %v1530
        %v1532 = vrot.slane %v1524, %v1531
        %v1534 = vunpack.c.l.s4 1966171168
        %v1535 = vunpack.c.0.s8 %v1534
        %v1536 = vlaneseq
        %v1537 = vshrl.u32 %v1536, 7
        %v1538 = vsub.s32 %v1535, %v1537
        %v1539 = vrot.slane %v1525, %v1538
        %v1540 = vcombine.low %v1532, %v1539
        %v1541 = vcombine.low %v1468, %v1469
        %v1542 = vcombine.low %v1470, %v1471
        %v1543 = vcombine.low %v1472, %v1473
        %v1544 = vcombine.low %v1474, %v1475
        %v1546 = vunpack.c.l.s4 1966171168
        %v1547 = vunpack.c.0.s8 %v1546
        %v1548 = vlaneseq
        %v1549 = vshrl.u32 %v1548, 7
        %v1550 = vsub.s32 %v1547, %v1549
        %v1551 = vrot.slane %v1541, %v1550
        %v1553 = vunpack.c.l.s4 1966171168
        %v1554 = vunpack.c.0.s8 %v1553
        %v1555 = vlaneseq
        %v1556 = vshrl.u32 %v1555, 7
        %v1557 = vsub.s32 %v1554, %v1556
        %v1558 = vrot.slane %v1542, %v1557
        %v1560 = vunpack.c.l.s4 1966171168
        %v1561 = vunpack.c.0.s8 %v1560
        %v1562 = vlaneseq
        %v1563 = vshrl.u32 %v1562, 7
        %v1564 = vsub.s32 %v1561, %v1563
        %v1565 = vrot.slane %v1543, %v1564
        %v1567 = vunpack.c.l.s4 1966171168
        %v1568 = vunpack.c.0.s8 %v1567
        %v1569 = vlaneseq
        %v1570 = vshrl.u32 %v1569, 7
        %v1571 = vsub.s32 %v1568, %v1570
        %v1572 = vrot.slane %v1544, %v1571
        %v1573 = vcombine.low %v1551, %v1558
        %v1574 = vcombine.low %v1565, %v1572
        %v1576 = vunpack.c.l.s4 1966171168
        %v1577 = vunpack.c.0.s8 %v1576
        %v1578 = vlaneseq
        %v1579 = vshrl.u32 %v1578, 7
        %v1580 = vsub.s32 %v1577, %v1579
        %v1581 = vrot.slane %v1573, %v1580
        %v1583 = vunpack.c.l.s4 1966171168
        %v1584 = vunpack.c.0.s8 %v1583
        %v1585 = vlaneseq
        %v1586 = vshrl.u32 %v1585, 7
        %v1587 = vsub.s32 %v1584, %v1586
        %v1588 = vrot.slane %v1574, %v1587
        %v1589 = vcombine.low %v1581, %v1588
        %1592 = vst [vmem:[%s228] sm:$0xff] %v1540
        %1593 = vst [vmem:[%s228 + $0x8] sm:$0xff] %v1589
        %s1594 = smul.u32 16, %s20
        %p1595 = scmp.lt.s32.totalorder %s1594, 63
        %s1596 = scalar_select %p1595, %s1594, 63
        %s1597 = scalar_lea.vmem %s3, %s1596
        // Predicated region
        $region41: #{generator_forward.3} parent=31 // pred_check
          %p1598 = pneg %p111
        $region42: #{generator_forward.3} parent=31 // pred_check_branch
          %1600 = sbr.rel (%p1598) target = $region44
        $region43: #{generator_forward.3} parent=31 // pred_region
          %s1601 = smul.u32 16, %s20
        $region44: #{generator_forward.3} parent=31 // pred_fallthru
          _
      $region32: #{generator_forward.3} parent=5 // pred_fallthru
        _
      %p1602 = scmp.le.s32.totalorder 2, %s15
      // Predicated region
      $region45: #{generator_forward.3} parent=5 // pred_check
        %p1603 = pneg %p1602
      $region46: #{generator_forward.3} parent=5 // pred_check_branch
        %1605 = sbr.rel (%p1603) target = $region48
      $region47: #{generator_forward.3} parent=5 // pred_region
        %s1606 = ssub.s32 %s15, 2
        // Predicated region
        $region49: #{generator_forward.3} parent=47 // pred_check
          %p1607 = pneg %p117
        $region50: #{generator_forward.3} parent=47 // pred_check_branch
          %1609 = sbr.rel (%p1607) target = $region52
        $region51: #{generator_forward.3} parent=47 // pred_region
          %s1610 = smul.u32 16, %s21
          %p1611 = scmp.lt.s32.totalorder %s1610, 63
          %s1612 = scalar_select %p1611, %s1610, 63
          %s1613 = scalar_lea.vmem %s3, %s1612
        $region52: #{generator_forward.3} parent=47 // pred_fallthru
          _
      $region48: #{generator_forward.3} parent=5 // pred_fallthru
        _
    $region6: #{generator_forward.3} parent=1 // loop_footer
      %s19 = sadd.s32 1, %s15
    $region7: #{generator_forward.3} parent=1 // loop_footer_branch
      %14 = sbr.rel target = $region3
    $region8: #{generator_forward.3} parent=1 // loop_exit
      _
    %1614 = vsyncpa [#allocation3], 1
    %s1615 = scalar_lea.sflag [#allocation3], 1
    %1616 = vsyncpa %s1615, 1
    %1617 = vsyncpa [#allocation5], 1
    %s1618 = scalar_lea.sflag [#allocation5], 1
    %1619 = vsyncpa %s1618, 1

// kernel: generator_forward.4
$region0: #{generator_forward.4}
  #allocation0 [shape = 'u32[]', space=smem, size = 0x4, offset = 0x4, fixed_abs, tag = 'smem constant byte address 0x4 - core index']
  #allocation1 [shape = 'u32[144,128]{1,0:T(1,128)}', space=vmem, size = 0x12000, scoped, tag = 'internal scratch']
  #allocation2 [shape = 'f32[1,10,10,128]{3,2,1,0:T(8,128)}', space=vmem, size = 0x14000, scoped, tag = 'scratch operand']
  %s0 = inlined_call_operand.vmem [shape: bf16[2,8,8,128], index: 0, kind: input, shape index: {}]
  %s1 = inlined_call_operand.vmem [shape: bf16[2,2,512,64], index: 1, kind: input, shape index: {}]
  %s2 = inlined_call_operand.vmem [shape: bf16[2,8,2,8,128], index: 2, kind: output, shape index: {0}]
  %s3 = inlined_call_operand.vmem [shape: f32[2,2,64], index: 3, kind: output, shape index: {1}]
  %4 = xla_tuple %s2, %s3
  %s5 = sld [smem:[#allocation0]]
  $region49: #{generator_forward.4} parent=0
    _
  %s7 = ssub.s32 1, %s5
  %s8 = scalar_select 0, %s7, %s5
  loop: start=0, step=1, limit=4
  $region2: #{generator_forward.4} parent=0 // loop_pre_header
    _
  $region3: #{generator_forward.4} parent=0 // loop_header
    %s10 = sphi 0, %s14
    %p11 = scmp.ge.s32.totalorder %s10, 4
    %s20 = sphi 0, %s22
    %s23 = sphi 0, %s20
    %s24 = sphi 0, %s23
    %s40 = sphi 0, %s24
    %s44 = sphi 0, %s44
    %s46 = sphi 0, %s44
    %s47 = sphi 0, %s46
    %s61 = sphi 0, %s47
    %s67 = sphi 0, %s69
    %s70 = sphi 0, %s67
    %s71 = sphi 0, %s70
    %s87 = sphi 0, %s71
    %s93 = sphi 0, %s95
    %s96 = sphi 0, %s93
    %s97 = sphi 0, %s96
    %s113 = sphi 0, %s97
  $region4: #{generator_forward.4} parent=0 // loop_header_branch
    %13 = sbr.rel (%p11) target = $region8
  $region5: #{generator_forward.4} parent=0 // loop_body
    %s15 = ssub.s32 %s10, 1
    %s16 = ssub.s32 %s10, 2
    %s17 = sadd.s32 %s10, 1
    %s18 = ssub.s32 %s10, %s17
    %p19 = scmp.eq.s32.totalorder %s18, 0
    %s21 = sadd.s32 %s20, 1
    %s22 = scalar_select %p19, %s20, %s21
    %p25 = pneg %p19
    %p26 = scmp.eq.s32.totalorder %s10, 1
    %p27 = por %p25, %p26
    %p28 = scmp.ne.s32.totalorder %s20, %s23
    %p29 = scmp.eq.s32.totalorder %s10, 0
    %p30 = por %p28, %p29
    %p31 = scmp.ne.s32.totalorder %s20, %s23
    %p32 = scmp.eq.s32.totalorder %s15, 1
    %p33 = por %p31, %p32
    %p34 = scmp.ne.s32.totalorder %s23, %s24
    %p35 = scmp.eq.s32.totalorder %s15, 0
    %p36 = por %p34, %p35
    %p37 = scmp.ne.s32.totalorder %s23, %s24
    %p38 = scmp.eq.s32.totalorder %s16, 1
    %p39 = por %p37, %p38
    %p41 = scmp.ne.s32.totalorder %s24, %s40
    %p42 = scmp.eq.s32.totalorder %s16, 0
    %p43 = por %p41, %p42
    %s45 = sadd.s32 %s44, 1
    %p48 = scmp.eq.s32.totalorder %s10, 1
    %p49 = scmp.ne.s32.totalorder %s44, %s46
    %p50 = scmp.eq.s32.totalorder %s10, 0
    %p51 = por %p49, %p50
    %p52 = scmp.ne.s32.totalorder %s44, %s46
    %p53 = scmp.eq.s32.totalorder %s15, 1
    %p54 = por %p52, %p53
    %p55 = scmp.ne.s32.totalorder %s46, %s47
    %p56 = scmp.eq.s32.totalorder %s15, 0
    %p57 = por %p55, %p56
    %p58 = scmp.ne.s32.totalorder %s46, %s47
    %p59 = scmp.eq.s32.totalorder %s16, 1
    %p60 = por %p58, %p59
    %p62 = scmp.ne.s32.totalorder %s47, %s61
    %p63 = scmp.eq.s32.totalorder %s16, 0
    %p64 = por %p62, %p63
    %s65 = ssub.s32 %s10, %s17
    %p66 = scmp.eq.s32.totalorder %s65, 0
    %s68 = sadd.s32 %s67, 1
    %s69 = scalar_select %p66, %s67, %s68
    %p72 = pneg %p66
    %p73 = scmp.eq.s32.totalorder %s10, 1
    %p74 = por %p72, %p73
    %p75 = scmp.ne.s32.totalorder %s67, %s70
    %p76 = scmp.eq.s32.totalorder %s10, 0
    %p77 = por %p75, %p76
    %p78 = scmp.ne.s32.totalorder %s67, %s70
    %p79 = scmp.eq.s32.totalorder %s15, 1
    %p80 = por %p78, %p79
    %p81 = scmp.ne.s32.totalorder %s70, %s71
    %p82 = scmp.eq.s32.totalorder %s15, 0
    %p83 = por %p81, %p82
    %p84 = scmp.ne.s32.totalorder %s70, %s71
    %p85 = scmp.eq.s32.totalorder %s16, 1
    %p86 = por %p84, %p85
    %p88 = scmp.ne.s32.totalorder %s71, %s87
    %p89 = scmp.eq.s32.totalorder %s16, 0
    %p90 = por %p88, %p89
    %s91 = ssub.s32 %s10, %s17
    %p92 = scmp.eq.s32.totalorder %s91, 0
    %s94 = sadd.s32 %s93, 1
    %s95 = scalar_select %p92, %s93, %s94
    %p98 = pneg %p92
    %p99 = scmp.eq.s32.totalorder %s10, 1
    %p100 = por %p98, %p99
    %p101 = scmp.ne.s32.totalorder %s93, %s96
    %p102 = scmp.eq.s32.totalorder %s10, 0
    %p103 = por %p101, %p102
    %p104 = scmp.ne.s32.totalorder %s93, %s96
    %p105 = scmp.eq.s32.totalorder %s15, 1
    %p106 = por %p104, %p105
    %p107 = scmp.ne.s32.totalorder %s96, %s97
    %p108 = scmp.eq.s32.totalorder %s15, 0
    %p109 = por %p107, %p108
    %p110 = scmp.ne.s32.totalorder %s96, %s97
    %p111 = scmp.eq.s32.totalorder %s16, 1
    %p112 = por %p110, %p111
    %p114 = scmp.ne.s32.totalorder %s97, %s113
    %p115 = scmp.eq.s32.totalorder %s16, 0
    %p116 = por %p114, %p115
    %p117 = scmp.le.s32.totalorder 1, %s10
    %p118 = scmp.lt.s32.totalorder %s10, 3
    %p119 = pnand %p117, %p118
    %p120 = pneg %p119
    // Predicated region
    $region9: #{generator_forward.4} parent=5 // pred_check
      _
    $region10: #{generator_forward.4} parent=5 // pred_check_branch
      %122 = sbr.rel (%p119) target = $region12
    $region11: #{generator_forward.4} parent=5 // pred_region
      %s123 = ssub.s32 %s10, 1
      // Predicated region
      $region13: #{generator_forward.4} parent=11 // pred_check
        %p124 = pneg %p57
      $region14: #{generator_forward.4} parent=11 // pred_check_branch
        %126 = sbr.rel (%p124) target = $region16
      $region15: #{generator_forward.4} parent=11 // pred_region
        _
      $region16: #{generator_forward.4} parent=11 // pred_fallthru
        _
    $region12: #{generator_forward.4} parent=5 // pred_fallthru
      _
    %p127 = scmp.lt.s32.totalorder %s10, 2
    // Predicated region
    $region17: #{generator_forward.4} parent=5 // pred_check
      %p128 = pneg %p127
    $region18: #{generator_forward.4} parent=5 // pred_check_branch
      %130 = sbr.rel (%p128) target = $region20
    $region19: #{generator_forward.4} parent=5 // pred_region
      // Predicated region
      $region21: #{generator_forward.4} parent=19 // pred_check
        %p131 = pneg %p30
      $region22: #{generator_forward.4} parent=19 // pred_check_branch
        %133 = sbr.rel (%p131) target = $region24
      $region23: #{generator_forward.4} parent=19 // pred_region
        %p134 = scmp.lt.s32.totalorder %s10, 1
        %s135 = scalar_select %p134, %s10, 1
        %s136 = smul.addr %s135, 8
        %s137 = smul.addr %s136, 4
        %s138 = scalar_lea.vmem %s0, %s137
      $region24: #{generator_forward.4} parent=19 // pred_fallthru
        _
    $region20: #{generator_forward.4} parent=5 // pred_fallthru
      _
    %p139 = scmp.le.s32.totalorder 1, %s10
    %p140 = scmp.lt.s32.totalorder %s10, 3
    %p141 = pnand %p139, %p140
    %p142 = pneg %p141
    // Predicated region
    $region25: #{generator_forward.4} parent=5 // pred_check
      _
    $region26: #{generator_forward.4} parent=5 // pred_check_branch
      %144 = sbr.rel (%p141) target = $region28
    $region27: #{generator_forward.4} parent=5 // pred_region
      %s145 = ssub.s32 %s10, 1
      %p146 = scmp.lt.s32.totalorder %s15, 1
      %s147 = scalar_select %p146, %s15, 1
      %s148 = smul.addr %s147, 8
      %s149 = smul.addr %s148, 4
      %s150 = scalar_lea.vmem %s0, %s149
      %p151 = pneg %p36
      %p152 = pneg %p33
      %p153 = pneg %p57
      %p154 = pneg %p54
      %p155 = pneg %p83
      %p156 = pneg %p80
      %p157 = scmp.lt.s32.totalorder %s15, 1
      %s158 = scalar_select %p157, %s15, 1
      %s159 = smul.addr %s158, 16
      %s160 = smul.addr %s159, 4
      %s161 = scalar_lea.vmem %s2, %s160
      %p162 = pneg %p109
      %p163 = pneg %p106
      %p164 = scmp.lt.s32.totalorder %s15, 1
      %s165 = scalar_select %p164, %s15, 1
      %s166 = smul.addr %s165, 2
      %s167 = scalar_lea.vmem %s3, %s166
      %p168 = scmp.lt.s32.totalorder %s15, 1
      %s169 = scalar_select %p168, %s15, 1
      %s170 = smul.addr %s169, 8
      %s171 = smul.addr %s170, 4
      %s172 = scalar_lea.vmem %s0, %s171
      %p173 = scmp.lt.s32.totalorder %s15, 1
      %s174 = scalar_select %p173, %s15, 1
      %s175 = smul.addr %s174, 16
      %s176 = smul.addr %s175, 4
      %s177 = scalar_lea.vmem %s2, %s176
      %p178 = scmp.lt.s32.totalorder %s15, 1
      %s179 = scalar_select %p178, %s15, 1
      %s180 = smul.addr %s179, 2
      %s181 = scalar_lea.vmem %s3, %s180
      %183 = vst [vmem:[#allocation2] sm:$0xff] 0.0
      %184 = vst [vmem:[#allocation2 + $0x8] sm:$0x3] 0.0
      %185 = vst [vmem:[#allocation2 + $0x10] sm:$0xff] 0.0
      %186 = vst [vmem:[#allocation2 + $0x18] sm:$0x3] 0.0
      %187 = vst [vmem:[#allocation2 + $0x20] sm:$0xff] 0.0
      %188 = vst [vmem:[#allocation2 + $0x28] sm:$0x3] 0.0
      %189 = vst [vmem:[#allocation2 + $0x30] sm:$0xff] 0.0
      %190 = vst [vmem:[#allocation2 + $0x38] sm:$0x3] 0.0
      %191 = vst [vmem:[#allocation2 + $0x40] sm:$0xff] 0.0
      %192 = vst [vmem:[#allocation2 + $0x48] sm:$0x3] 0.0
      %193 = vst [vmem:[#allocation2 + $0x50] sm:$0xff] 0.0
      %194 = vst [vmem:[#allocation2 + $0x58] sm:$0x3] 0.0
      %195 = vst [vmem:[#allocation2 + $0x60] sm:$0xff] 0.0
      %196 = vst [vmem:[#allocation2 + $0x68] sm:$0x3] 0.0
      %197 = vst [vmem:[#allocation2 + $0x70] sm:$0xff] 0.0
      %198 = vst [vmem:[#allocation2 + $0x78] sm:$0x3] 0.0
      %199 = vst [vmem:[#allocation2 + $0x80] sm:$0xff] 0.0
      %200 = vst [vmem:[#allocation2 + $0x88] sm:$0x3] 0.0
      %201 = vst [vmem:[#allocation2 + $0x90] sm:$0xff] 0.0
      %202 = vst [vmem:[#allocation2 + $0x98] sm:$0x3] 0.0
      %v203 = vld [vmem:[%s172] sm:$0xf]
      %v204 = vld [vmem:[%s172 + $0x4] sm:$0xf]
      %v205 = vld [vmem:[%s172 + $0x8] sm:$0xf]
      %v206 = vld [vmem:[%s172 + $0xc] sm:$0xf]
      %v207 = vld [vmem:[%s172 + $0x10] sm:$0xf]
      %v208 = vld [vmem:[%s172 + $0x14] sm:$0xf]
      %v209 = vld [vmem:[%s172 + $0x18] sm:$0xf]
      %v210 = vld [vmem:[%s172 + $0x1c] sm:$0xf]
      %v211 = vunpack.c.l.bf16 %v203
      %v212 = vunpack.c.l.bf16 %v204
      %v213 = vunpack.c.l.bf16 %v205
      %v214 = vunpack.c.l.bf16 %v206
      %v215 = vunpack.c.l.bf16 %v207
      %v216 = vunpack.c.l.bf16 %v208
      %v217 = vunpack.c.l.bf16 %v209
      %v218 = vunpack.c.l.bf16 %v210
      %s219 = scalar_lea.vmem [#allocation2], 16
      %220 = vst [vmem:[%s219 + $0x1] sm:$0xff] %v211
      %221 = vst [vmem:[%s219 + $0x11] sm:$0xff] %v212
      %222 = vst [vmem:[%s219 + $0x21] sm:$0xff] %v213
      %223 = vst [vmem:[%s219 + $0x31] sm:$0xff] %v214
      %224 = vst [vmem:[%s219 + $0x41] sm:$0xff] %v215
      %225 = vst [vmem:[%s219 + $0x51] sm:$0xff] %v216
      %226 = vst [vmem:[%s219 + $0x61] sm:$0xff] %v217
      %227 = vst [vmem:[%s219 + $0x71] sm:$0xff] %v218
      %v228 = vld [vmem:[#allocation2] sm:$0xff]
      %v229 = vld [vmem:[#allocation2 + $0x10] sm:$0xff]
      %v230 = vld [vmem:[#allocation2 + $0x20] sm:$0xff]
      %v231 = vld [vmem:[#allocation2 + $0x30] sm:$0xff]
      %v232 = vld [vmem:[#allocation2 + $0x40] sm:$0xff]
      %v233 = vld [vmem:[#allocation2 + $0x50] sm:$0xff]
      %v234 = vld [vmem:[#allocation2 + $0x60] sm:$0xff]
      %v235 = vld [vmem:[#allocation2 + $0x70] sm:$0xff]
      %v236 = vpack.c.bf16 %v229, %v228
      %v237 = vpack.c.bf16 %v231, %v230
      %v238 = vpack.c.bf16 %v233, %v232
      %v239 = vpack.c.bf16 %v235, %v234
      %v240 = vld [vmem:[#allocation2 + $0x1] sm:$0xff]
      %v241 = vld [vmem:[#allocation2 + $0x11] sm:$0xff]
      %v242 = vld [vmem:[#allocation2 + $0x21] sm:$0xff]
      %v243 = vld [vmem:[#allocation2 + $0x31] sm:$0xff]
      %v244 = vld [vmem:[#allocation2 + $0x41] sm:$0xff]
      %v245 = vld [vmem:[#allocation2 + $0x51] sm:$0xff]
      %v246 = vld [vmem:[#allocation2 + $0x61] sm:$0xff]
      %v247 = vld [vmem:[#allocation2 + $0x71] sm:$0xff]
      %v248 = vpack.c.bf16 %v241, %v240
      %v249 = vpack.c.bf16 %v243, %v242
      %v250 = vpack.c.bf16 %v245, %v244
      %v251 = vpack.c.bf16 %v247, %v246
      %v252 = vld [vmem:[#allocation2 + $0x2] sm:$0xff]
      %v253 = vld [vmem:[#allocation2 + $0x12] sm:$0xff]
      %v254 = vld [vmem:[#allocation2 + $0x22] sm:$0xff]
      %v255 = vld [vmem:[#allocation2 + $0x32] sm:$0xff]
      %v256 = vld [vmem:[#allocation2 + $0x42] sm:$0xff]
      %v257 = vld [vmem:[#allocation2 + $0x52] sm:$0xff]
      %v258 = vld [vmem:[#allocation2 + $0x62] sm:$0xff]
      %v259 = vld [vmem:[#allocation2 + $0x72] sm:$0xff]
      %v260 = vpack.c.bf16 %v253, %v252
      %v261 = vpack.c.bf16 %v255, %v254
      %v262 = vpack.c.bf16 %v257, %v256
      %v263 = vpack.c.bf16 %v259, %v258
      %v264 = vld [vmem:[%s219] sm:$0xff]
      %v265 = vld [vmem:[%s219 + $0x10] sm:$0xff]
      %v266 = vld [vmem:[%s219 + $0x20] sm:$0xff]
      %v267 = vld [vmem:[%s219 + $0x30] sm:$0xff]
      %v268 = vld [vmem:[%s219 + $0x40] sm:$0xff]
      %v269 = vld [vmem:[%s219 + $0x50] sm:$0xff]
      %v270 = vld [vmem:[%s219 + $0x60] sm:$0xff]
      %v271 = vld [vmem:[%s219 + $0x70] sm:$0xff]
      %v272 = vpack.c.bf16 %v265, %v264
      %v273 = vpack.c.bf16 %v267, %v266
      %v274 = vpack.c.bf16 %v269, %v268
      %v275 = vpack.c.bf16 %v271, %v270
      %v276 = vld [vmem:[%s219 + $0x1] sm:$0xff]
      %v277 = vld [vmem:[%s219 + $0x11] sm:$0xff]
      %v278 = vld [vmem:[%s219 + $0x21] sm:$0xff]
      %v279 = vld [vmem:[%s219 + $0x31] sm:$0xff]
      %v280 = vld [vmem:[%s219 + $0x41] sm:$0xff]
      %v281 = vld [vmem:[%s219 + $0x51] sm:$0xff]
      %v282 = vld [vmem:[%s219 + $0x61] sm:$0xff]
      %v283 = vld [vmem:[%s219 + $0x71] sm:$0xff]
      %v284 = vpack.c.bf16 %v277, %v276
      %v285 = vpack.c.bf16 %v279, %v278
      %v286 = vpack.c.bf16 %v281, %v280
      %v287 = vpack.c.bf16 %v283, %v282
      %v288 = vld [vmem:[%s219 + $0x2] sm:$0xff]
      %v289 = vld [vmem:[%s219 + $0x12] sm:$0xff]
      %v290 = vld [vmem:[%s219 + $0x22] sm:$0xff]
      %v291 = vld [vmem:[%s219 + $0x32] sm:$0xff]
      %v292 = vld [vmem:[%s219 + $0x42] sm:$0xff]
      %v293 = vld [vmem:[%s219 + $0x52] sm:$0xff]
      %v294 = vld [vmem:[%s219 + $0x62] sm:$0xff]
      %v295 = vld [vmem:[%s219 + $0x72] sm:$0xff]
      %v296 = vpack.c.bf16 %v289, %v288
      %v297 = vpack.c.bf16 %v291, %v290
      %v298 = vpack.c.bf16 %v293, %v292
      %v299 = vpack.c.bf16 %v295, %v294
      %s300 = scalar_lea.vmem [#allocation2], 32
      %v301 = vld [vmem:[%s300] sm:$0xff]
      %v302 = vld [vmem:[%s300 + $0x10] sm:$0xff]
      %v303 = vld [vmem:[%s300 + $0x20] sm:$0xff]
      %v304 = vld [vmem:[%s300 + $0x30] sm:$0xff]
      %v305 = vld [vmem:[%s300 + $0x40] sm:$0xff]
      %v306 = vld [vmem:[%s300 + $0x50] sm:$0xff]
      %v307 = vld [vmem:[%s300 + $0x60] sm:$0xff]
      %v308 = vld [vmem:[%s300 + $0x70] sm:$0xff]
      %v309 = vpack.c.bf16 %v302, %v301
      %v310 = vpack.c.bf16 %v304, %v303
      %v311 = vpack.c.bf16 %v306, %v305
      %v312 = vpack.c.bf16 %v308, %v307
      %v313 = vld [vmem:[%s300 + $0x1] sm:$0xff]
      %v314 = vld [vmem:[%s300 + $0x11] sm:$0xff]
      %v315 = vld [vmem:[%s300 + $0x21] sm:$0xff]
      %v316 = vld [vmem:[%s300 + $0x31] sm:$0xff]
      %v317 = vld [vmem:[%s300 + $0x41] sm:$0xff]
      %v318 = vld [vmem:[%s300 + $0x51] sm:$0xff]
      %v319 = vld [vmem:[%s300 + $0x61] sm:$0xff]
      %v320 = vld [vmem:[%s300 + $0x71] sm:$0xff]
      %v321 = vpack.c.bf16 %v314, %v313
      %v322 = vpack.c.bf16 %v316, %v315
      %v323 = vpack.c.bf16 %v318, %v317
      %v324 = vpack.c.bf16 %v320, %v319
      %v325 = vld [vmem:[%s300 + $0x2] sm:$0xff]
      %v326 = vld [vmem:[%s300 + $0x12] sm:$0xff]
      %v327 = vld [vmem:[%s300 + $0x22] sm:$0xff]
      %v328 = vld [vmem:[%s300 + $0x32] sm:$0xff]
      %v329 = vld [vmem:[%s300 + $0x42] sm:$0xff]
      %v330 = vld [vmem:[%s300 + $0x52] sm:$0xff]
      %v331 = vld [vmem:[%s300 + $0x62] sm:$0xff]
      %v332 = vld [vmem:[%s300 + $0x72] sm:$0xff]
      %v333 = vpack.c.bf16 %v326, %v325
      %v334 = vpack.c.bf16 %v328, %v327
      %v335 = vpack.c.bf16 %v330, %v329
      %v336 = vpack.c.bf16 %v332, %v331
      %v337 = vld [vmem:[%s1] sm:$0xf]
      %v338 = vld [vmem:[%s1 + $0x4] sm:$0xf]
      %v339 = vld [vmem:[%s1 + $0x8] sm:$0xf]
      %v340 = vld [vmem:[%s1 + $0xc] sm:$0xf]
      %v341 = vld [vmem:[%s1 + $0x10] sm:$0xf]
      %v342 = vld [vmem:[%s1 + $0x14] sm:$0xf]
      %v343 = vld [vmem:[%s1 + $0x18] sm:$0xf]
      %v344 = vld [vmem:[%s1 + $0x1c] sm:$0xf]
      %v345 = vld [vmem:[%s1 + $0x20] sm:$0xf]
      %v346 = vld [vmem:[%s1 + $0x24] sm:$0xf]
      %v347 = vld [vmem:[%s1 + $0x28] sm:$0xf]
      %v348 = vld [vmem:[%s1 + $0x2c] sm:$0xf]
      %v349 = vld [vmem:[%s1 + $0x30] sm:$0xf]
      %v350 = vld [vmem:[%s1 + $0x34] sm:$0xf]
      %v351 = vld [vmem:[%s1 + $0x38] sm:$0xf]
      %v352 = vld [vmem:[%s1 + $0x3c] sm:$0xf]
      %v353 = vld [vmem:[%s1 + $0x40] sm:$0xf]
      %v354 = vld [vmem:[%s1 + $0x44] sm:$0xf]
      %v355 = vld [vmem:[%s1 + $0x48] sm:$0xf]
      %v356 = vld [vmem:[%s1 + $0x4c] sm:$0xf]
      %v357 = vld [vmem:[%s1 + $0x50] sm:$0xf]
      %v358 = vld [vmem:[%s1 + $0x54] sm:$0xf]
      %v359 = vld [vmem:[%s1 + $0x58] sm:$0xf]
      %v360 = vld [vmem:[%s1 + $0x5c] sm:$0xf]
      %v361 = vld [vmem:[%s1 + $0x60] sm:$0xf]
      %v362 = vld [vmem:[%s1 + $0x64] sm:$0xf]
      %v363 = vld [vmem:[%s1 + $0x68] sm:$0xf]
      %v364 = vld [vmem:[%s1 + $0x6c] sm:$0xf]
      %v365 = vld [vmem:[%s1 + $0x70] sm:$0xf]
      %v366 = vld [vmem:[%s1 + $0x74] sm:$0xf]
      %v367 = vld [vmem:[%s1 + $0x78] sm:$0xf]
      %v368 = vld [vmem:[%s1 + $0x7c] sm:$0xf]
      %v369 = vld [vmem:[%s1 + $0x80] sm:$0xf]
      %v370 = vld [vmem:[%s1 + $0x84] sm:$0xf]
      %v371 = vld [vmem:[%s1 + $0x88] sm:$0xf]
      %v372 = vld [vmem:[%s1 + $0x8c] sm:$0xf]
      %v373 = vld [vmem:[%s1 + $0x90] sm:$0xf]
      %v374 = vld [vmem:[%s1 + $0x94] sm:$0xf]
      %v375 = vld [vmem:[%s1 + $0x98] sm:$0xf]
      %v376 = vld [vmem:[%s1 + $0x9c] sm:$0xf]
      %v377 = vld [vmem:[%s1 + $0xa0] sm:$0xf]
      %v378 = vld [vmem:[%s1 + $0xa4] sm:$0xf]
      %v379 = vld [vmem:[%s1 + $0xa8] sm:$0xf]
      %v380 = vld [vmem:[%s1 + $0xac] sm:$0xf]
      %v381 = vld [vmem:[%s1 + $0xb0] sm:$0xf]
      %v382 = vld [vmem:[%s1 + $0xb4] sm:$0xf]
      %v383 = vld [vmem:[%s1 + $0xb8] sm:$0xf]
      %v384 = vld [vmem:[%s1 + $0xbc] sm:$0xf]
      %v385 = vld [vmem:[%s1 + $0xc0] sm:$0xf]
      %v386 = vld [vmem:[%s1 + $0xc4] sm:$0xf]
      %v387 = vld [vmem:[%s1 + $0xc8] sm:$0xf]
      %v388 = vld [vmem:[%s1 + $0xcc] sm:$0xf]
      %v389 = vld [vmem:[%s1 + $0xd0] sm:$0xf]
      %v390 = vld [vmem:[%s1 + $0xd4] sm:$0xf]
      %v391 = vld [vmem:[%s1 + $0xd8] sm:$0xf]
      %v392 = vld [vmem:[%s1 + $0xdc] sm:$0xf]
      %v393 = vld [vmem:[%s1 + $0xe0] sm:$0xf]
      %v394 = vld [vmem:[%s1 + $0xe4] sm:$0xf]
      %v395 = vld [vmem:[%s1 + $0xe8] sm:$0xf]
      %v396 = vld [vmem:[%s1 + $0xec] sm:$0xf]
      %v397 = vld [vmem:[%s1 + $0xf0] sm:$0xf]
      %v398 = vld [vmem:[%s1 + $0xf4] sm:$0xf]
      %v399 = vld [vmem:[%s1 + $0xf8] sm:$0xf]
      %v400 = vld [vmem:[%s1 + $0xfc] sm:$0xf]
      %v465 = vunpack.c.l.b16 %v337
      %v466 = vunpack.c.l.b16 %v338
      %v467 = vunpack.c.l.b16 %v339
      %v468 = vunpack.c.l.b16 %v340
      %v469 = vunpack.c.l.b16 %v341
      %v470 = vunpack.c.l.b16 %v342
      %v471 = vunpack.c.l.b16 %v343
      %v472 = vunpack.c.l.b16 %v344
      %v473 = vunpack.c.l.b16 %v345
      %v474 = vunpack.c.l.b16 %v346
      %v475 = vunpack.c.l.b16 %v347
      %v476 = vunpack.c.l.b16 %v348
      %v477 = vunpack.c.l.b16 %v349
      %v478 = vunpack.c.l.b16 %v350
      %v479 = vunpack.c.l.b16 %v351
      %v480 = vunpack.c.l.b16 %v352
      %v481 = vunpack.c.l.b16 %v353
      %v482 = vunpack.c.l.b16 %v354
      %v483 = vunpack.c.l.b16 %v355
      %v484 = vunpack.c.l.b16 %v356
      %v485 = vunpack.c.l.b16 %v357
      %v486 = vunpack.c.l.b16 %v358
      %v487 = vunpack.c.l.b16 %v359
      %v488 = vunpack.c.l.b16 %v360
      %v489 = vunpack.c.l.b16 %v361
      %v490 = vunpack.c.l.b16 %v362
      %v491 = vunpack.c.l.b16 %v363
      %v492 = vunpack.c.l.b16 %v364
      %v493 = vunpack.c.l.b16 %v365
      %v494 = vunpack.c.l.b16 %v366
      %v495 = vunpack.c.l.b16 %v367
      %v496 = vunpack.c.l.b16 %v368
      %v497 = vunpack.c.l.b16 %v369
      %v498 = vunpack.c.l.b16 %v370
      %v499 = vunpack.c.l.b16 %v371
      %v500 = vunpack.c.l.b16 %v372
      %v501 = vunpack.c.l.b16 %v373
      %v502 = vunpack.c.l.b16 %v374
      %v503 = vunpack.c.l.b16 %v375
      %v504 = vunpack.c.l.b16 %v376
      %v505 = vunpack.c.l.b16 %v377
      %v506 = vunpack.c.l.b16 %v378
      %v507 = vunpack.c.l.b16 %v379
      %v508 = vunpack.c.l.b16 %v380
      %v509 = vunpack.c.l.b16 %v381
      %v510 = vunpack.c.l.b16 %v382
      %v511 = vunpack.c.l.b16 %v383
      %v512 = vunpack.c.l.b16 %v384
      %v513 = vunpack.c.l.b16 %v385
      %v514 = vunpack.c.l.b16 %v386
      %v515 = vunpack.c.l.b16 %v387
      %v516 = vunpack.c.l.b16 %v388
      %v517 = vunpack.c.l.b16 %v389
      %v518 = vunpack.c.l.b16 %v390
      %v519 = vunpack.c.l.b16 %v391
      %v520 = vunpack.c.l.b16 %v392
      %v521 = vunpack.c.l.b16 %v393
      %v522 = vunpack.c.l.b16 %v394
      %v523 = vunpack.c.l.b16 %v395
      %v524 = vunpack.c.l.b16 %v396
      %v525 = vunpack.c.l.b16 %v397
      %v526 = vunpack.c.l.b16 %v398
      %v527 = vunpack.c.l.b16 %v399
      %v528 = vunpack.c.l.b16 %v400
      %v529 = vpack.c.b16 %v466, %v465
      %v530 = vpack.c.b16 %v468, %v467
      %v531 = vpack.c.b16 %v470, %v469
      %v532 = vpack.c.b16 %v472, %v471
      %v533 = vpack.c.b16 %v474, %v473
      %v534 = vpack.c.b16 %v476, %v475
      %v535 = vpack.c.b16 %v478, %v477
      %v536 = vpack.c.b16 %v480, %v479
      %v537 = vpack.c.b16 %v482, %v481
      %v538 = vpack.c.b16 %v484, %v483
      %v539 = vpack.c.b16 %v486, %v485
      %v540 = vpack.c.b16 %v488, %v487
      %v541 = vpack.c.b16 %v490, %v489
      %v542 = vpack.c.b16 %v492, %v491
      %v543 = vpack.c.b16 %v494, %v493
      %v544 = vpack.c.b16 %v496, %v495
      %v545 = vpack.c.b16 %v498, %v497
      %v546 = vpack.c.b16 %v500, %v499
      %v547 = vpack.c.b16 %v502, %v501
      %v548 = vpack.c.b16 %v504, %v503
      %v549 = vpack.c.b16 %v506, %v505
      %v550 = vpack.c.b16 %v508, %v507
      %v551 = vpack.c.b16 %v510, %v509
      %v552 = vpack.c.b16 %v512, %v511
      %v553 = vpack.c.b16 %v514, %v513
      %v554 = vpack.c.b16 %v516, %v515
      %v555 = vpack.c.b16 %v518, %v517
      %v556 = vpack.c.b16 %v520, %v519
      %v557 = vpack.c.b16 %v522, %v521
      %v558 = vpack.c.b16 %v524, %v523
      %v559 = vpack.c.b16 %v526, %v525
      %v560 = vpack.c.b16 %v528, %v527
      %593 = vmatprep.subr.bf16.mxu0 0
      %594 = vmatpush1.bf16.msra.mxu0 %v529
      %595 = vmatprep.subr.bf16.mxu0 0
      %596 = vmatpush1.bf16.msra.mxu0 %v530
      %597 = vmatprep.subr.bf16.mxu0 0
      %598 = vmatpush1.bf16.msra.mxu0 %v531
      %599 = vmatprep.subr.bf16.mxu0 0
      %600 = vmatpush1.bf16.msra.mxu0 %v532
      %601 = vmatprep.subr.bf16.mxu0 0
      %602 = vmatpush1.bf16.msra.mxu0 %v533
      %603 = vmatprep.subr.bf16.mxu0 0
      %604 = vmatpush1.bf16.msra.mxu0 %v534
      %605 = vmatprep.subr.bf16.mxu0 0
      %606 = vmatpush1.bf16.msra.mxu0 %v535
      %607 = vmatprep.subr.bf16.mxu0 0
      %608 = vmatpush1.bf16.msra.mxu0 %v536
      %609 = vmatprep.subr.bf16.mxu0 0
      %610 = vmatpush1.bf16.msra.mxu0 %v537
      %611 = vmatprep.subr.bf16.mxu0 0
      %612 = vmatpush1.bf16.msra.mxu0 %v538
      %613 = vmatprep.subr.bf16.mxu0 0
      %614 = vmatpush1.bf16.msra.mxu0 %v539
      %615 = vmatprep.subr.bf16.mxu0 0
      %616 = vmatpush1.bf16.msra.mxu0 %v540
      %617 = vmatprep.subr.bf16.mxu0 0
      %618 = vmatpush1.bf16.msra.mxu0 %v541
      %619 = vmatprep.subr.bf16.mxu0 0
      %620 = vmatpush1.bf16.msra.mxu0 %v542
      %621 = vmatprep.subr.bf16.mxu0 0
      %622 = vmatpush1.bf16.msra.mxu0 %v543
      %623 = vmatprep.subr.bf16.mxu0 0
      %624 = vmatpush1.bf16.msra.mxu0 %v544
      %625 = vmatprep.mubr.bf16.mxu0 %v248
      %626 = vmatmul.mubr.bf16.gmra.mrb[0].mxu0 %v236
      %v627 = vpop.f32.mrb[0].mxu0
      %v628 = vadd.f32 0.0, %v627
      %v629 = vpop.f32.mrb[0].mxu0
      %v630 = vpop.f32.mrb[0].mxu0
      %v631 = vadd.f32 0.0, %v630
      %v632 = vpop.f32.mrb[0].mxu0
      %633 = vmatprep.mubr.bf16.mxu0 %v249
      %634 = vmatmul.mubr.bf16.gmra.mrb[0].mxu0 %v237
      %v635 = vpop.f32.mrb[0].mxu0
      %v636 = vadd.f32 0.0, %v635
      %v637 = vpop.f32.mrb[0].mxu0
      %v638 = vpop.f32.mrb[0].mxu0
      %v639 = vadd.f32 0.0, %v638
      %v640 = vpop.f32.mrb[0].mxu0
      %641 = vmatprep.mubr.bf16.mxu0 %v250
      %642 = vmatmul.mubr.bf16.gmra.mrb[0].mxu0 %v238
      %v643 = vpop.f32.mrb[0].mxu0
      %v644 = vadd.f32 0.0, %v643
      %v645 = vpop.f32.mrb[0].mxu0
      %v646 = vpop.f32.mrb[0].mxu0
      %v647 = vadd.f32 0.0, %v646
      %v648 = vpop.f32.mrb[0].mxu0
      %649 = vmatprep.mubr.bf16.mxu0 %v251
      %650 = vmatmul.mubr.bf16.gmra.mrb[0].mxu0 %v239
      %v651 = vpop.f32.mrb[0].mxu0
      %v652 = vadd.f32 0.0, %v651
      %v653 = vpop.f32.mrb[0].mxu0
      %v654 = vpop.f32.mrb[0].mxu0
      %v655 = vadd.f32 0.0, %v654
      %v656 = vpop.f32.mrb[0].mxu0
      %657 = vdwg.mxu0
      %658 = vmatprep.subr.bf16.mxu0 0
      %659 = vmatpush1.bf16.msra.mxu0 %v545
      %660 = vmatprep.subr.bf16.mxu0 0
      %661 = vmatpush1.bf16.msra.mxu0 %v546
      %662 = vmatprep.subr.bf16.mxu0 0
      %663 = vmatpush1.bf16.msra.mxu0 %v547
      %664 = vmatprep.subr.bf16.mxu0 0
      %665 = vmatpush1.bf16.msra.mxu0 %v548
      %666 = vmatprep.subr.bf16.mxu0 0
      %667 = vmatpush1.bf16.msra.mxu0 %v549
      %668 = vmatprep.subr.bf16.mxu0 0
      %669 = vmatpush1.bf16.msra.mxu0 %v550
      %670 = vmatprep.subr.bf16.mxu0 0
      %671 = vmatpush1.bf16.msra.mxu0 %v551
      %672 = vmatprep.subr.bf16.mxu0 0
      %673 = vmatpush1.bf16.msra.mxu0 %v552
      %674 = vmatprep.subr.bf16.mxu0 0
      %675 = vmatpush1.bf16.msra.mxu0 %v553
      %676 = vmatprep.subr.bf16.mxu0 0
      %677 = vmatpush1.bf16.msra.mxu0 %v554
      %678 = vmatprep.subr.bf16.mxu0 0
      %679 = vmatpush1.bf16.msra.mxu0 %v555
      %680 = vmatprep.subr.bf16.mxu0 0
      %681 = vmatpush1.bf16.msra.mxu0 %v556
      %682 = vmatprep.subr.bf16.mxu0 0
      %683 = vmatpush1.bf16.msra.mxu0 %v557
      %684 = vmatprep.subr.bf16.mxu0 0
      %685 = vmatpush1.bf16.msra.mxu0 %v558
      %686 = vmatprep.subr.bf16.mxu0 0
      %687 = vmatpush1.bf16.msra.mxu0 %v559
      %688 = vmatprep.subr.bf16.mxu0 0
      %689 = vmatpush1.bf16.msra.mxu0 %v560
      %690 = vmatprep.mubr.bf16.mxu0 %v284
      %691 = vmatmul.mubr.bf16.gmra.mrb[0].mxu0 %v272
      %v692 = vpop.f32.mrb[0].mxu0
      %v693 = vadd.f32 %v628, %v692
      %v694 = vpop.f32.mrb[0].mxu0
      %v695 = vpop.f32.mrb[0].mxu0
      %v696 = vadd.f32 %v631, %v695
      %v697 = vpop.f32.mrb[0].mxu0
      %698 = vmatprep.mubr.bf16.mxu0 %v285
      %699 = vmatmul.mubr.bf16.gmra.mrb[0].mxu0 %v273
      %v700 = vpop.f32.mrb[0].mxu0
      %v701 = vadd.f32 %v636, %v700
      %v702 = vpop.f32.mrb[0].mxu0
      %v703 = vpop.f32.mrb[0].mxu0
      %v704 = vadd.f32 %v639, %v703
      %v705 = vpop.f32.mrb[0].mxu0
      %706 = vmatprep.mubr.bf16.mxu0 %v286
      %707 = vmatmul.mubr.bf16.gmra.mrb[0].mxu0 %v274
      %v708 = vpop.f32.mrb[0].mxu0
      %v709 = vadd.f32 %v644, %v708
      %v710 = vpop.f32.mrb[0].mxu0
      %v711 = vpop.f32.mrb[0].mxu0
      %v712 = vadd.f32 %v647, %v711
      %v713 = vpop.f32.mrb[0].mxu0
      %714 = vmatprep.mubr.bf16.mxu0 %v287
      %715 = vmatmul.mubr.bf16.gmra.mrb[0].mxu0 %v275
      %v716 = vpop.f32.mrb[0].mxu0
      %v717 = vadd.f32 %v652, %v716
      %v718 = vpop.f32.mrb[0].mxu0
      %v719 = vpop.f32.mrb[0].mxu0
      %v720 = vadd.f32 %v655, %v719
      %v721 = vpop.f32.mrb[0].mxu0
      %722 = vdwg.mxu0
      %vm723 = vcmask 523264
      %v724 = vsel %vm723, %v693, 0.0
      %v725 = vsel %vm723, %v696, 0.0
      %v726 = vadd.f32 %v724, %v725
      %v727 = vsel %vm723, %v701, 0.0
      %v728 = vadd.f32 %v726, %v727
      %v729 = vsel %vm723, %v704, 0.0
      %v730 = vadd.f32 %v728, %v729
      %v731 = vsel %vm723, %v709, 0.0
      %v732 = vadd.f32 %v730, %v731
      %v733 = vsel %vm723, %v712, 0.0
      %v734 = vadd.f32 %v732, %v733
      %v735 = vsel %vm723, %v717, 0.0
      %v736 = vadd.f32 %v734, %v735
      %v737 = vsel %vm723, %v720, 0.0
      %v738 = vadd.f32 %v736, %v737
      %v739 = vrot.slane %v738, 4
      %v740 = vadd.f32 %v738, %v739
      %v741 = vrot.slane %v740, 2
      %v742 = vadd.f32 %v740, %v741
      %v743 = vrot.slane %v742, 1
      %v744 = vadd.f32 %v742, %v743
      %v745 = vadd.f32 %v744, 0.0
      %v746 = vmul.f32 %v693, %v693
      %v747 = vmul.f32 %v696, %v696
      %v748 = vmul.f32 %v701, %v701
      %v749 = vmul.f32 %v704, %v704
      %v750 = vmul.f32 %v709, %v709
      %v751 = vmul.f32 %v712, %v712
      %v752 = vmul.f32 %v717, %v717
      %v753 = vmul.f32 %v720, %v720
      %v754 = vsel %vm723, %v746, 0.0
      %v755 = vsel %vm723, %v747, 0.0
      %v756 = vadd.f32 %v754, %v755
      %v757 = vsel %vm723, %v748, 0.0
      %v758 = vadd.f32 %v756, %v757
      %v759 = vsel %vm723, %v749, 0.0
      %v760 = vadd.f32 %v758, %v759
      %v761 = vsel %vm723, %v750, 0.0
      %v762 = vadd.f32 %v760, %v761
      %v763 = vsel %vm723, %v751, 0.0
      %v764 = vadd.f32 %v762, %v763
      %v765 = vsel %vm723, %v752, 0.0
      %v766 = vadd.f32 %v764, %v765
      %v767 = vsel %vm723, %v753, 0.0
      %v768 = vadd.f32 %v766, %v767
      %v769 = vrot.slane %v768, 4
      %v770 = vadd.f32 %v768, %v769
      %v771 = vrot.slane %v770, 2
      %v772 = vadd.f32 %v770, %v771
      %v773 = vrot.slane %v772, 1
      %v774 = vadd.f32 %v772, %v773
      %v775 = vadd.f32 %v774, 0.0
      %s776 = scalar_lea.vmem %s1, 256
      %v777 = vld [vmem:[%s776] sm:$0xf]
      %v778 = vld [vmem:[%s776 + $0x4] sm:$0xf]
      %v779 = vld [vmem:[%s776 + $0x8] sm:$0xf]
      %v780 = vld [vmem:[%s776 + $0xc] sm:$0xf]
      %v781 = vld [vmem:[%s776 + $0x10] sm:$0xf]
      %v782 = vld [vmem:[%s776 + $0x14] sm:$0xf]
      %v783 = vld [vmem:[%s776 + $0x18] sm:$0xf]
      %v784 = vld [vmem:[%s776 + $0x1c] sm:$0xf]
      %v785 = vld [vmem:[%s776 + $0x20] sm:$0xf]
      %v786 = vld [vmem:[%s776 + $0x24] sm:$0xf]
      %v787 = vld [vmem:[%s776 + $0x28] sm:$0xf]
      %v788 = vld [vmem:[%s776 + $0x2c] sm:$0xf]
      %v789 = vld [vmem:[%s776 + $0x30] sm:$0xf]
      %v790 = vld [vmem:[%s776 + $0x34] sm:$0xf]
      %v791 = vld [vmem:[%s776 + $0x38] sm:$0xf]
      %v792 = vld [vmem:[%s776 + $0x3c] sm:$0xf]
      %v793 = vld [vmem:[%s776 + $0x40] sm:$0xf]
      %v794 = vld [vmem:[%s776 + $0x44] sm:$0xf]
      %v795 = vld [vmem:[%s776 + $0x48] sm:$0xf]
      %v796 = vld [vmem:[%s776 + $0x4c] sm:$0xf]
      %v797 = vld [vmem:[%s776 + $0x50] sm:$0xf]
      %v798 = vld [vmem:[%s776 + $0x54] sm:$0xf]
      %v799 = vld [vmem:[%s776 + $0x58] sm:$0xf]
      %v800 = vld [vmem:[%s776 + $0x5c] sm:$0xf]
      %v801 = vld [vmem:[%s776 + $0x60] sm:$0xf]
      %v802 = vld [vmem:[%s776 + $0x64] sm:$0xf]
      %v803 = vld [vmem:[%s776 + $0x68] sm:$0xf]
      %v804 = vld [vmem:[%s776 + $0x6c] sm:$0xf]
      %v805 = vld [vmem:[%s776 + $0x70] sm:$0xf]
      %v806 = vld [vmem:[%s776 + $0x74] sm:$0xf]
      %v807 = vld [vmem:[%s776 + $0x78] sm:$0xf]
      %v808 = vld [vmem:[%s776 + $0x7c] sm:$0xf]
      %v809 = vld [vmem:[%s776 + $0x80] sm:$0xf]
      %v810 = vld [vmem:[%s776 + $0x84] sm:$0xf]
      %v811 = vld [vmem:[%s776 + $0x88] sm:$0xf]
      %v812 = vld [vmem:[%s776 + $0x8c] sm:$0xf]
      %v813 = vld [vmem:[%s776 + $0x90] sm:$0xf]
      %v814 = vld [vmem:[%s776 + $0x94] sm:$0xf]
      %v815 = vld [vmem:[%s776 + $0x98] sm:$0xf]
      %v816 = vld [vmem:[%s776 + $0x9c] sm:$0xf]
      %v817 = vld [vmem:[%s776 + $0xa0] sm:$0xf]
      %v818 = vld [vmem:[%s776 + $0xa4] sm:$0xf]
      %v819 = vld [vmem:[%s776 + $0xa8] sm:$0xf]
      %v820 = vld [vmem:[%s776 + $0xac] sm:$0xf]
      %v821 = vld [vmem:[%s776 + $0xb0] sm:$0xf]
      %v822 = vld [vmem:[%s776 + $0xb4] sm:$0xf]
      %v823 = vld [vmem:[%s776 + $0xb8] sm:$0xf]
      %v824 = vld [vmem:[%s776 + $0xbc] sm:$0xf]
      %v825 = vld [vmem:[%s776 + $0xc0] sm:$0xf]
      %v826 = vld [vmem:[%s776 + $0xc4] sm:$0xf]
      %v827 = vld [vmem:[%s776 + $0xc8] sm:$0xf]
      %v828 = vld [vmem:[%s776 + $0xcc] sm:$0xf]
      %v829 = vld [vmem:[%s776 + $0xd0] sm:$0xf]
      %v830 = vld [vmem:[%s776 + $0xd4] sm:$0xf]
      %v831 = vld [vmem:[%s776 + $0xd8] sm:$0xf]
      %v832 = vld [vmem:[%s776 + $0xdc] sm:$0xf]
      %v833 = vld [vmem:[%s776 + $0xe0] sm:$0xf]
      %v834 = vld [vmem:[%s776 + $0xe4] sm:$0xf]
      %v835 = vld [vmem:[%s776 + $0xe8] sm:$0xf]
      %v836 = vld [vmem:[%s776 + $0xec] sm:$0xf]
      %v837 = vld [vmem:[%s776 + $0xf0] sm:$0xf]
      %v838 = vld [vmem:[%s776 + $0xf4] sm:$0xf]
      %v839 = vld [vmem:[%s776 + $0xf8] sm:$0xf]
      %v840 = vld [vmem:[%s776 + $0xfc] sm:$0xf]
      %v905 = vunpack.c.l.b16 %v777
      %v906 = vunpack.c.l.b16 %v778
      %v907 = vunpack.c.l.b16 %v779
      %v908 = vunpack.c.l.b16 %v780
      %v909 = vunpack.c.l.b16 %v781
      %v910 = vunpack.c.l.b16 %v782
      %v911 = vunpack.c.l.b16 %v783
      %v912 = vunpack.c.l.b16 %v784
      %v913 = vunpack.c.l.b16 %v785
      %v914 = vunpack.c.l.b16 %v786
      %v915 = vunpack.c.l.b16 %v787
      %v916 = vunpack.c.l.b16 %v788
      %v917 = vunpack.c.l.b16 %v789
      %v918 = vunpack.c.l.b16 %v790
      %v919 = vunpack.c.l.b16 %v791
      %v920 = vunpack.c.l.b16 %v792
      %v921 = vunpack.c.l.b16 %v793
      %v922 = vunpack.c.l.b16 %v794
      %v923 = vunpack.c.l.b16 %v795
      %v924 = vunpack.c.l.b16 %v796
      %v925 = vunpack.c.l.b16 %v797
      %v926 = vunpack.c.l.b16 %v798
      %v927 = vunpack.c.l.b16 %v799
      %v928 = vunpack.c.l.b16 %v800
      %v929 = vunpack.c.l.b16 %v801
      %v930 = vunpack.c.l.b16 %v802
      %v931 = vunpack.c.l.b16 %v803
      %v932 = vunpack.c.l.b16 %v804
      %v933 = vunpack.c.l.b16 %v805
      %v934 = vunpack.c.l.b16 %v806
      %v935 = vunpack.c.l.b16 %v807
      %v936 = vunpack.c.l.b16 %v808
      %v937 = vunpack.c.l.b16 %v809
      %v938 = vunpack.c.l.b16 %v810
      %v939 = vunpack.c.l.b16 %v811
      %v940 = vunpack.c.l.b16 %v812
      %v941 = vunpack.c.l.b16 %v813
      %v942 = vunpack.c.l.b16 %v814
      %v943 = vunpack.c.l.b16 %v815
      %v944 = vunpack.c.l.b16 %v816
      %v945 = vunpack.c.l.b16 %v817
      %v946 = vunpack.c.l.b16 %v818
      %v947 = vunpack.c.l.b16 %v819
      %v948 = vunpack.c.l.b16 %v820
      %v949 = vunpack.c.l.b16 %v821
      %v950 = vunpack.c.l.b16 %v822
      %v951 = vunpack.c.l.b16 %v823
      %v952 = vunpack.c.l.b16 %v824
      %v953 = vunpack.c.l.b16 %v825
      %v954 = vunpack.c.l.b16 %v826
      %v955 = vunpack.c.l.b16 %v827
      %v956 = vunpack.c.l.b16 %v828
      %v957 = vunpack.c.l.b16 %v829
      %v958 = vunpack.c.l.b16 %v830
      %v959 = vunpack.c.l.b16 %v831
      %v960 = vunpack.c.l.b16 %v832
      %v961 = vunpack.c.l.b16 %v833
      %v962 = vunpack.c.l.b16 %v834
      %v963 = vunpack.c.l.b16 %v835
      %v964 = vunpack.c.l.b16 %v836
      %v965 = vunpack.c.l.b16 %v837
      %v966 = vunpack.c.l.b16 %v838
      %v967 = vunpack.c.l.b16 %v839
      %v968 = vunpack.c.l.b16 %v840
      %v969 = vpack.c.b16 %v906, %v905
      %v970 = vpack.c.b16 %v908, %v907
      %v971 = vpack.c.b16 %v910, %v909
      %v972 = vpack.c.b16 %v912, %v911
      %v973 = vpack.c.b16 %v914, %v913
      %v974 = vpack.c.b16 %v916, %v915
      %v975 = vpack.c.b16 %v918, %v917
      %v976 = vpack.c.b16 %v920, %v919
      %v977 = vpack.c.b16 %v922, %v921
      %v978 = vpack.c.b16 %v924, %v923
      %v979 = vpack.c.b16 %v926, %v925
      %v980 = vpack.c.b16 %v928, %v927
      %v981 = vpack.c.b16 %v930, %v929
      %v982 = vpack.c.b16 %v932, %v931
      %v983 = vpack.c.b16 %v934, %v933
      %v984 = vpack.c.b16 %v936, %v935
      %v985 = vpack.c.b16 %v938, %v937
      %v986 = vpack.c.b16 %v940, %v939
      %v987 = vpack.c.b16 %v942, %v941
      %v988 = vpack.c.b16 %v944, %v943
      %v989 = vpack.c.b16 %v946, %v945
      %v990 = vpack.c.b16 %v948, %v947
      %v991 = vpack.c.b16 %v950, %v949
      %v992 = vpack.c.b16 %v952, %v951
      %v993 = vpack.c.b16 %v954, %v953
      %v994 = vpack.c.b16 %v956, %v955
      %v995 = vpack.c.b16 %v958, %v957
      %v996 = vpack.c.b16 %v960, %v959
      %v997 = vpack.c.b16 %v962, %v961
      %v998 = vpack.c.b16 %v964, %v963
      %v999 = vpack.c.b16 %v966, %v965
      %v1000 = vpack.c.b16 %v968, %v967
      %1033 = vmatprep.subr.bf16.mxu0 0
      %1034 = vmatpush1.bf16.msra.mxu0 %v969
      %1035 = vmatprep.subr.bf16.mxu0 0
      %1036 = vmatpush1.bf16.msra.mxu0 %v970
      %1037 = vmatprep.subr.bf16.mxu0 0
      %1038 = vmatpush1.bf16.msra.mxu0 %v971
      %1039 = vmatprep.subr.bf16.mxu0 0
      %1040 = vmatpush1.bf16.msra.mxu0 %v972
      %1041 = vmatprep.subr.bf16.mxu0 0
      %1042 = vmatpush1.bf16.msra.mxu0 %v973
      %1043 = vmatprep.subr.bf16.mxu0 0
      %1044 = vmatpush1.bf16.msra.mxu0 %v974
      %1045 = vmatprep.subr.bf16.mxu0 0
      %1046 = vmatpush1.bf16.msra.mxu0 %v975
      %1047 = vmatprep.subr.bf16.mxu0 0
      %1048 = vmatpush1.bf16.msra.mxu0 %v976
      %1049 = vmatprep.subr.bf16.mxu0 0
      %1050 = vmatpush1.bf16.msra.mxu0 %v977
      %1051 = vmatprep.subr.bf16.mxu0 0
      %1052 = vmatpush1.bf16.msra.mxu0 %v978
      %1053 = vmatprep.subr.bf16.mxu0 0
      %1054 = vmatpush1.bf16.msra.mxu0 %v979
      %1055 = vmatprep.subr.bf16.mxu0 0
      %1056 = vmatpush1.bf16.msra.mxu0 %v980
      %1057 = vmatprep.subr.bf16.mxu0 0
      %1058 = vmatpush1.bf16.msra.mxu0 %v981
      %1059 = vmatprep.subr.bf16.mxu0 0
      %1060 = vmatpush1.bf16.msra.mxu0 %v982
      %1061 = vmatprep.subr.bf16.mxu0 0
      %1062 = vmatpush1.bf16.msra.mxu0 %v983
      %1063 = vmatprep.subr.bf16.mxu0 0
      %1064 = vmatpush1.bf16.msra.mxu0 %v984
      %1065 = vmatprep.mubr.bf16.mxu0 %v260
      %1066 = vmatmul.mubr.bf16.gmra.mrb[0].mxu0 %v248
      %v1067 = vpop.f32.mrb[0].mxu0
      %v1068 = vadd.f32 0.0, %v1067
      %v1069 = vpop.f32.mrb[0].mxu0
      %v1070 = vpop.f32.mrb[0].mxu0
      %v1071 = vadd.f32 0.0, %v1070
      %v1072 = vpop.f32.mrb[0].mxu0
      %1073 = vmatprep.mubr.bf16.mxu0 %v261
      %1074 = vmatmul.mubr.bf16.gmra.mrb[0].mxu0 %v249
      %v1075 = vpop.f32.mrb[0].mxu0
      %v1076 = vadd.f32 0.0, %v1075
      %v1077 = vpop.f32.mrb[0].mxu0
      %v1078 = vpop.f32.mrb[0].mxu0
      %v1079 = vadd.f32 0.0, %v1078
      %v1080 = vpop.f32.mrb[0].mxu0
      %1081 = vmatprep.mubr.bf16.mxu0 %v262
      %1082 = vmatmul.mubr.bf16.gmra.mrb[0].mxu0 %v250
      %v1083 = vpop.f32.mrb[0].mxu0
      %v1084 = vadd.f32 0.0, %v1083
      %v1085 = vpop.f32.mrb[0].mxu0
      %v1086 = vpop.f32.mrb[0].mxu0
      %v1087 = vadd.f32 0.0, %v1086
      %v1088 = vpop.f32.mrb[0].mxu0
      %1089 = vmatprep.mubr.bf16.mxu0 %v263
      %1090 = vmatmul.mubr.bf16.gmra.mrb[0].mxu0 %v251
      %v1091 = vpop.f32.mrb[0].mxu0
      %v1092 = vadd.f32 0.0, %v1091
      %v1093 = vpop.f32.mrb[0].mxu0
      %v1094 = vpop.f32.mrb[0].mxu0
      %v1095 = vadd.f32 0.0, %v1094
      %v1096 = vpop.f32.mrb[0].mxu0
      %1097 = vdwg.mxu0
      %1098 = vmatprep.subr.bf16.mxu0 0
      %1099 = vmatpush1.bf16.msra.mxu0 %v985
      %1100 = vmatprep.subr.bf16.mxu0 0
      %1101 = vmatpush1.bf16.msra.mxu0 %v986
      %1102 = vmatprep.subr.bf16.mxu0 0
      %1103 = vmatpush1.bf16.msra.mxu0 %v987
      %1104 = vmatprep.subr.bf16.mxu0 0
      %1105 = vmatpush1.bf16.msra.mxu0 %v988
      %1106 = vmatprep.subr.bf16.mxu0 0
      %1107 = vmatpush1.bf16.msra.mxu0 %v989
      %1108 = vmatprep.subr.bf16.mxu0 0
      %1109 = vmatpush1.bf16.msra.mxu0 %v990
      %1110 = vmatprep.subr.bf16.mxu0 0
      %1111 = vmatpush1.bf16.msra.mxu0 %v991
      %1112 = vmatprep.subr.bf16.mxu0 0
      %1113 = vmatpush1.bf16.msra.mxu0 %v992
      %1114 = vmatprep.subr.bf16.mxu0 0
      %1115 = vmatpush1.bf16.msra.mxu0 %v993
      %1116 = vmatprep.subr.bf16.mxu0 0
      %1117 = vmatpush1.bf16.msra.mxu0 %v994
      %1118 = vmatprep.subr.bf16.mxu0 0
      %1119 = vmatpush1.bf16.msra.mxu0 %v995
      %1120 = vmatprep.subr.bf16.mxu0 0
      %1121 = vmatpush1.bf16.msra.mxu0 %v996
      %1122 = vmatprep.subr.bf16.mxu0 0
      %1123 = vmatpush1.bf16.msra.mxu0 %v997
      %1124 = vmatprep.subr.bf16.mxu0 0
      %1125 = vmatpush1.bf16.msra.mxu0 %v998
      %1126 = vmatprep.subr.bf16.mxu0 0
      %1127 = vmatpush1.bf16.msra.mxu0 %v999
      %1128 = vmatprep.subr.bf16.mxu0 0
      %1129 = vmatpush1.bf16.msra.mxu0 %v1000
      %1130 = vmatprep.mubr.bf16.mxu0 %v296
      %1131 = vmatmul.mubr.bf16.gmra.mrb[0].mxu0 %v284
      %v1132 = vpop.f32.mrb[0].mxu0
      %v1133 = vadd.f32 %v1068, %v1132
      %v1134 = vpop.f32.mrb[0].mxu0
      %v1135 = vpop.f32.mrb[0].mxu0
      %v1136 = vadd.f32 %v1071, %v1135
      %v1137 = vpop.f32.mrb[0].mxu0
      %1138 = vmatprep.mubr.bf16.mxu0 %v297
      %1139 = vmatmul.mubr.bf16.gmra.mrb[0].mxu0 %v285
      %v1140 = vpop.f32.mrb[0].mxu0
      %v1141 = vadd.f32 %v1076, %v1140
      %v1142 = vpop.f32.mrb[0].mxu0
      %v1143 = vpop.f32.mrb[0].mxu0
      %v1144 = vadd.f32 %v1079, %v1143
      %v1145 = vpop.f32.mrb[0].mxu0
      %1146 = vmatprep.mubr.bf16.mxu0 %v298
      %1147 = vmatmul.mubr.bf16.gmra.mrb[0].mxu0 %v286
      %v1148 = vpop.f32.mrb[0].mxu0
      %v1149 = vadd.f32 %v1084, %v1148
      %v1150 = vpop.f32.mrb[0].mxu0
      %v1151 = vpop.f32.mrb[0].mxu0
      %v1152 = vadd.f32 %v1087, %v1151
      %v1153 = vpop.f32.mrb[0].mxu0
      %1154 = vmatprep.mubr.bf16.mxu0 %v299
      %1155 = vmatmul.mubr.bf16.gmra.mrb[0].mxu0 %v287
      %v1156 = vpop.f32.mrb[0].mxu0
      %v1157 = vadd.f32 %v1092, %v1156
      %v1158 = vpop.f32.mrb[0].mxu0
      %v1159 = vpop.f32.mrb[0].mxu0
      %v1160 = vadd.f32 %v1095, %v1159
      %v1161 = vpop.f32.mrb[0].mxu0
      %1162 = vdwg.mxu0
      %v1163 = vsel %vm723, %v1133, 0.0
      %v1164 = vsel %vm723, %v1136, 0.0
      %v1165 = vadd.f32 %v1163, %v1164
      %v1166 = vsel %vm723, %v1141, 0.0
      %v1167 = vadd.f32 %v1165, %v1166
      %v1168 = vsel %vm723, %v1144, 0.0
      %v1169 = vadd.f32 %v1167, %v1168
      %v1170 = vsel %vm723, %v1149, 0.0
      %v1171 = vadd.f32 %v1169, %v1170
      %v1172 = vsel %vm723, %v1152, 0.0
      %v1173 = vadd.f32 %v1171, %v1172
      %v1174 = vsel %vm723, %v1157, 0.0
      %v1175 = vadd.f32 %v1173, %v1174
      %v1176 = vsel %vm723, %v1160, 0.0
      %v1177 = vadd.f32 %v1175, %v1176
      %v1178 = vrot.slane %v1177, 4
      %v1179 = vadd.f32 %v1177, %v1178
      %v1180 = vrot.slane %v1179, 2
      %v1181 = vadd.f32 %v1179, %v1180
      %v1182 = vrot.slane %v1181, 1
      %v1183 = vadd.f32 %v1181, %v1182
      %v1184 = vadd.f32 %v745, %v1183
      %v1185 = vmul.f32 %v1133, %v1133
      %v1186 = vmul.f32 %v1136, %v1136
      %v1187 = vmul.f32 %v1141, %v1141
      %v1188 = vmul.f32 %v1144, %v1144
      %v1189 = vmul.f32 %v1149, %v1149
      %v1190 = vmul.f32 %v1152, %v1152
      %v1191 = vmul.f32 %v1157, %v1157
      %v1192 = vmul.f32 %v1160, %v1160
      %v1193 = vsel %vm723, %v1185, 0.0
      %v1194 = vsel %vm723, %v1186, 0.0
      %v1195 = vadd.f32 %v1193, %v1194
      %v1196 = vsel %vm723, %v1187, 0.0
      %v1197 = vadd.f32 %v1195, %v1196
      %v1198 = vsel %vm723, %v1188, 0.0
      %v1199 = vadd.f32 %v1197, %v1198
      %v1200 = vsel %vm723, %v1189, 0.0
      %v1201 = vadd.f32 %v1199, %v1200
      %v1202 = vsel %vm723, %v1190, 0.0
      %v1203 = vadd.f32 %v1201, %v1202
      %v1204 = vsel %vm723, %v1191, 0.0
      %v1205 = vadd.f32 %v1203, %v1204
      %v1206 = vsel %vm723, %v1192, 0.0
      %v1207 = vadd.f32 %v1205, %v1206
      %v1208 = vrot.slane %v1207, 4
      %v1209 = vadd.f32 %v1207, %v1208
      %v1210 = vrot.slane %v1209, 2
      %v1211 = vadd.f32 %v1209, %v1210
      %v1212 = vrot.slane %v1211, 1
      %v1213 = vadd.f32 %v1211, %v1212
      %v1214 = vadd.f32 %v775, %v1213
      %1223 = vrot.lane.b32.xlu0 %v1133, 64
      %v1224 = vpop.permute.xlu0 %1223
      %1225 = vrot.lane.b32.xlu0 %v1136, 64
      %v1226 = vpop.permute.xlu0 %1225
      %1227 = vrot.lane.b32.xlu0 %v1141, 64
      %v1228 = vpop.permute.xlu0 %1227
      %1229 = vrot.lane.b32.xlu0 %v1144, 64
      %v1230 = vpop.permute.xlu0 %1229
      %1231 = vrot.lane.b32.xlu0 %v1149, 64
      %v1232 = vpop.permute.xlu0 %1231
      %1233 = vrot.lane.b32.xlu0 %v1152, 64
      %v1234 = vpop.permute.xlu0 %1233
      %1235 = vrot.lane.b32.xlu0 %v1157, 64
      %v1236 = vpop.permute.xlu0 %1235
      %1237 = vrot.lane.b32.xlu0 %v1160, 64
      %v1238 = vpop.permute.xlu0 %1237
      %v1247 = vsel %vm723, %v693, %v1224
      %v1248 = vsel %vm723, %v696, %v1226
      %v1249 = vsel %vm723, %v701, %v1228
      %v1250 = vsel %vm723, %v704, %v1230
      %v1251 = vsel %vm723, %v709, %v1232
      %v1252 = vsel %vm723, %v712, %v1234
      %v1253 = vsel %vm723, %v717, %v1236
      %v1254 = vsel %vm723, %v720, %v1238
      %v1255 = vpack.c.bf16 %v1247, %v1247
      %v1256 = vpack.c.bf16 %v1248, %v1248
      %v1257 = vpack.c.bf16 %v1249, %v1249
      %v1258 = vpack.c.bf16 %v1250, %v1250
      %v1259 = vpack.c.bf16 %v1251, %v1251
      %v1260 = vpack.c.bf16 %v1252, %v1252
      %v1261 = vpack.c.bf16 %v1253, %v1253
      %v1262 = vpack.c.bf16 %v1254, %v1254
      %1263 = vst [vmem:[%s177] sm:$0xf] %v1255
      %1264 = vst [vmem:[%s177 + $0x8] sm:$0xf] %v1256
      %1265 = vst [vmem:[%s177 + $0x10] sm:$0xf] %v1257
      %1266 = vst [vmem:[%s177 + $0x18] sm:$0xf] %v1258
      %1267 = vst [vmem:[%s177 + $0x20] sm:$0xf] %v1259
      %1268 = vst [vmem:[%s177 + $0x28] sm:$0xf] %v1260
      %1269 = vst [vmem:[%s177 + $0x30] sm:$0xf] %v1261
      %1270 = vst [vmem:[%s177 + $0x38] sm:$0xf] %v1262
      %s1271 = scalar_lea.vmem %s1, 512
      %v1272 = vld [vmem:[%s1271] sm:$0xf]
      %v1273 = vld [vmem:[%s1271 + $0x4] sm:$0xf]
      %v1274 = vld [vmem:[%s1271 + $0x8] sm:$0xf]
      %v1275 = vld [vmem:[%s1271 + $0xc] sm:$0xf]
      %v1276 = vld [vmem:[%s1271 + $0x10] sm:$0xf]
      %v1277 = vld [vmem:[%s1271 + $0x14] sm:$0xf]
      %v1278 = vld [vmem:[%s1271 + $0x18] sm:$0xf]
      %v1279 = vld [vmem:[%s1271 + $0x1c] sm:$0xf]
      %v1280 = vld [vmem:[%s1271 + $0x20] sm:$0xf]
      %v1281 = vld [vmem:[%s1271 + $0x24] sm:$0xf]
      %v1282 = vld [vmem:[%s1271 + $0x28] sm:$0xf]
      %v1283 = vld [vmem:[%s1271 + $0x2c] sm:$0xf]
      %v1284 = vld [vmem:[%s1271 + $0x30] sm:$0xf]
      %v1285 = vld [vmem:[%s1271 + $0x34] sm:$0xf]
      %v1286 = vld [vmem:[%s1271 + $0x38] sm:$0xf]
      %v1287 = vld [vmem:[%s1271 + $0x3c] sm:$0xf]
      %v1288 = vld [vmem:[%s1271 + $0x40] sm:$0xf]
      %v1289 = vld [vmem:[%s1271 + $0x44] sm:$0xf]
      %v1290 = vld [vmem:[%s1271 + $0x48] sm:$0xf]
      %v1291 = vld [vmem:[%s1271 + $0x4c] sm:$0xf]
      %v1292 = vld [vmem:[%s1271 + $0x50] sm:$0xf]
      %v1293 = vld [vmem:[%s1271 + $0x54] sm:$0xf]
      %v1294 = vld [vmem:[%s1271 + $0x58] sm:$0xf]
      %v1295 = vld [vmem:[%s1271 + $0x5c] sm:$0xf]
      %v1296 = vld [vmem:[%s1271 + $0x60] sm:$0xf]
      %v1297 = vld [vmem:[%s1271 + $0x64] sm:$0xf]
      %v1298 = vld [vmem:[%s1271 + $0x68] sm:$0xf]
      %v1299 = vld [vmem:[%s1271 + $0x6c] sm:$0xf]
      %v1300 = vld [vmem:[%s1271 + $0x70] sm:$0xf]
      %v1301 = vld [vmem:[%s1271 + $0x74] sm:$0xf]
      %v1302 = vld [vmem:[%s1271 + $0x78] sm:$0xf]
      %v1303 = vld [vmem:[%s1271 + $0x7c] sm:$0xf]
      %v1304 = vld [vmem:[%s1271 + $0x80] sm:$0xf]
      %v1305 = vld [vmem:[%s1271 + $0x84] sm:$0xf]
      %v1306 = vld [vmem:[%s1271 + $0x88] sm:$0xf]
      %v1307 = vld [vmem:[%s1271 + $0x8c] sm:$0xf]
      %v1308 = vld [vmem:[%s1271 + $0x90] sm:$0xf]
      %v1309 = vld [vmem:[%s1271 + $0x94] sm:$0xf]
      %v1310 = vld [vmem:[%s1271 + $0x98] sm:$0xf]
      %v1311 = vld [vmem:[%s1271 + $0x9c] sm:$0xf]
      %v1312 = vld [vmem:[%s1271 + $0xa0] sm:$0xf]
      %v1313 = vld [vmem:[%s1271 + $0xa4] sm:$0xf]
      %v1314 = vld [vmem:[%s1271 + $0xa8] sm:$0xf]
      %v1315 = vld [vmem:[%s1271 + $0xac] sm:$0xf]
      %v1316 = vld [vmem:[%s1271 + $0xb0] sm:$0xf]
      %v1317 = vld [vmem:[%s1271 + $0xb4] sm:$0xf]
      %v1318 = vld [vmem:[%s1271 + $0xb8] sm:$0xf]
      %v1319 = vld [vmem:[%s1271 + $0xbc] sm:$0xf]
      %v1320 = vld [vmem:[%s1271 + $0xc0] sm:$0xf]
      %v1321 = vld [vmem:[%s1271 + $0xc4] sm:$0xf]
      %v1322 = vld [vmem:[%s1271 + $0xc8] sm:$0xf]
      %v1323 = vld [vmem:[%s1271 + $0xcc] sm:$0xf]
      %v1324 = vld [vmem:[%s1271 + $0xd0] sm:$0xf]
      %v1325 = vld [vmem:[%s1271 + $0xd4] sm:$0xf]
      %v1326 = vld [vmem:[%s1271 + $0xd8] sm:$0xf]
      %v1327 = vld [vmem:[%s1271 + $0xdc] sm:$0xf]
      %v1328 = vld [vmem:[%s1271 + $0xe0] sm:$0xf]
      %v1329 = vld [vmem:[%s1271 + $0xe4] sm:$0xf]
      %v1330 = vld [vmem:[%s1271 + $0xe8] sm:$0xf]
      %v1331 = vld [vmem:[%s1271 + $0xec] sm:$0xf]
      %v1332 = vld [vmem:[%s1271 + $0xf0] sm:$0xf]
      %v1333 = vld [vmem:[%s1271 + $0xf4] sm:$0xf]
      %v1334 = vld [vmem:[%s1271 + $0xf8] sm:$0xf]
      %v1335 = vld [vmem:[%s1271 + $0xfc] sm:$0xf]
      %v1400 = vunpack.c.l.b16 %v1272
      %v1401 = vunpack.c.l.b16 %v1273
      %v1402 = vunpack.c.l.b16 %v1274
      %v1403 = vunpack.c.l.b16 %v1275
      %v1404 = vunpack.c.l.b16 %v1276
      %v1405 = vunpack.c.l.b16 %v1277
      %v1406 = vunpack.c.l.b16 %v1278
      %v1407 = vunpack.c.l.b16 %v1279
      %v1408 = vunpack.c.l.b16 %v1280
      %v1409 = vunpack.c.l.b16 %v1281
      %v1410 = vunpack.c.l.b16 %v1282
      %v1411 = vunpack.c.l.b16 %v1283
      %v1412 = vunpack.c.l.b16 %v1284
      %v1413 = vunpack.c.l.b16 %v1285
      %v1414 = vunpack.c.l.b16 %v1286
      %v1415 = vunpack.c.l.b16 %v1287
      %v1416 = vunpack.c.l.b16 %v1288
      %v1417 = vunpack.c.l.b16 %v1289
      %v1418 = vunpack.c.l.b16 %v1290
      %v1419 = vunpack.c.l.b16 %v1291
      %v1420 = vunpack.c.l.b16 %v1292
      %v1421 = vunpack.c.l.b16 %v1293
      %v1422 = vunpack.c.l.b16 %v1294
      %v1423 = vunpack.c.l.b16 %v1295
      %v1424 = vunpack.c.l.b16 %v1296
      %v1425 = vunpack.c.l.b16 %v1297
      %v1426 = vunpack.c.l.b16 %v1298
      %v1427 = vunpack.c.l.b16 %v1299
      %v1428 = vunpack.c.l.b16 %v1300
      %v1429 = vunpack.c.l.b16 %v1301
      %v1430 = vunpack.c.l.b16 %v1302
      %v1431 = vunpack.c.l.b16 %v1303
      %v1432 = vunpack.c.l.b16 %v1304
      %v1433 = vunpack.c.l.b16 %v1305
      %v1434 = vunpack.c.l.b16 %v1306
      %v1435 = vunpack.c.l.b16 %v1307
      %v1436 = vunpack.c.l.b16 %v1308
      %v1437 = vunpack.c.l.b16 %v1309
      %v1438 = vunpack.c.l.b16 %v1310
      %v1439 = vunpack.c.l.b16 %v1311
      %v1440 = vunpack.c.l.b16 %v1312
      %v1441 = vunpack.c.l.b16 %v1313
      %v1442 = vunpack.c.l.b16 %v1314
      %v1443 = vunpack.c.l.b16 %v1315
      %v1444 = vunpack.c.l.b16 %v1316
      %v1445 = vunpack.c.l.b16 %v1317
      %v1446 = vunpack.c.l.b16 %v1318
      %v1447 = vunpack.c.l.b16 %v1319
      %v1448 = vunpack.c.l.b16 %v1320
      %v1449 = vunpack.c.l.b16 %v1321
      %v1450 = vunpack.c.l.b16 %v1322
      %v1451 = vunpack.c.l.b16 %v1323
      %v1452 = vunpack.c.l.b16 %v1324
      %v1453 = vunpack.c.l.b16 %v1325
      %v1454 = vunpack.c.l.b16 %v1326
      %v1455 = vunpack.c.l.b16 %v1327
      %v1456 = vunpack.c.l.b16 %v1328
      %v1457 = vunpack.c.l.b16 %v1329
      %v1458 = vunpack.c.l.b16 %v1330
      %v1459 = vunpack.c.l.b16 %v1331
      %v1460 = vunpack.c.l.b16 %v1332
      %v1461 = vunpack.c.l.b16 %v1333
      %v1462 = vunpack.c.l.b16 %v1334
      %v1463 = vunpack.c.l.b16 %v1335
      %v1464 = vpack.c.b16 %v1401, %v1400
      %v1465 = vpack.c.b16 %v1403, %v1402
      %v1466 = vpack.c.b16 %v1405, %v1404
      %v1467 = vpack.c.b16 %v1407, %v1406
      %v1468 = vpack.c.b16 %v1409, %v1408
      %v1469 = vpack.c.b16 %v1411, %v1410
      %v1470 = vpack.c.b16 %v1413, %v1412
      %v1471 = vpack.c.b16 %v1415, %v1414
      %v1472 = vpack.c.b16 %v1417, %v1416
      %v1473 = vpack.c.b16 %v1419, %v1418
      %v1474 = vpack.c.b16 %v1421, %v1420
      %v1475 = vpack.c.b16 %v1423, %v1422
      %v1476 = vpack.c.b16 %v1425, %v1424
      %v1477 = vpack.c.b16 %v1427, %v1426
      %v1478 = vpack.c.b16 %v1429, %v1428
      %v1479 = vpack.c.b16 %v1431, %v1430
      %v1480 = vpack.c.b16 %v1433, %v1432
      %v1481 = vpack.c.b16 %v1435, %v1434
      %v1482 = vpack.c.b16 %v1437, %v1436
      %v1483 = vpack.c.b16 %v1439, %v1438
      %v1484 = vpack.c.b16 %v1441, %v1440
      %v1485 = vpack.c.b16 %v1443, %v1442
      %v1486 = vpack.c.b16 %v1445, %v1444
      %v1487 = vpack.c.b16 %v1447, %v1446
      %v1488 = vpack.c.b16 %v1449, %v1448
      %v1489 = vpack.c.b16 %v1451, %v1450
      %v1490 = vpack.c.b16 %v1453, %v1452
      %v1491 = vpack.c.b16 %v1455, %v1454
      %v1492 = vpack.c.b16 %v1457, %v1456
      %v1493 = vpack.c.b16 %v1459, %v1458
      %v1494 = vpack.c.b16 %v1461, %v1460
      %v1495 = vpack.c.b16 %v1463, %v1462
      %1528 = vmatprep.subr.bf16.mxu0 0
      %1529 = vmatpush1.bf16.msra.mxu0 %v1464
      %1530 = vmatprep.subr.bf16.mxu0 0
      %1531 = vmatpush1.bf16.msra.mxu0 %v1465
      %1532 = vmatprep.subr.bf16.mxu0 0
      %1533 = vmatpush1.bf16.msra.mxu0 %v1466
      %1534 = vmatprep.subr.bf16.mxu0 0
      %1535 = vmatpush1.bf16.msra.mxu0 %v1467
      %1536 = vmatprep.subr.bf16.mxu0 0
      %1537 = vmatpush1.bf16.msra.mxu0 %v1468
      %1538 = vmatprep.subr.bf16.mxu0 0
      %1539 = vmatpush1.bf16.msra.mxu0 %v1469
      %1540 = vmatprep.subr.bf16.mxu0 0
      %1541 = vmatpush1.bf16.msra.mxu0 %v1470
      %1542 = vmatprep.subr.bf16.mxu0 0
      %1543 = vmatpush1.bf16.msra.mxu0 %v1471
      %1544 = vmatprep.subr.bf16.mxu0 0
      %1545 = vmatpush1.bf16.msra.mxu0 %v1472
      %1546 = vmatprep.subr.bf16.mxu0 0
      %1547 = vmatpush1.bf16.msra.mxu0 %v1473
      %1548 = vmatprep.subr.bf16.mxu0 0
      %1549 = vmatpush1.bf16.msra.mxu0 %v1474
      %1550 = vmatprep.subr.bf16.mxu0 0
      %1551 = vmatpush1.bf16.msra.mxu0 %v1475
      %1552 = vmatprep.subr.bf16.mxu0 0
      %1553 = vmatpush1.bf16.msra.mxu0 %v1476
      %1554 = vmatprep.subr.bf16.mxu0 0
      %1555 = vmatpush1.bf16.msra.mxu0 %v1477
      %1556 = vmatprep.subr.bf16.mxu0 0
      %1557 = vmatpush1.bf16.msra.mxu0 %v1478
      %1558 = vmatprep.subr.bf16.mxu0 0
      %1559 = vmatpush1.bf16.msra.mxu0 %v1479
      %1560 = vmatprep.mubr.bf16.mxu0 %v284
      %1561 = vmatmul.mubr.bf16.gmra.mrb[0].mxu0 %v272
      %v1562 = vpop.f32.mrb[0].mxu0
      %v1563 = vadd.f32 0.0, %v1562
      %v1564 = vpop.f32.mrb[0].mxu0
      %v1565 = vpop.f32.mrb[0].mxu0
      %v1566 = vadd.f32 0.0, %v1565
      %v1567 = vpop.f32.mrb[0].mxu0
      %1568 = vmatprep.mubr.bf16.mxu0 %v285
      %1569 = vmatmul.mubr.bf16.gmra.mrb[0].mxu0 %v273
      %v1570 = vpop.f32.mrb[0].mxu0
      %v1571 = vadd.f32 0.0, %v1570
      %v1572 = vpop.f32.mrb[0].mxu0
      %v1573 = vpop.f32.mrb[0].mxu0
      %v1574 = vadd.f32 0.0, %v1573
      %v1575 = vpop.f32.mrb[0].mxu0
      %1576 = vmatprep.mubr.bf16.mxu0 %v286
      %1577 = vmatmul.mubr.bf16.gmra.mrb[0].mxu0 %v274
      %v1578 = vpop.f32.mrb[0].mxu0
      %v1579 = vadd.f32 0.0, %v1578
      %v1580 = vpop.f32.mrb[0].mxu0
      %v1581 = vpop.f32.mrb[0].mxu0
      %v1582 = vadd.f32 0.0, %v1581
      %v1583 = vpop.f32.mrb[0].mxu0
      %1584 = vmatprep.mubr.bf16.mxu0 %v287
      %1585 = vmatmul.mubr.bf16.gmra.mrb[0].mxu0 %v275
      %v1586 = vpop.f32.mrb[0].mxu0
      %v1587 = vadd.f32 0.0, %v1586
      %v1588 = vpop.f32.mrb[0].mxu0
      %v1589 = vpop.f32.mrb[0].mxu0
      %v1590 = vadd.f32 0.0, %v1589
      %v1591 = vpop.f32.mrb[0].mxu0
      %1592 = vdwg.mxu0
      %1593 = vmatprep.subr.bf16.mxu0 0
      %1594 = vmatpush1.bf16.msra.mxu0 %v1480
      %1595 = vmatprep.subr.bf16.mxu0 0
      %1596 = vmatpush1.bf16.msra.mxu0 %v1481
      %1597 = vmatprep.subr.bf16.mxu0 0
      %1598 = vmatpush1.bf16.msra.mxu0 %v1482
      %1599 = vmatprep.subr.bf16.mxu0 0
      %1600 = vmatpush1.bf16.msra.mxu0 %v1483
      %1601 = vmatprep.subr.bf16.mxu0 0
      %1602 = vmatpush1.bf16.msra.mxu0 %v1484
      %1603 = vmatprep.subr.bf16.mxu0 0
      %1604 = vmatpush1.bf16.msra.mxu0 %v1485
      %1605 = vmatprep.subr.bf16.mxu0 0
      %1606 = vmatpush1.bf16.msra.mxu0 %v1486
      %1607 = vmatprep.subr.bf16.mxu0 0
      %1608 = vmatpush1.bf16.msra.mxu0 %v1487
      %1609 = vmatprep.subr.bf16.mxu0 0
      %1610 = vmatpush1.bf16.msra.mxu0 %v1488
      %1611 = vmatprep.subr.bf16.mxu0 0
      %1612 = vmatpush1.bf16.msra.mxu0 %v1489
      %1613 = vmatprep.subr.bf16.mxu0 0
      %1614 = vmatpush1.bf16.msra.mxu0 %v1490
      %1615 = vmatprep.subr.bf16.mxu0 0
      %1616 = vmatpush1.bf16.msra.mxu0 %v1491
      %1617 = vmatprep.subr.bf16.mxu0 0
      %1618 = vmatpush1.bf16.msra.mxu0 %v1492
      %1619 = vmatprep.subr.bf16.mxu0 0
      %1620 = vmatpush1.bf16.msra.mxu0 %v1493
      %1621 = vmatprep.subr.bf16.mxu0 0
      %1622 = vmatpush1.bf16.msra.mxu0 %v1494
      %1623 = vmatprep.subr.bf16.mxu0 0
      %1624 = vmatpush1.bf16.msra.mxu0 %v1495
      %1625 = vmatprep.mubr.bf16.mxu0 %v321
      %1626 = vmatmul.mubr.bf16.gmra.mrb[0].mxu0 %v309
      %v1627 = vpop.f32.mrb[0].mxu0
      %v1628 = vadd.f32 %v1563, %v1627
      %v1629 = vpop.f32.mrb[0].mxu0
      %v1630 = vpop.f32.mrb[0].mxu0
      %v1631 = vadd.f32 %v1566, %v1630
      %v1632 = vpop.f32.mrb[0].mxu0
      %1633 = vmatprep.mubr.bf16.mxu0 %v322
      %1634 = vmatmul.mubr.bf16.gmra.mrb[0].mxu0 %v310
      %v1635 = vpop.f32.mrb[0].mxu0
      %v1636 = vadd.f32 %v1571, %v1635
      %v1637 = vpop.f32.mrb[0].mxu0
      %v1638 = vpop.f32.mrb[0].mxu0
      %v1639 = vadd.f32 %v1574, %v1638
      %v1640 = vpop.f32.mrb[0].mxu0
      %1641 = vmatprep.mubr.bf16.mxu0 %v323
      %1642 = vmatmul.mubr.bf16.gmra.mrb[0].mxu0 %v311
      %v1643 = vpop.f32.mrb[0].mxu0
      %v1644 = vadd.f32 %v1579, %v1643
      %v1645 = vpop.f32.mrb[0].mxu0
      %v1646 = vpop.f32.mrb[0].mxu0
      %v1647 = vadd.f32 %v1582, %v1646
      %v1648 = vpop.f32.mrb[0].mxu0
      %1649 = vmatprep.mubr.bf16.mxu0 %v324
      %1650 = vmatmul.mubr.bf16.gmra.mrb[0].mxu0 %v312
      %v1651 = vpop.f32.mrb[0].mxu0
      %v1652 = vadd.f32 %v1587, %v1651
      %v1653 = vpop.f32.mrb[0].mxu0
      %v1654 = vpop.f32.mrb[0].mxu0
      %v1655 = vadd.f32 %v1590, %v1654
      %v1656 = vpop.f32.mrb[0].mxu0
      %1657 = vdwg.mxu0
      %v1658 = vsel %vm723, %v1628, 0.0
      %v1659 = vsel %vm723, %v1631, 0.0
      %v1660 = vadd.f32 %v1658, %v1659
      %v1661 = vsel %vm723, %v1636, 0.0
      %v1662 = vadd.f32 %v1660, %v1661
      %v1663 = vsel %vm723, %v1639, 0.0
      %v1664 = vadd.f32 %v1662, %v1663
      %v1665 = vsel %vm723, %v1644, 0.0
      %v1666 = vadd.f32 %v1664, %v1665
      %v1667 = vsel %vm723, %v1647, 0.0
      %v1668 = vadd.f32 %v1666, %v1667
      %v1669 = vsel %vm723, %v1652, 0.0
      %v1670 = vadd.f32 %v1668, %v1669
      %v1671 = vsel %vm723, %v1655, 0.0
      %v1672 = vadd.f32 %v1670, %v1671
      %v1673 = vrot.slane %v1672, 4
      %v1674 = vadd.f32 %v1672, %v1673
      %v1675 = vrot.slane %v1674, 2
      %v1676 = vadd.f32 %v1674, %v1675
      %v1677 = vrot.slane %v1676, 1
      %v1678 = vadd.f32 %v1676, %v1677
      %v1679 = vadd.f32 %v1184, %v1678
      %v1680 = vmul.f32 %v1628, %v1628
      %v1681 = vmul.f32 %v1631, %v1631
      %v1682 = vmul.f32 %v1636, %v1636
      %v1683 = vmul.f32 %v1639, %v1639
      %v1684 = vmul.f32 %v1644, %v1644
      %v1685 = vmul.f32 %v1647, %v1647
      %v1686 = vmul.f32 %v1652, %v1652
      %v1687 = vmul.f32 %v1655, %v1655
      %v1688 = vsel %vm723, %v1680, 0.0
      %v1689 = vsel %vm723, %v1681, 0.0
      %v1690 = vadd.f32 %v1688, %v1689
      %v1691 = vsel %vm723, %v1682, 0.0
      %v1692 = vadd.f32 %v1690, %v1691
      %v1693 = vsel %vm723, %v1683, 0.0
      %v1694 = vadd.f32 %v1692, %v1693
      %v1695 = vsel %vm723, %v1684, 0.0
      %v1696 = vadd.f32 %v1694, %v1695
      %v1697 = vsel %vm723, %v1685, 0.0
      %v1698 = vadd.f32 %v1696, %v1697
      %v1699 = vsel %vm723, %v1686, 0.0
      %v1700 = vadd.f32 %v1698, %v1699
      %v1701 = vsel %vm723, %v1687, 0.0
      %v1702 = vadd.f32 %v1700, %v1701
      %v1703 = vrot.slane %v1702, 4
      %v1704 = vadd.f32 %v1702, %v1703
      %v1705 = vrot.slane %v1704, 2
      %v1706 = vadd.f32 %v1704, %v1705
      %v1707 = vrot.slane %v1706, 1
      %v1708 = vadd.f32 %v1706, %v1707
      %v1709 = vadd.f32 %v1214, %v1708
      %s1710 = scalar_lea.vmem %s1, 768
      %v1711 = vld [vmem:[%s1710] sm:$0xf]
      %v1712 = vld [vmem:[%s1710 + $0x4] sm:$0xf]
      %v1713 = vld [vmem:[%s1710 + $0x8] sm:$0xf]
      %v1714 = vld [vmem:[%s1710 + $0xc] sm:$0xf]
      %v1715 = vld [vmem:[%s1710 + $0x10] sm:$0xf]
      %v1716 = vld [vmem:[%s1710 + $0x14] sm:$0xf]
      %v1717 = vld [vmem:[%s1710 + $0x18] sm:$0xf]
      %v1718 = vld [vmem:[%s1710 + $0x1c] sm:$0xf]
      %v1719 = vld [vmem:[%s1710 + $0x20] sm:$0xf]
      %v1720 = vld [vmem:[%s1710 + $0x24] sm:$0xf]
      %v1721 = vld [vmem:[%s1710 + $0x28] sm:$0xf]
      %v1722 = vld [vmem:[%s1710 + $0x2c] sm:$0xf]
      %v1723 = vld [vmem:[%s1710 + $0x30] sm:$0xf]
      %v1724 = vld [vmem:[%s1710 + $0x34] sm:$0xf]
      %v1725 = vld [vmem:[%s1710 + $0x38] sm:$0xf]
      %v1726 = vld [vmem:[%s1710 + $0x3c] sm:$0xf]
      %v1727 = vld [vmem:[%s1710 + $0x40] sm:$0xf]
      %v1728 = vld [vmem:[%s1710 + $0x44] sm:$0xf]
      %v1729 = vld [vmem:[%s1710 + $0x48] sm:$0xf]
      %v1730 = vld [vmem:[%s1710 + $0x4c] sm:$0xf]
      %v1731 = vld [vmem:[%s1710 + $0x50] sm:$0xf]
      %v1732 = vld [vmem:[%s1710 + $0x54] sm:$0xf]
      %v1733 = vld [vmem:[%s1710 + $0x58] sm:$0xf]
      %v1734 = vld [vmem:[%s1710 + $0x5c] sm:$0xf]
      %v1735 = vld [vmem:[%s1710 + $0x60] sm:$0xf]
      %v1736 = vld [vmem:[%s1710 + $0x64] sm:$0xf]
      %v1737 = vld [vmem:[%s1710 + $0x68] sm:$0xf]
      %v1738 = vld [vmem:[%s1710 + $0x6c] sm:$0xf]
      %v1739 = vld [vmem:[%s1710 + $0x70] sm:$0xf]
      %v1740 = vld [vmem:[%s1710 + $0x74] sm:$0xf]
      %v1741 = vld [vmem:[%s1710 + $0x78] sm:$0xf]
      %v1742 = vld [vmem:[%s1710 + $0x7c] sm:$0xf]
      %v1743 = vld [vmem:[%s1710 + $0x80] sm:$0xf]
      %v1744 = vld [vmem:[%s1710 + $0x84] sm:$0xf]
      %v1745 = vld [vmem:[%s1710 + $0x88] sm:$0xf]
      %v1746 = vld [vmem:[%s1710 + $0x8c] sm:$0xf]
      %v1747 = vld [vmem:[%s1710 + $0x90] sm:$0xf]
      %v1748 = vld [vmem:[%s1710 + $0x94] sm:$0xf]
      %v1749 = vld [vmem:[%s1710 + $0x98] sm:$0xf]
      %v1750 = vld [vmem:[%s1710 + $0x9c] sm:$0xf]
      %v1751 = vld [vmem:[%s1710 + $0xa0] sm:$0xf]
      %v1752 = vld [vmem:[%s1710 + $0xa4] sm:$0xf]
      %v1753 = vld [vmem:[%s1710 + $0xa8] sm:$0xf]
      %v1754 = vld [vmem:[%s1710 + $0xac] sm:$0xf]
      %v1755 = vld [vmem:[%s1710 + $0xb0] sm:$0xf]
      %v1756 = vld [vmem:[%s1710 + $0xb4] sm:$0xf]
      %v1757 = vld [vmem:[%s1710 + $0xb8] sm:$0xf]
      %v1758 = vld [vmem:[%s1710 + $0xbc] sm:$0xf]
      %v1759 = vld [vmem:[%s1710 + $0xc0] sm:$0xf]
      %v1760 = vld [vmem:[%s1710 + $0xc4] sm:$0xf]
      %v1761 = vld [vmem:[%s1710 + $0xc8] sm:$0xf]
      %v1762 = vld [vmem:[%s1710 + $0xcc] sm:$0xf]
      %v1763 = vld [vmem:[%s1710 + $0xd0] sm:$0xf]
      %v1764 = vld [vmem:[%s1710 + $0xd4] sm:$0xf]
      %v1765 = vld [vmem:[%s1710 + $0xd8] sm:$0xf]
      %v1766 = vld [vmem:[%s1710 + $0xdc] sm:$0xf]
      %v1767 = vld [vmem:[%s1710 + $0xe0] sm:$0xf]
      %v1768 = vld [vmem:[%s1710 + $0xe4] sm:$0xf]
      %v1769 = vld [vmem:[%s1710 + $0xe8] sm:$0xf]
      %v1770 = vld [vmem:[%s1710 + $0xec] sm:$0xf]
      %v1771 = vld [vmem:[%s1710 + $0xf0] sm:$0xf]
      %v1772 = vld [vmem:[%s1710 + $0xf4] sm:$0xf]
      %v1773 = vld [vmem:[%s1710 + $0xf8] sm:$0xf]
      %v1774 = vld [vmem:[%s1710 + $0xfc] sm:$0xf]
      %v1839 = vunpack.c.l.b16 %v1711
      %v1840 = vunpack.c.l.b16 %v1712
      %v1841 = vunpack.c.l.b16 %v1713
      %v1842 = vunpack.c.l.b16 %v1714
      %v1843 = vunpack.c.l.b16 %v1715
      %v1844 = vunpack.c.l.b16 %v1716
      %v1845 = vunpack.c.l.b16 %v1717
      %v1846 = vunpack.c.l.b16 %v1718
      %v1847 = vunpack.c.l.b16 %v1719
      %v1848 = vunpack.c.l.b16 %v1720
      %v1849 = vunpack.c.l.b16 %v1721
      %v1850 = vunpack.c.l.b16 %v1722
      %v1851 = vunpack.c.l.b16 %v1723
      %v1852 = vunpack.c.l.b16 %v1724
      %v1853 = vunpack.c.l.b16 %v1725
      %v1854 = vunpack.c.l.b16 %v1726
      %v1855 = vunpack.c.l.b16 %v1727
      %v1856 = vunpack.c.l.b16 %v1728
      %v1857 = vunpack.c.l.b16 %v1729
      %v1858 = vunpack.c.l.b16 %v1730
      %v1859 = vunpack.c.l.b16 %v1731
      %v1860 = vunpack.c.l.b16 %v1732
      %v1861 = vunpack.c.l.b16 %v1733
      %v1862 = vunpack.c.l.b16 %v1734
      %v1863 = vunpack.c.l.b16 %v1735
      %v1864 = vunpack.c.l.b16 %v1736
      %v1865 = vunpack.c.l.b16 %v1737
      %v1866 = vunpack.c.l.b16 %v1738
      %v1867 = vunpack.c.l.b16 %v1739
      %v1868 = vunpack.c.l.b16 %v1740
      %v1869 = vunpack.c.l.b16 %v1741
      %v1870 = vunpack.c.l.b16 %v1742
      %v1871 = vunpack.c.l.b16 %v1743
      %v1872 = vunpack.c.l.b16 %v1744
      %v1873 = vunpack.c.l.b16 %v1745
      %v1874 = vunpack.c.l.b16 %v1746
      %v1875 = vunpack.c.l.b16 %v1747
      %v1876 = vunpack.c.l.b16 %v1748
      %v1877 = vunpack.c.l.b16 %v1749
      %v1878 = vunpack.c.l.b16 %v1750
      %v1879 = vunpack.c.l.b16 %v1751
      %v1880 = vunpack.c.l.b16 %v1752
      %v1881 = vunpack.c.l.b16 %v1753
      %v1882 = vunpack.c.l.b16 %v1754
      %v1883 = vunpack.c.l.b16 %v1755
      %v1884 = vunpack.c.l.b16 %v1756
      %v1885 = vunpack.c.l.b16 %v1757
      %v1886 = vunpack.c.l.b16 %v1758
      %v1887 = vunpack.c.l.b16 %v1759
      %v1888 = vunpack.c.l.b16 %v1760
      %v1889 = vunpack.c.l.b16 %v1761
      %v1890 = vunpack.c.l.b16 %v1762
      %v1891 = vunpack.c.l.b16 %v1763
      %v1892 = vunpack.c.l.b16 %v1764
      %v1893 = vunpack.c.l.b16 %v1765
      %v1894 = vunpack.c.l.b16 %v1766
      %v1895 = vunpack.c.l.b16 %v1767
      %v1896 = vunpack.c.l.b16 %v1768
      %v1897 = vunpack.c.l.b16 %v1769
      %v1898 = vunpack.c.l.b16 %v1770
      %v1899 = vunpack.c.l.b16 %v1771
      %v1900 = vunpack.c.l.b16 %v1772
      %v1901 = vunpack.c.l.b16 %v1773
      %v1902 = vunpack.c.l.b16 %v1774
      %v1903 = vpack.c.b16 %v1840, %v1839
      %v1904 = vpack.c.b16 %v1842, %v1841
      %v1905 = vpack.c.b16 %v1844, %v1843
      %v1906 = vpack.c.b16 %v1846, %v1845
      %v1907 = vpack.c.b16 %v1848, %v1847
      %v1908 = vpack.c.b16 %v1850, %v1849
      %v1909 = vpack.c.b16 %v1852, %v1851
      %v1910 = vpack.c.b16 %v1854, %v1853
      %v1911 = vpack.c.b16 %v1856, %v1855
      %v1912 = vpack.c.b16 %v1858, %v1857
      %v1913 = vpack.c.b16 %v1860, %v1859
      %v1914 = vpack.c.b16 %v1862, %v1861
      %v1915 = vpack.c.b16 %v1864, %v1863
      %v1916 = vpack.c.b16 %v1866, %v1865
      %v1917 = vpack.c.b16 %v1868, %v1867
      %v1918 = vpack.c.b16 %v1870, %v1869
      %v1919 = vpack.c.b16 %v1872, %v1871
      %v1920 = vpack.c.b16 %v1874, %v1873
      %v1921 = vpack.c.b16 %v1876, %v1875
      %v1922 = vpack.c.b16 %v1878, %v1877
      %v1923 = vpack.c.b16 %v1880, %v1879
      %v1924 = vpack.c.b16 %v1882, %v1881
      %v1925 = vpack.c.b16 %v1884, %v1883
      %v1926 = vpack.c.b16 %v1886, %v1885
      %v1927 = vpack.c.b16 %v1888, %v1887
      %v1928 = vpack.c.b16 %v1890, %v1889
      %v1929 = vpack.c.b16 %v1892, %v1891
      %v1930 = vpack.c.b16 %v1894, %v1893
      %v1931 = vpack.c.b16 %v1896, %v1895
      %v1932 = vpack.c.b16 %v1898, %v1897
      %v1933 = vpack.c.b16 %v1900, %v1899
      %v1934 = vpack.c.b16 %v1902, %v1901
      %1967 = vmatprep.subr.bf16.mxu0 0
      %1968 = vmatpush1.bf16.msra.mxu0 %v1903
      %1969 = vmatprep.subr.bf16.mxu0 0
      %1970 = vmatpush1.bf16.msra.mxu0 %v1904
      %1971 = vmatprep.subr.bf16.mxu0 0
      %1972 = vmatpush1.bf16.msra.mxu0 %v1905
      %1973 = vmatprep.subr.bf16.mxu0 0
      %1974 = vmatpush1.bf16.msra.mxu0 %v1906
      %1975 = vmatprep.subr.bf16.mxu0 0
      %1976 = vmatpush1.bf16.msra.mxu0 %v1907
      %1977 = vmatprep.subr.bf16.mxu0 0
      %1978 = vmatpush1.bf16.msra.mxu0 %v1908
      %1979 = vmatprep.subr.bf16.mxu0 0
      %1980 = vmatpush1.bf16.msra.mxu0 %v1909
      %1981 = vmatprep.subr.bf16.mxu0 0
      %1982 = vmatpush1.bf16.msra.mxu0 %v1910
      %1983 = vmatprep.subr.bf16.mxu0 0
      %1984 = vmatpush1.bf16.msra.mxu0 %v1911
      %1985 = vmatprep.subr.bf16.mxu0 0
      %1986 = vmatpush1.bf16.msra.mxu0 %v1912
      %1987 = vmatprep.subr.bf16.mxu0 0
      %1988 = vmatpush1.bf16.msra.mxu0 %v1913
      %1989 = vmatprep.subr.bf16.mxu0 0
      %1990 = vmatpush1.bf16.msra.mxu0 %v1914
      %1991 = vmatprep.subr.bf16.mxu0 0
      %1992 = vmatpush1.bf16.msra.mxu0 %v1915
      %1993 = vmatprep.subr.bf16.mxu0 0
      %1994 = vmatpush1.bf16.msra.mxu0 %v1916
      %1995 = vmatprep.subr.bf16.mxu0 0
      %1996 = vmatpush1.bf16.msra.mxu0 %v1917
      %1997 = vmatprep.subr.bf16.mxu0 0
      %1998 = vmatpush1.bf16.msra.mxu0 %v1918
      %1999 = vmatprep.mubr.bf16.mxu0 %v296
      %2000 = vmatmul.mubr.bf16.gmra.mrb[0].mxu0 %v284
      %v2001 = vpop.f32.mrb[0].mxu0
      %v2002 = vadd.f32 0.0, %v2001
      %v2003 = vpop.f32.mrb[0].mxu0
      %v2004 = vpop.f32.mrb[0].mxu0
      %v2005 = vadd.f32 0.0, %v2004
      %v2006 = vpop.f32.mrb[0].mxu0
      %2007 = vmatprep.mubr.bf16.mxu0 %v297
      %2008 = vmatmul.mubr.bf16.gmra.mrb[0].mxu0 %v285
      %v2009 = vpop.f32.mrb[0].mxu0
      %v2010 = vadd.f32 0.0, %v2009
      %v2011 = vpop.f32.mrb[0].mxu0
      %v2012 = vpop.f32.mrb[0].mxu0
      %v2013 = vadd.f32 0.0, %v2012
      %v2014 = vpop.f32.mrb[0].mxu0
      %2015 = vmatprep.mubr.bf16.mxu0 %v298
      %2016 = vmatmul.mubr.bf16.gmra.mrb[0].mxu0 %v286
      %v2017 = vpop.f32.mrb[0].mxu0
      %v2018 = vadd.f32 0.0, %v2017
      %v2019 = vpop.f32.mrb[0].mxu0
      %v2020 = vpop.f32.mrb[0].mxu0
      %v2021 = vadd.f32 0.0, %v2020
      %v2022 = vpop.f32.mrb[0].mxu0
      %2023 = vmatprep.mubr.bf16.mxu0 %v299
      %2024 = vmatmul.mubr.bf16.gmra.mrb[0].mxu0 %v287
      %v2025 = vpop.f32.mrb[0].mxu0
      %v2026 = vadd.f32 0.0, %v2025
      %v2027 = vpop.f32.mrb[0].mxu0
      %v2028 = vpop.f32.mrb[0].mxu0
      %v2029 = vadd.f32 0.0, %v2028
      %v2030 = vpop.f32.mrb[0].mxu0
      %2031 = vdwg.mxu0
      %2032 = vmatprep.subr.bf16.mxu0 0
      %2033 = vmatpush1.bf16.msra.mxu0 %v1919
      %2034 = vmatprep.subr.bf16.mxu0 0
      %2035 = vmatpush1.bf16.msra.mxu0 %v1920
      %2036 = vmatprep.subr.bf16.mxu0 0
      %2037 = vmatpush1.bf16.msra.mxu0 %v1921
      %2038 = vmatprep.subr.bf16.mxu0 0
      %2039 = vmatpush1.bf16.msra.mxu0 %v1922
      %2040 = vmatprep.subr.bf16.mxu0 0
      %2041 = vmatpush1.bf16.msra.mxu0 %v1923
      %2042 = vmatprep.subr.bf16.mxu0 0
      %2043 = vmatpush1.bf16.msra.mxu0 %v1924
      %2044 = vmatprep.subr.bf16.mxu0 0
      %2045 = vmatpush1.bf16.msra.mxu0 %v1925
      %2046 = vmatprep.subr.bf16.mxu0 0
      %2047 = vmatpush1.bf16.msra.mxu0 %v1926
      %2048 = vmatprep.subr.bf16.mxu0 0
      %2049 = vmatpush1.bf16.msra.mxu0 %v1927
      %2050 = vmatprep.subr.bf16.mxu0 0
      %2051 = vmatpush1.bf16.msra.mxu0 %v1928
      %2052 = vmatprep.subr.bf16.mxu0 0
      %2053 = vmatpush1.bf16.msra.mxu0 %v1929
      %2054 = vmatprep.subr.bf16.mxu0 0
      %2055 = vmatpush1.bf16.msra.mxu0 %v1930
      %2056 = vmatprep.subr.bf16.mxu0 0
      %2057 = vmatpush1.bf16.msra.mxu0 %v1931
      %2058 = vmatprep.subr.bf16.mxu0 0
      %2059 = vmatpush1.bf16.msra.mxu0 %v1932
      %2060 = vmatprep.subr.bf16.mxu0 0
      %2061 = vmatpush1.bf16.msra.mxu0 %v1933
      %2062 = vmatprep.subr.bf16.mxu0 0
      %2063 = vmatpush1.bf16.msra.mxu0 %v1934
      %2064 = vmatprep.mubr.bf16.mxu0 %v333
      %2065 = vmatmul.mubr.bf16.gmra.mrb[0].mxu0 %v321
      %v2066 = vpop.f32.mrb[0].mxu0
      %v2067 = vadd.f32 %v2002, %v2066
      %v2068 = vpop.f32.mrb[0].mxu0
      %v2069 = vpop.f32.mrb[0].mxu0
      %v2070 = vadd.f32 %v2005, %v2069
      %v2071 = vpop.f32.mrb[0].mxu0
      %2072 = vmatprep.mubr.bf16.mxu0 %v334
      %2073 = vmatmul.mubr.bf16.gmra.mrb[0].mxu0 %v322
      %v2074 = vpop.f32.mrb[0].mxu0
      %v2075 = vadd.f32 %v2010, %v2074
      %v2076 = vpop.f32.mrb[0].mxu0
      %v2077 = vpop.f32.mrb[0].mxu0
      %v2078 = vadd.f32 %v2013, %v2077
      %v2079 = vpop.f32.mrb[0].mxu0
      %2080 = vmatprep.mubr.bf16.mxu0 %v335
      %2081 = vmatmul.mubr.bf16.gmra.mrb[0].mxu0 %v323
      %v2082 = vpop.f32.mrb[0].mxu0
      %v2083 = vadd.f32 %v2018, %v2082
      %v2084 = vpop.f32.mrb[0].mxu0
      %v2085 = vpop.f32.mrb[0].mxu0
      %v2086 = vadd.f32 %v2021, %v2085
      %v2087 = vpop.f32.mrb[0].mxu0
      %2088 = vmatprep.mubr.bf16.mxu0 %v336
      %2089 = vmatmul.mubr.bf16.gmra.mrb[0].mxu0 %v324
      %v2090 = vpop.f32.mrb[0].mxu0
      %v2091 = vadd.f32 %v2026, %v2090
      %v2092 = vpop.f32.mrb[0].mxu0
      %v2093 = vpop.f32.mrb[0].mxu0
      %v2094 = vadd.f32 %v2029, %v2093
      %v2095 = vpop.f32.mrb[0].mxu0
      %2096 = vdwg.mxu0
      %v2097 = vsel %vm723, %v2067, 0.0
      %v2098 = vsel %vm723, %v2070, 0.0
      %v2099 = vadd.f32 %v2097, %v2098
      %v2100 = vsel %vm723, %v2075, 0.0
      %v2101 = vadd.f32 %v2099, %v2100
      %v2102 = vsel %vm723, %v2078, 0.0
      %v2103 = vadd.f32 %v2101, %v2102
      %v2104 = vsel %vm723, %v2083, 0.0
      %v2105 = vadd.f32 %v2103, %v2104
      %v2106 = vsel %vm723, %v2086, 0.0
      %v2107 = vadd.f32 %v2105, %v2106
      %v2108 = vsel %vm723, %v2091, 0.0
      %v2109 = vadd.f32 %v2107, %v2108
      %v2110 = vsel %vm723, %v2094, 0.0
      %v2111 = vadd.f32 %v2109, %v2110
      %v2112 = vrot.slane %v2111, 4
      %v2113 = vadd.f32 %v2111, %v2112
      %v2114 = vrot.slane %v2113, 2
      %v2115 = vadd.f32 %v2113, %v2114
      %v2116 = vrot.slane %v2115, 1
      %v2117 = vadd.f32 %v2115, %v2116
      %v2118 = vadd.f32 %v1679, %v2117
      %v2119 = vmul.f32 %v2067, %v2067
      %v2120 = vmul.f32 %v2070, %v2070
      %v2121 = vmul.f32 %v2075, %v2075
      %v2122 = vmul.f32 %v2078, %v2078
      %v2123 = vmul.f32 %v2083, %v2083
      %v2124 = vmul.f32 %v2086, %v2086
      %v2125 = vmul.f32 %v2091, %v2091
      %v2126 = vmul.f32 %v2094, %v2094
      %v2127 = vsel %vm723, %v2119, 0.0
      %v2128 = vsel %vm723, %v2120, 0.0
      %v2129 = vadd.f32 %v2127, %v2128
      %v2130 = vsel %vm723, %v2121, 0.0
      %v2131 = vadd.f32 %v2129, %v2130
      %v2132 = vsel %vm723, %v2122, 0.0
      %v2133 = vadd.f32 %v2131, %v2132
      %v2134 = vsel %vm723, %v2123, 0.0
      %v2135 = vadd.f32 %v2133, %v2134
      %v2136 = vsel %vm723, %v2124, 0.0
      %v2137 = vadd.f32 %v2135, %v2136
      %v2138 = vsel %vm723, %v2125, 0.0
      %v2139 = vadd.f32 %v2137, %v2138
      %v2140 = vsel %vm723, %v2126, 0.0
      %v2141 = vadd.f32 %v2139, %v2140
      %v2142 = vrot.slane %v2141, 4
      %v2143 = vadd.f32 %v2141, %v2142
      %v2144 = vrot.slane %v2143, 2
      %v2145 = vadd.f32 %v2143, %v2144
      %v2146 = vrot.slane %v2145, 1
      %v2147 = vadd.f32 %v2145, %v2146
      %v2148 = vadd.f32 %v1709, %v2147
      %2157 = vrot.lane.b32.xlu0 %v2067, 64
      %v2158 = vpop.permute.xlu0 %2157
      %2159 = vrot.lane.b32.xlu0 %v2070, 64
      %v2160 = vpop.permute.xlu0 %2159
      %2161 = vrot.lane.b32.xlu0 %v2075, 64
      %v2162 = vpop.permute.xlu0 %2161
      %2163 = vrot.lane.b32.xlu0 %v2078, 64
      %v2164 = vpop.permute.xlu0 %2163
      %2165 = vrot.lane.b32.xlu0 %v2083, 64
      %v2166 = vpop.permute.xlu0 %2165
      %2167 = vrot.lane.b32.xlu0 %v2086, 64
      %v2168 = vpop.permute.xlu0 %2167
      %2169 = vrot.lane.b32.xlu0 %v2091, 64
      %v2170 = vpop.permute.xlu0 %2169
      %2171 = vrot.lane.b32.xlu0 %v2094, 64
      %v2172 = vpop.permute.xlu0 %2171
      %v2181 = vsel %vm723, %v1628, %v2158
      %v2182 = vsel %vm723, %v1631, %v2160
      %v2183 = vsel %vm723, %v1636, %v2162
      %v2184 = vsel %vm723, %v1639, %v2164
      %v2185 = vsel %vm723, %v1644, %v2166
      %v2186 = vsel %vm723, %v1647, %v2168
      %v2187 = vsel %vm723, %v1652, %v2170
      %v2188 = vsel %vm723, %v1655, %v2172
      %v2189 = vpack.c.bf16 %v2181, %v2181
      %v2190 = vpack.c.bf16 %v2182, %v2182
      %v2191 = vpack.c.bf16 %v2183, %v2183
      %v2192 = vpack.c.bf16 %v2184, %v2184
      %v2193 = vpack.c.bf16 %v2185, %v2185
      %v2194 = vpack.c.bf16 %v2186, %v2186
      %v2195 = vpack.c.bf16 %v2187, %v2187
      %v2196 = vpack.c.bf16 %v2188, %v2188
      %s2197 = scalar_lea.vmem %s177, 4
      %2198 = vst [vmem:[%s2197] sm:$0xf] %v2189
      %2199 = vst [vmem:[%s2197 + $0x8] sm:$0xf] %v2190
      %2200 = vst [vmem:[%s2197 + $0x10] sm:$0xf] %v2191
      %2201 = vst [vmem:[%s2197 + $0x18] sm:$0xf] %v2192
      %2202 = vst [vmem:[%s2197 + $0x20] sm:$0xf] %v2193
      %2203 = vst [vmem:[%s2197 + $0x28] sm:$0xf] %v2194
      %2204 = vst [vmem:[%s2197 + $0x30] sm:$0xf] %v2195
      %2205 = vst [vmem:[%s2197 + $0x38] sm:$0xf] %v2196
      %vm2206 = vcmask 1040384
      %v2207 = vsel %vm2206, %v2118, %v2148
      %vm2208 = vcmask 517120
      %2209 = vst.msk [vmem:[%s181] sm:$0x3] %vm2208, %v2207
      %p2210 = scmp.lt.s32.totalorder %s15, 1
      %s2211 = scalar_select %p2210, %s15, 1
      %s2212 = smul.addr %s2211, 16
      %s2213 = smul.addr %s2212, 4
      %s2214 = scalar_lea.vmem %s2, %s2213
      %p2215 = scmp.lt.s32.totalorder %s15, 1
      %s2216 = scalar_select %p2215, %s15, 1
      %s2217 = smul.addr %s2216, 2
      %s2218 = scalar_lea.vmem %s3, %s2217
      // Predicated region
      $region29: #{generator_forward.4} parent=27 // pred_check
        %p2219 = pneg %p80
      $region30: #{generator_forward.4} parent=27 // pred_check_branch
        %2221 = sbr.rel (%p2219) target = $region32
      $region31: #{generator_forward.4} parent=27 // pred_region
        _
      $region32: #{generator_forward.4} parent=27 // pred_fallthru
        _
      // Predicated region
      $region33: #{generator_forward.4} parent=27 // pred_check
        %p2222 = pneg %p106
      $region34: #{generator_forward.4} parent=27 // pred_check_branch
        %2224 = sbr.rel (%p2222) target = $region36
      $region35: #{generator_forward.4} parent=27 // pred_region
        _
      $region36: #{generator_forward.4} parent=27 // pred_fallthru
        _
    $region28: #{generator_forward.4} parent=5 // pred_fallthru
      _
    %p2225 = scmp.le.s32.totalorder 2, %s10
    // Predicated region
    $region37: #{generator_forward.4} parent=5 // pred_check
      %p2226 = pneg %p2225
    $region38: #{generator_forward.4} parent=5 // pred_check_branch
      %2228 = sbr.rel (%p2226) target = $region40
    $region39: #{generator_forward.4} parent=5 // pred_region
      %s2229 = ssub.s32 %s10, 2
      // Predicated region
      $region41: #{generator_forward.4} parent=39 // pred_check
        %p2230 = pneg %p86
      $region42: #{generator_forward.4} parent=39 // pred_check_branch
        %2232 = sbr.rel (%p2230) target = $region44
      $region43: #{generator_forward.4} parent=39 // pred_region
        %p2233 = scmp.lt.s32.totalorder %s16, 1
        %s2234 = scalar_select %p2233, %s16, 1
        %s2235 = smul.addr %s2234, 16
        %s2236 = smul.addr %s2235, 4
        %s2237 = scalar_lea.vmem %s2, %s2236
      $region44: #{generator_forward.4} parent=39 // pred_fallthru
        _
      // Predicated region
      $region45: #{generator_forward.4} parent=39 // pred_check
        %p2238 = pneg %p112
      $region46: #{generator_forward.4} parent=39 // pred_check_branch
        %2240 = sbr.rel (%p2238) target = $region48
      $region47: #{generator_forward.4} parent=39 // pred_region
        %p2241 = scmp.lt.s32.totalorder %s16, 1
        %s2242 = scalar_select %p2241, %s16, 1
        %s2243 = smul.addr %s2242, 2
        %s2244 = scalar_lea.vmem %s3, %s2243
      $region48: #{generator_forward.4} parent=39 // pred_fallthru
        _
    $region40: #{generator_forward.4} parent=5 // pred_fallthru
      _
  $region6: #{generator_forward.4} parent=0 // loop_footer
    %s14 = sadd.s32 1, %s10
  $region7: #{generator_forward.4} parent=0 // loop_footer_branch
    %9 = sbr.rel target = $region3
  $region8: #{generator_forward.4} parent=0 // loop_exit
    _

// kernel: generator_forward.5
$region0: #{generator_forward.5}
  #allocation0 [shape = 'u32[]', space=smem, size = 0x4, offset = 0x4, fixed_abs, tag = 'smem constant byte address 0x4 - core index']
  #allocation1 [shape = 'u32[144,128]{1,0:T(1,128)}', space=vmem, size = 0x12000, scoped, tag = 'internal scratch']
  #allocation2 [shape = 'f32[1,18,18,64]{3,2,1,0:T(8,128)}', space=vmem, size = 0x36000, scoped, tag = 'scratch operand']
  %s0 = inlined_call_operand.vmem [shape: bf16[2,16,16,64], index: 0, kind: input, shape index: {}]
  %s1 = inlined_call_operand.vmem [shape: f32[1,64], index: 1, kind: input, shape index: {}]
  %s2 = inlined_call_operand.vmem [shape: f32[1,64], index: 2, kind: input, shape index: {}]
  %s3 = inlined_call_operand.vmem [shape: bf16[2,2,3,256], index: 3, kind: input, shape index: {}]
  %s4 = inlined_call_operand.vmem [shape: f32[2,2,2,3,256], index: 4, kind: output, shape index: {}]
  %s5 = sld [smem:[#allocation0]]
  $region49: #{generator_forward.5} parent=0
    _
  %s7 = ssub.s32 1, %s5
  %s8 = scalar_select 0, %s7, %s5
  loop: start=0, step=1, limit=4
  $region2: #{generator_forward.5} parent=0 // loop_pre_header
    _
  $region3: #{generator_forward.5} parent=0 // loop_header
    %s10 = sphi 0, %s14
    %p11 = scmp.ge.s32.totalorder %s10, 4
    %s20 = sphi 0, %s22
    %s23 = sphi 0, %s20
    %s24 = sphi 0, %s23
    %s40 = sphi 0, %s24
    %s44 = sphi 0, %s44
    %s46 = sphi 0, %s44
    %s47 = sphi 0, %s46
    %s61 = sphi 0, %s47
    %s65 = sphi 0, %s65
    %s67 = sphi 0, %s65
    %s68 = sphi 0, %s67
    %s82 = sphi 0, %s68
    %s86 = sphi 0, %s86
    %s88 = sphi 0, %s86
    %s89 = sphi 0, %s88
    %s103 = sphi 0, %s89
    %s109 = sphi 0, %s111
    %s112 = sphi 0, %s109
    %s113 = sphi 0, %s112
    %s129 = sphi 0, %s113
  $region4: #{generator_forward.5} parent=0 // loop_header_branch
    %13 = sbr.rel (%p11) target = $region8
  $region5: #{generator_forward.5} parent=0 // loop_body
    %s15 = ssub.s32 %s10, 1
    %s16 = ssub.s32 %s10, 2
    %s17 = sadd.s32 %s10, 1
    %s18 = ssub.s32 %s10, %s17
    %p19 = scmp.eq.s32.totalorder %s18, 0
    %s21 = sadd.s32 %s20, 1
    %s22 = scalar_select %p19, %s20, %s21
    %p25 = pneg %p19
    %p26 = scmp.eq.s32.totalorder %s10, 1
    %p27 = por %p25, %p26
    %p28 = scmp.ne.s32.totalorder %s20, %s23
    %p29 = scmp.eq.s32.totalorder %s10, 0
    %p30 = por %p28, %p29
    %p31 = scmp.ne.s32.totalorder %s20, %s23
    %p32 = scmp.eq.s32.totalorder %s15, 1
    %p33 = por %p31, %p32
    %p34 = scmp.ne.s32.totalorder %s23, %s24
    %p35 = scmp.eq.s32.totalorder %s15, 0
    %p36 = por %p34, %p35
    %p37 = scmp.ne.s32.totalorder %s23, %s24
    %p38 = scmp.eq.s32.totalorder %s16, 1
    %p39 = por %p37, %p38
    %p41 = scmp.ne.s32.totalorder %s24, %s40
    %p42 = scmp.eq.s32.totalorder %s16, 0
    %p43 = por %p41, %p42
    %s45 = sadd.s32 %s44, 1
    %p48 = scmp.eq.s32.totalorder %s10, 1
    %p49 = scmp.ne.s32.totalorder %s44, %s46
    %p50 = scmp.eq.s32.totalorder %s10, 0
    %p51 = por %p49, %p50
    %p52 = scmp.ne.s32.totalorder %s44, %s46
    %p53 = scmp.eq.s32.totalorder %s15, 1
    %p54 = por %p52, %p53
    %p55 = scmp.ne.s32.totalorder %s46, %s47
    %p56 = scmp.eq.s32.totalorder %s15, 0
    %p57 = por %p55, %p56
    %p58 = scmp.ne.s32.totalorder %s46, %s47
    %p59 = scmp.eq.s32.totalorder %s16, 1
    %p60 = por %p58, %p59
    %p62 = scmp.ne.s32.totalorder %s47, %s61
    %p63 = scmp.eq.s32.totalorder %s16, 0
    %p64 = por %p62, %p63
    %s66 = sadd.s32 %s65, 1
    %p69 = scmp.eq.s32.totalorder %s10, 1
    %p70 = scmp.ne.s32.totalorder %s65, %s67
    %p71 = scmp.eq.s32.totalorder %s10, 0
    %p72 = por %p70, %p71
    %p73 = scmp.ne.s32.totalorder %s65, %s67
    %p74 = scmp.eq.s32.totalorder %s15, 1
    %p75 = por %p73, %p74
    %p76 = scmp.ne.s32.totalorder %s67, %s68
    %p77 = scmp.eq.s32.totalorder %s15, 0
    %p78 = por %p76, %p77
    %p79 = scmp.ne.s32.totalorder %s67, %s68
    %p80 = scmp.eq.s32.totalorder %s16, 1
    %p81 = por %p79, %p80
    %p83 = scmp.ne.s32.totalorder %s68, %s82
    %p84 = scmp.eq.s32.totalorder %s16, 0
    %p85 = por %p83, %p84
    %s87 = sadd.s32 %s86, 1
    %p90 = scmp.eq.s32.totalorder %s10, 1
    %p91 = scmp.ne.s32.totalorder %s86, %s88
    %p92 = scmp.eq.s32.totalorder %s10, 0
    %p93 = por %p91, %p92
    %p94 = scmp.ne.s32.totalorder %s86, %s88
    %p95 = scmp.eq.s32.totalorder %s15, 1
    %p96 = por %p94, %p95
    %p97 = scmp.ne.s32.totalorder %s88, %s89
    %p98 = scmp.eq.s32.totalorder %s15, 0
    %p99 = por %p97, %p98
    %p100 = scmp.ne.s32.totalorder %s88, %s89
    %p101 = scmp.eq.s32.totalorder %s16, 1
    %p102 = por %p100, %p101
    %p104 = scmp.ne.s32.totalorder %s89, %s103
    %p105 = scmp.eq.s32.totalorder %s16, 0
    %p106 = por %p104, %p105
    %s107 = ssub.s32 %s10, %s17
    %p108 = scmp.eq.s32.totalorder %s107, 0
    %s110 = sadd.s32 %s109, 1
    %s111 = scalar_select %p108, %s109, %s110
    %p114 = pneg %p108
    %p115 = scmp.eq.s32.totalorder %s10, 1
    %p116 = por %p114, %p115
    %p117 = scmp.ne.s32.totalorder %s109, %s112
    %p118 = scmp.eq.s32.totalorder %s10, 0
    %p119 = por %p117, %p118
    %p120 = scmp.ne.s32.totalorder %s109, %s112
    %p121 = scmp.eq.s32.totalorder %s15, 1
    %p122 = por %p120, %p121
    %p123 = scmp.ne.s32.totalorder %s112, %s113
    %p124 = scmp.eq.s32.totalorder %s15, 0
    %p125 = por %p123, %p124
    %p126 = scmp.ne.s32.totalorder %s112, %s113
    %p127 = scmp.eq.s32.totalorder %s16, 1
    %p128 = por %p126, %p127
    %p130 = scmp.ne.s32.totalorder %s113, %s129
    %p131 = scmp.eq.s32.totalorder %s16, 0
    %p132 = por %p130, %p131
    %p133 = scmp.le.s32.totalorder 1, %s10
    %p134 = scmp.lt.s32.totalorder %s10, 3
    %p135 = pnand %p133, %p134
    %p136 = pneg %p135
    // Predicated region
    $region9: #{generator_forward.5} parent=5 // pred_check
      _
    $region10: #{generator_forward.5} parent=5 // pred_check_branch
      %138 = sbr.rel (%p135) target = $region12
    $region11: #{generator_forward.5} parent=5 // pred_region
      %s139 = ssub.s32 %s10, 1
      // Predicated region
      $region13: #{generator_forward.5} parent=11 // pred_check
        %p140 = pneg %p57
      $region14: #{generator_forward.5} parent=11 // pred_check_branch
        %142 = sbr.rel (%p140) target = $region16
      $region15: #{generator_forward.5} parent=11 // pred_region
        _
      $region16: #{generator_forward.5} parent=11 // pred_fallthru
        _
      // Predicated region
      $region17: #{generator_forward.5} parent=11 // pred_check
        %p143 = pneg %p78
      $region18: #{generator_forward.5} parent=11 // pred_check_branch
        %145 = sbr.rel (%p143) target = $region20
      $region19: #{generator_forward.5} parent=11 // pred_region
        _
      $region20: #{generator_forward.5} parent=11 // pred_fallthru
        _
      // Predicated region
      $region21: #{generator_forward.5} parent=11 // pred_check
        %p146 = pneg %p99
      $region22: #{generator_forward.5} parent=11 // pred_check_branch
        %148 = sbr.rel (%p146) target = $region24
      $region23: #{generator_forward.5} parent=11 // pred_region
        _
      $region24: #{generator_forward.5} parent=11 // pred_fallthru
        _
    $region12: #{generator_forward.5} parent=5 // pred_fallthru
      _
    %p149 = scmp.lt.s32.totalorder %s10, 2
    // Predicated region
    $region25: #{generator_forward.5} parent=5 // pred_check
      %p150 = pneg %p149
    $region26: #{generator_forward.5} parent=5 // pred_check_branch
      %152 = sbr.rel (%p150) target = $region28
    $region27: #{generator_forward.5} parent=5 // pred_region
      // Predicated region
      $region29: #{generator_forward.5} parent=27 // pred_check
        %p153 = pneg %p30
      $region30: #{generator_forward.5} parent=27 // pred_check_branch
        %155 = sbr.rel (%p153) target = $region32
      $region31: #{generator_forward.5} parent=27 // pred_region
        %p156 = scmp.lt.s32.totalorder %s10, 1
        %s157 = scalar_select %p156, %s10, 1
        %s158 = smul.addr %s157, 32
        %s159 = smul.addr %s158, 4
        %s160 = scalar_lea.vmem %s0, %s159
      $region32: #{generator_forward.5} parent=27 // pred_fallthru
        _
    $region28: #{generator_forward.5} parent=5 // pred_fallthru
      _
    %p161 = scmp.le.s32.totalorder 1, %s10
    %p162 = scmp.lt.s32.totalorder %s10, 3
    %p163 = pnand %p161, %p162
    %p164 = pneg %p163
    // Predicated region
    $region33: #{generator_forward.5} parent=5 // pred_check
      _
    $region34: #{generator_forward.5} parent=5 // pred_check_branch
      %166 = sbr.rel (%p163) target = $region36
    $region35: #{generator_forward.5} parent=5 // pred_region
      %s167 = ssub.s32 %s10, 1
      %p168 = scmp.lt.s32.totalorder %s15, 1
      %s169 = scalar_select %p168, %s15, 1
      %s170 = smul.addr %s169, 32
      %s171 = smul.addr %s170, 4
      %s172 = scalar_lea.vmem %s0, %s171
      %p173 = pneg %p36
      %p174 = pneg %p33
      %p175 = pneg %p57
      %p176 = pneg %p54
      %p177 = pneg %p78
      %p178 = pneg %p75
      %p179 = pneg %p99
      %p180 = pneg %p96
      %p181 = pneg %p125
      %p182 = pneg %p122
      %p183 = scmp.lt.s32.totalorder %s15, 1
      %s184 = scalar_select %p183, %s15, 1
      %s185 = smul.addr %s184, 8
      %s186 = smul.addr %s185, 4
      %s187 = scalar_lea.vmem %s4, %s186
      %p188 = scmp.lt.s32.totalorder %s15, 1
      %s189 = scalar_select %p188, %s15, 1
      %s190 = smul.addr %s189, 32
      %s191 = smul.addr %s190, 4
      %s192 = scalar_lea.vmem %s0, %s191
      %p193 = scmp.lt.s32.totalorder %s15, 1
      %s194 = scalar_select %p193, %s15, 1
      %s195 = smul.addr %s194, 8
      %s196 = smul.addr %s195, 4
      %s197 = scalar_lea.vmem %s4, %s196
      %vm198 = vcmask 523264
      %199 = vst.msk [vmem:[#allocation2] sm:$0xff] %vm198, 0.0
      %200 = vst.msk [vmem:[#allocation2 + $0x8] sm:$0xff] %vm198, 0.0
      %vm201 = vcmask 517120
      %202 = vst.msk [vmem:[#allocation2 + $0x10] sm:$0x3] %vm201, 0.0
      %203 = vst.msk [vmem:[#allocation2 + $0x18] sm:$0xff] %vm198, 0.0
      %204 = vst.msk [vmem:[#allocation2 + $0x20] sm:$0xff] %vm198, 0.0
      %205 = vst.msk [vmem:[#allocation2 + $0x28] sm:$0x3] %vm201, 0.0
      %206 = vst.msk [vmem:[#allocation2 + $0x30] sm:$0xff] %vm198, 0.0
      %207 = vst.msk [vmem:[#allocation2 + $0x38] sm:$0xff] %vm198, 0.0
      %208 = vst.msk [vmem:[#allocation2 + $0x40] sm:$0x3] %vm201, 0.0
      %209 = vst.msk [vmem:[#allocation2 + $0x48] sm:$0xff] %vm198, 0.0
      %210 = vst.msk [vmem:[#allocation2 + $0x50] sm:$0xff] %vm198, 0.0
      %211 = vst.msk [vmem:[#allocation2 + $0x58] sm:$0x3] %vm201, 0.0
      %212 = vst.msk [vmem:[#allocation2 + $0x60] sm:$0xff] %vm198, 0.0
      %213 = vst.msk [vmem:[#allocation2 + $0x68] sm:$0xff] %vm198, 0.0
      %214 = vst.msk [vmem:[#allocation2 + $0x70] sm:$0x3] %vm201, 0.0
      %215 = vst.msk [vmem:[#allocation2 + $0x78] sm:$0xff] %vm198, 0.0
      %216 = vst.msk [vmem:[#allocation2 + $0x80] sm:$0xff] %vm198, 0.0
      %217 = vst.msk [vmem:[#allocation2 + $0x88] sm:$0x3] %vm201, 0.0
      %218 = vst.msk [vmem:[#allocation2 + $0x90] sm:$0xff] %vm198, 0.0
      %219 = vst.msk [vmem:[#allocation2 + $0x98] sm:$0xff] %vm198, 0.0
      %220 = vst.msk [vmem:[#allocation2 + $0xa0] sm:$0x3] %vm201, 0.0
      %221 = vst.msk [vmem:[#allocation2 + $0xa8] sm:$0xff] %vm198, 0.0
      %222 = vst.msk [vmem:[#allocation2 + $0xb0] sm:$0xff] %vm198, 0.0
      %223 = vst.msk [vmem:[#allocation2 + $0xb8] sm:$0x3] %vm201, 0.0
      %224 = vst.msk [vmem:[#allocation2 + $0xc0] sm:$0xff] %vm198, 0.0
      %225 = vst.msk [vmem:[#allocation2 + $0xc8] sm:$0xff] %vm198, 0.0
      %226 = vst.msk [vmem:[#allocation2 + $0xd0] sm:$0x3] %vm201, 0.0
      %227 = vst.msk [vmem:[#allocation2 + $0xd8] sm:$0xff] %vm198, 0.0
      %228 = vst.msk [vmem:[#allocation2 + $0xe0] sm:$0xff] %vm198, 0.0
      %229 = vst.msk [vmem:[#allocation2 + $0xe8] sm:$0x3] %vm201, 0.0
      %230 = vst.msk [vmem:[#allocation2 + $0xf0] sm:$0xff] %vm198, 0.0
      %231 = vst.msk [vmem:[#allocation2 + $0xf8] sm:$0xff] %vm198, 0.0
      %232 = vst.msk [vmem:[#allocation2 + $0x100] sm:$0x3] %vm201, 0.0
      %233 = vst.msk [vmem:[#allocation2 + $0x108] sm:$0xff] %vm198, 0.0
      %234 = vst.msk [vmem:[#allocation2 + $0x110] sm:$0xff] %vm198, 0.0
      %235 = vst.msk [vmem:[#allocation2 + $0x118] sm:$0x3] %vm201, 0.0
      %236 = vst.msk [vmem:[#allocation2 + $0x120] sm:$0xff] %vm198, 0.0
      %237 = vst.msk [vmem:[#allocation2 + $0x128] sm:$0xff] %vm198, 0.0
      %238 = vst.msk [vmem:[#allocation2 + $0x130] sm:$0x3] %vm201, 0.0
      %239 = vst.msk [vmem:[#allocation2 + $0x138] sm:$0xff] %vm198, 0.0
      %240 = vst.msk [vmem:[#allocation2 + $0x140] sm:$0xff] %vm198, 0.0
      %241 = vst.msk [vmem:[#allocation2 + $0x148] sm:$0x3] %vm201, 0.0
      %242 = vst.msk [vmem:[#allocation2 + $0x150] sm:$0xff] %vm198, 0.0
      %243 = vst.msk [vmem:[#allocation2 + $0x158] sm:$0xff] %vm198, 0.0
      %244 = vst.msk [vmem:[#allocation2 + $0x160] sm:$0x3] %vm201, 0.0
      %245 = vst.msk [vmem:[#allocation2 + $0x168] sm:$0xff] %vm198, 0.0
      %246 = vst.msk [vmem:[#allocation2 + $0x170] sm:$0xff] %vm198, 0.0
      %247 = vst.msk [vmem:[#allocation2 + $0x178] sm:$0x3] %vm201, 0.0
      %248 = vst.msk [vmem:[#allocation2 + $0x180] sm:$0xff] %vm198, 0.0
      %249 = vst.msk [vmem:[#allocation2 + $0x188] sm:$0xff] %vm198, 0.0
      %250 = vst.msk [vmem:[#allocation2 + $0x190] sm:$0x3] %vm201, 0.0
      %251 = vst.msk [vmem:[#allocation2 + $0x198] sm:$0xff] %vm198, 0.0
      %252 = vst.msk [vmem:[#allocation2 + $0x1a0] sm:$0xff] %vm198, 0.0
      %253 = vst.msk [vmem:[#allocation2 + $0x1a8] sm:$0x3] %vm201, 0.0
      %v254 = vld [vmem:[%s192] sm:$0xf]
      %v255 = vld [vmem:[%s192 + $0x4] sm:$0xf]
      %v256 = vld [vmem:[%s192 + $0x8] sm:$0xf]
      %v257 = vld [vmem:[%s192 + $0xc] sm:$0xf]
      %v258 = vld [vmem:[%s192 + $0x10] sm:$0xf]
      %v259 = vld [vmem:[%s192 + $0x14] sm:$0xf]
      %v260 = vld [vmem:[%s192 + $0x18] sm:$0xf]
      %v261 = vld [vmem:[%s192 + $0x1c] sm:$0xf]
      %v262 = vld [vmem:[%s192 + $0x20] sm:$0xf]
      %v263 = vld [vmem:[%s192 + $0x24] sm:$0xf]
      %v264 = vld [vmem:[%s192 + $0x28] sm:$0xf]
      %v265 = vld [vmem:[%s192 + $0x2c] sm:$0xf]
      %v266 = vld [vmem:[%s192 + $0x30] sm:$0xf]
      %v267 = vld [vmem:[%s192 + $0x34] sm:$0xf]
      %v268 = vld [vmem:[%s192 + $0x38] sm:$0xf]
      %v269 = vld [vmem:[%s192 + $0x3c] sm:$0xf]
      %v270 = vld [vmem:[%s192 + $0x40] sm:$0xf]
      %v271 = vld [vmem:[%s192 + $0x44] sm:$0xf]
      %v272 = vld [vmem:[%s192 + $0x48] sm:$0xf]
      %v273 = vld [vmem:[%s192 + $0x4c] sm:$0xf]
      %v274 = vld [vmem:[%s192 + $0x50] sm:$0xf]
      %v275 = vld [vmem:[%s192 + $0x54] sm:$0xf]
      %v276 = vld [vmem:[%s192 + $0x58] sm:$0xf]
      %v277 = vld [vmem:[%s192 + $0x5c] sm:$0xf]
      %v278 = vld [vmem:[%s192 + $0x60] sm:$0xf]
      %v279 = vld [vmem:[%s192 + $0x64] sm:$0xf]
      %v280 = vld [vmem:[%s192 + $0x68] sm:$0xf]
      %v281 = vld [vmem:[%s192 + $0x6c] sm:$0xf]
      %v282 = vld [vmem:[%s192 + $0x70] sm:$0xf]
      %v283 = vld [vmem:[%s192 + $0x74] sm:$0xf]
      %v284 = vld [vmem:[%s192 + $0x78] sm:$0xf]
      %v285 = vld [vmem:[%s192 + $0x7c] sm:$0xf]
      %v286 = vunpack.c.l.bf16 %v254
      %v287 = vunpack.c.l.bf16 %v255
      %v288 = vunpack.c.l.bf16 %v256
      %v289 = vunpack.c.l.bf16 %v257
      %v290 = vunpack.c.l.bf16 %v258
      %v291 = vunpack.c.l.bf16 %v259
      %v292 = vunpack.c.l.bf16 %v260
      %v293 = vunpack.c.l.bf16 %v261
      %v294 = vunpack.c.l.bf16 %v262
      %v295 = vunpack.c.l.bf16 %v263
      %v296 = vunpack.c.l.bf16 %v264
      %v297 = vunpack.c.l.bf16 %v265
      %v298 = vunpack.c.l.bf16 %v266
      %v299 = vunpack.c.l.bf16 %v267
      %v300 = vunpack.c.l.bf16 %v268
      %v301 = vunpack.c.l.bf16 %v269
      %v302 = vunpack.c.l.bf16 %v270
      %v303 = vunpack.c.l.bf16 %v271
      %v304 = vunpack.c.l.bf16 %v272
      %v305 = vunpack.c.l.bf16 %v273
      %v306 = vunpack.c.l.bf16 %v274
      %v307 = vunpack.c.l.bf16 %v275
      %v308 = vunpack.c.l.bf16 %v276
      %v309 = vunpack.c.l.bf16 %v277
      %v310 = vunpack.c.l.bf16 %v278
      %v311 = vunpack.c.l.bf16 %v279
      %v312 = vunpack.c.l.bf16 %v280
      %v313 = vunpack.c.l.bf16 %v281
      %v314 = vunpack.c.l.bf16 %v282
      %v315 = vunpack.c.l.bf16 %v283
      %v316 = vunpack.c.l.bf16 %v284
      %v317 = vunpack.c.l.bf16 %v285
      %v318 = vld [vmem:[%s1] sm:$0x1]
      %v320 = vlaneseq
      %v321 = vshrl.u32 %v320, 7
      %v322 = vsub.s32 0, %v321
      %v323 = vrot.slane %v318, %v322
      %v325 = vmul.f32 %v286, %v323
      %v326 = vmul.f32 %v287, %v323
      %v327 = vmul.f32 %v288, %v323
      %v328 = vmul.f32 %v289, %v323
      %v329 = vmul.f32 %v290, %v323
      %v330 = vmul.f32 %v291, %v323
      %v331 = vmul.f32 %v292, %v323
      %v332 = vmul.f32 %v293, %v323
      %v333 = vmul.f32 %v294, %v323
      %v334 = vmul.f32 %v295, %v323
      %v335 = vmul.f32 %v296, %v323
      %v336 = vmul.f32 %v297, %v323
      %v337 = vmul.f32 %v298, %v323
      %v338 = vmul.f32 %v299, %v323
      %v339 = vmul.f32 %v300, %v323
      %v340 = vmul.f32 %v301, %v323
      %v341 = vmul.f32 %v302, %v323
      %v342 = vmul.f32 %v303, %v323
      %v343 = vmul.f32 %v304, %v323
      %v344 = vmul.f32 %v305, %v323
      %v345 = vmul.f32 %v306, %v323
      %v346 = vmul.f32 %v307, %v323
      %v347 = vmul.f32 %v308, %v323
      %v348 = vmul.f32 %v309, %v323
      %v349 = vmul.f32 %v310, %v323
      %v350 = vmul.f32 %v311, %v323
      %v351 = vmul.f32 %v312, %v323
      %v352 = vmul.f32 %v313, %v323
      %v353 = vmul.f32 %v314, %v323
      %v354 = vmul.f32 %v315, %v323
      %v355 = vmul.f32 %v316, %v323
      %v356 = vmul.f32 %v317, %v323
      %v357 = vld [vmem:[%s2] sm:$0x1]
      %v359 = vlaneseq
      %v360 = vshrl.u32 %v359, 7
      %v361 = vsub.s32 0, %v360
      %v362 = vrot.slane %v357, %v361
      %v364 = vadd.f32 %v325, %v362
      %v365 = vadd.f32 %v326, %v362
      %v366 = vadd.f32 %v327, %v362
      %v367 = vadd.f32 %v328, %v362
      %v368 = vadd.f32 %v329, %v362
      %v369 = vadd.f32 %v330, %v362
      %v370 = vadd.f32 %v331, %v362
      %v371 = vadd.f32 %v332, %v362
      %v372 = vadd.f32 %v333, %v362
      %v373 = vadd.f32 %v334, %v362
      %v374 = vadd.f32 %v335, %v362
      %v375 = vadd.f32 %v336, %v362
      %v376 = vadd.f32 %v337, %v362
      %v377 = vadd.f32 %v338, %v362
      %v378 = vadd.f32 %v339, %v362
      %v379 = vadd.f32 %v340, %v362
      %v380 = vadd.f32 %v341, %v362
      %v381 = vadd.f32 %v342, %v362
      %v382 = vadd.f32 %v343, %v362
      %v383 = vadd.f32 %v344, %v362
      %v384 = vadd.f32 %v345, %v362
      %v385 = vadd.f32 %v346, %v362
      %v386 = vadd.f32 %v347, %v362
      %v387 = vadd.f32 %v348, %v362
      %v388 = vadd.f32 %v349, %v362
      %v389 = vadd.f32 %v350, %v362
      %v390 = vadd.f32 %v351, %v362
      %v391 = vadd.f32 %v352, %v362
      %v392 = vadd.f32 %v353, %v362
      %v393 = vadd.f32 %v354, %v362
      %v394 = vadd.f32 %v355, %v362
      %v395 = vadd.f32 %v356, %v362
      %vm396 = vcmp.gt.f32.partialorder %v364, 0.0
      %vm397 = vcmp.gt.f32.partialorder %v365, 0.0
      %vm398 = vcmp.gt.f32.partialorder %v366, 0.0
      %vm399 = vcmp.gt.f32.partialorder %v367, 0.0
      %vm400 = vcmp.gt.f32.partialorder %v368, 0.0
      %vm401 = vcmp.gt.f32.partialorder %v369, 0.0
      %vm402 = vcmp.gt.f32.partialorder %v370, 0.0
      %vm403 = vcmp.gt.f32.partialorder %v371, 0.0
      %vm404 = vcmp.gt.f32.partialorder %v372, 0.0
      %vm405 = vcmp.gt.f32.partialorder %v373, 0.0
      %vm406 = vcmp.gt.f32.partialorder %v374, 0.0
      %vm407 = vcmp.gt.f32.partialorder %v375, 0.0
      %vm408 = vcmp.gt.f32.partialorder %v376, 0.0
      %vm409 = vcmp.gt.f32.partialorder %v377, 0.0
      %vm410 = vcmp.gt.f32.partialorder %v378, 0.0
      %vm411 = vcmp.gt.f32.partialorder %v379, 0.0
      %vm412 = vcmp.gt.f32.partialorder %v380, 0.0
      %vm413 = vcmp.gt.f32.partialorder %v381, 0.0
      %vm414 = vcmp.gt.f32.partialorder %v382, 0.0
      %vm415 = vcmp.gt.f32.partialorder %v383, 0.0
      %vm416 = vcmp.gt.f32.partialorder %v384, 0.0
      %vm417 = vcmp.gt.f32.partialorder %v385, 0.0
      %vm418 = vcmp.gt.f32.partialorder %v386, 0.0
      %vm419 = vcmp.gt.f32.partialorder %v387, 0.0
      %vm420 = vcmp.gt.f32.partialorder %v388, 0.0
      %vm421 = vcmp.gt.f32.partialorder %v389, 0.0
      %vm422 = vcmp.gt.f32.partialorder %v390, 0.0
      %vm423 = vcmp.gt.f32.partialorder %v391, 0.0
      %vm424 = vcmp.gt.f32.partialorder %v392, 0.0
      %vm425 = vcmp.gt.f32.partialorder %v393, 0.0
      %vm426 = vcmp.gt.f32.partialorder %v394, 0.0
      %vm427 = vcmp.gt.f32.partialorder %v395, 0.0
      %v428 = vmul.f32 %v364, 0.2
      %v429 = vmul.f32 %v365, 0.2
      %v430 = vmul.f32 %v366, 0.2
      %v431 = vmul.f32 %v367, 0.2
      %v432 = vmul.f32 %v368, 0.2
      %v433 = vmul.f32 %v369, 0.2
      %v434 = vmul.f32 %v370, 0.2
      %v435 = vmul.f32 %v371, 0.2
      %v436 = vmul.f32 %v372, 0.2
      %v437 = vmul.f32 %v373, 0.2
      %v438 = vmul.f32 %v374, 0.2
      %v439 = vmul.f32 %v375, 0.2
      %v440 = vmul.f32 %v376, 0.2
      %v441 = vmul.f32 %v377, 0.2
      %v442 = vmul.f32 %v378, 0.2
      %v443 = vmul.f32 %v379, 0.2
      %v444 = vmul.f32 %v380, 0.2
      %v445 = vmul.f32 %v381, 0.2
      %v446 = vmul.f32 %v382, 0.2
      %v447 = vmul.f32 %v383, 0.2
      %v448 = vmul.f32 %v384, 0.2
      %v449 = vmul.f32 %v385, 0.2
      %v450 = vmul.f32 %v386, 0.2
      %v451 = vmul.f32 %v387, 0.2
      %v452 = vmul.f32 %v388, 0.2
      %v453 = vmul.f32 %v389, 0.2
      %v454 = vmul.f32 %v390, 0.2
      %v455 = vmul.f32 %v391, 0.2
      %v456 = vmul.f32 %v392, 0.2
      %v457 = vmul.f32 %v393, 0.2
      %v458 = vmul.f32 %v394, 0.2
      %v459 = vmul.f32 %v395, 0.2
      %v460 = vsel %vm396, %v364, %v428
      %v461 = vsel %vm397, %v365, %v429
      %v462 = vsel %vm398, %v366, %v430
      %v463 = vsel %vm399, %v367, %v431
      %v464 = vsel %vm400, %v368, %v432
      %v465 = vsel %vm401, %v369, %v433
      %v466 = vsel %vm402, %v370, %v434
      %v467 = vsel %vm403, %v371, %v435
      %v468 = vsel %vm404, %v372, %v436
      %v469 = vsel %vm405, %v373, %v437
      %v470 = vsel %vm406, %v374, %v438
      %v471 = vsel %vm407, %v375, %v439
      %v472 = vsel %vm408, %v376, %v440
      %v473 = vsel %vm409, %v377, %v441
      %v474 = vsel %vm410, %v378, %v442
      %v475 = vsel %vm411, %v379, %v443
      %v476 = vsel %vm412, %v380, %v444
      %v477 = vsel %vm413, %v381, %v445
      %v478 = vsel %vm414, %v382, %v446
      %v479 = vsel %vm415, %v383, %v447
      %v480 = vsel %vm416, %v384, %v448
      %v481 = vsel %vm417, %v385, %v449
      %v482 = vsel %vm418, %v386, %v450
      %v483 = vsel %vm419, %v387, %v451
      %v484 = vsel %vm420, %v388, %v452
      %v485 = vsel %vm421, %v389, %v453
      %v486 = vsel %vm422, %v390, %v454
      %v487 = vsel %vm423, %v391, %v455
      %v488 = vsel %vm424, %v392, %v456
      %v489 = vsel %vm425, %v393, %v457
      %v490 = vsel %vm426, %v394, %v458
      %v491 = vsel %vm427, %v395, %v459
      %s492 = scalar_lea.vmem [#allocation2], 24
      %493 = vst.msk [vmem:[%s492 + $0x1] sm:$0xff] %vm198, %v460
      %494 = vst.msk [vmem:[%s492 + $0x9] sm:$0xff] %vm198, %v461
      %495 = vst.msk [vmem:[%s492 + $0x19] sm:$0xff] %vm198, %v462
      %496 = vst.msk [vmem:[%s492 + $0x21] sm:$0xff] %vm198, %v463
      %497 = vst.msk [vmem:[%s492 + $0x31] sm:$0xff] %vm198, %v464
      %498 = vst.msk [vmem:[%s492 + $0x39] sm:$0xff] %vm198, %v465
      %499 = vst.msk [vmem:[%s492 + $0x49] sm:$0xff] %vm198, %v466
      %500 = vst.msk [vmem:[%s492 + $0x51] sm:$0xff] %vm198, %v467
      %501 = vst.msk [vmem:[%s492 + $0x61] sm:$0xff] %vm198, %v468
      %502 = vst.msk [vmem:[%s492 + $0x69] sm:$0xff] %vm198, %v469
      %503 = vst.msk [vmem:[%s492 + $0x79] sm:$0xff] %vm198, %v470
      %504 = vst.msk [vmem:[%s492 + $0x81] sm:$0xff] %vm198, %v471
      %505 = vst.msk [vmem:[%s492 + $0x91] sm:$0xff] %vm198, %v472
      %506 = vst.msk [vmem:[%s492 + $0x99] sm:$0xff] %vm198, %v473
      %507 = vst.msk [vmem:[%s492 + $0xa9] sm:$0xff] %vm198, %v474
      %508 = vst.msk [vmem:[%s492 + $0xb1] sm:$0xff] %vm198, %v475
      %509 = vst.msk [vmem:[%s492 + $0xc1] sm:$0xff] %vm198, %v476
      %510 = vst.msk [vmem:[%s492 + $0xc9] sm:$0xff] %vm198, %v477
      %511 = vst.msk [vmem:[%s492 + $0xd9] sm:$0xff] %vm198, %v478
      %512 = vst.msk [vmem:[%s492 + $0xe1] sm:$0xff] %vm198, %v479
      %513 = vst.msk [vmem:[%s492 + $0xf1] sm:$0xff] %vm198, %v480
      %514 = vst.msk [vmem:[%s492 + $0xf9] sm:$0xff] %vm198, %v481
      %515 = vst.msk [vmem:[%s492 + $0x109] sm:$0xff] %vm198, %v482
      %516 = vst.msk [vmem:[%s492 + $0x111] sm:$0xff] %vm198, %v483
      %517 = vst.msk [vmem:[%s492 + $0x121] sm:$0xff] %vm198, %v484
      %518 = vst.msk [vmem:[%s492 + $0x129] sm:$0xff] %vm198, %v485
      %519 = vst.msk [vmem:[%s492 + $0x139] sm:$0xff] %vm198, %v486
      %520 = vst.msk [vmem:[%s492 + $0x141] sm:$0xff] %vm198, %v487
      %521 = vst.msk [vmem:[%s492 + $0x151] sm:$0xff] %vm198, %v488
      %522 = vst.msk [vmem:[%s492 + $0x159] sm:$0xff] %vm198, %v489
      %523 = vst.msk [vmem:[%s492 + $0x169] sm:$0xff] %vm198, %v490
      %524 = vst.msk [vmem:[%s492 + $0x171] sm:$0xff] %vm198, %v491
      %v525 = vld [vmem:[#allocation2] sm:$0xff]
      %v526 = vld [vmem:[#allocation2 + $0x8] sm:$0xff]
      %v527 = vld [vmem:[#allocation2 + $0x18] sm:$0xff]
      %v528 = vld [vmem:[#allocation2 + $0x20] sm:$0xff]
      %v529 = vld [vmem:[#allocation2 + $0x30] sm:$0xff]
      %v530 = vld [vmem:[#allocation2 + $0x38] sm:$0xff]
      %v531 = vld [vmem:[#allocation2 + $0x48] sm:$0xff]
      %v532 = vld [vmem:[#allocation2 + $0x50] sm:$0xff]
      %v533 = vld [vmem:[#allocation2 + $0x60] sm:$0xff]
      %v534 = vld [vmem:[#allocation2 + $0x68] sm:$0xff]
      %v535 = vld [vmem:[#allocation2 + $0x78] sm:$0xff]
      %v536 = vld [vmem:[#allocation2 + $0x80] sm:$0xff]
      %v537 = vld [vmem:[#allocation2 + $0x90] sm:$0xff]
      %v538 = vld [vmem:[#allocation2 + $0x98] sm:$0xff]
      %v539 = vld [vmem:[#allocation2 + $0xa8] sm:$0xff]
      %v540 = vld [vmem:[#allocation2 + $0xb0] sm:$0xff]
      %v541 = vld [vmem:[#allocation2 + $0xc0] sm:$0xff]
      %v542 = vld [vmem:[#allocation2 + $0xc8] sm:$0xff]
      %v543 = vld [vmem:[#allocation2 + $0xd8] sm:$0xff]
      %v544 = vld [vmem:[#allocation2 + $0xe0] sm:$0xff]
      %v545 = vld [vmem:[#allocation2 + $0xf0] sm:$0xff]
      %v546 = vld [vmem:[#allocation2 + $0xf8] sm:$0xff]
      %v547 = vld [vmem:[#allocation2 + $0x108] sm:$0xff]
      %v548 = vld [vmem:[#allocation2 + $0x110] sm:$0xff]
      %v549 = vld [vmem:[#allocation2 + $0x120] sm:$0xff]
      %v550 = vld [vmem:[#allocation2 + $0x128] sm:$0xff]
      %v551 = vld [vmem:[#allocation2 + $0x138] sm:$0xff]
      %v552 = vld [vmem:[#allocation2 + $0x140] sm:$0xff]
      %v553 = vld [vmem:[#allocation2 + $0x150] sm:$0xff]
      %v554 = vld [vmem:[#allocation2 + $0x158] sm:$0xff]
      %v555 = vld [vmem:[#allocation2 + $0x168] sm:$0xff]
      %v556 = vld [vmem:[#allocation2 + $0x170] sm:$0xff]
      %v557 = vpack.c.bf16 %v526, %v525
      %v558 = vpack.c.bf16 %v528, %v527
      %v559 = vpack.c.bf16 %v530, %v529
      %v560 = vpack.c.bf16 %v532, %v531
      %v561 = vpack.c.bf16 %v534, %v533
      %v562 = vpack.c.bf16 %v536, %v535
      %v563 = vpack.c.bf16 %v538, %v537
      %v564 = vpack.c.bf16 %v540, %v539
      %v565 = vpack.c.bf16 %v542, %v541
      %v566 = vpack.c.bf16 %v544, %v543
      %v567 = vpack.c.bf16 %v546, %v545
      %v568 = vpack.c.bf16 %v548, %v547
      %v569 = vpack.c.bf16 %v550, %v549
      %v570 = vpack.c.bf16 %v552, %v551
      %v571 = vpack.c.bf16 %v554, %v553
      %v572 = vpack.c.bf16 %v556, %v555
      %v573 = vld [vmem:[#allocation2 + $0x1] sm:$0xff]
      %v574 = vld [vmem:[#allocation2 + $0x9] sm:$0xff]
      %v575 = vld [vmem:[#allocation2 + $0x19] sm:$0xff]
      %v576 = vld [vmem:[#allocation2 + $0x21] sm:$0xff]
      %v577 = vld [vmem:[#allocation2 + $0x31] sm:$0xff]
      %v578 = vld [vmem:[#allocation2 + $0x39] sm:$0xff]
      %v579 = vld [vmem:[#allocation2 + $0x49] sm:$0xff]
      %v580 = vld [vmem:[#allocation2 + $0x51] sm:$0xff]
      %v581 = vld [vmem:[#allocation2 + $0x61] sm:$0xff]
      %v582 = vld [vmem:[#allocation2 + $0x69] sm:$0xff]
      %v583 = vld [vmem:[#allocation2 + $0x79] sm:$0xff]
      %v584 = vld [vmem:[#allocation2 + $0x81] sm:$0xff]
      %v585 = vld [vmem:[#allocation2 + $0x91] sm:$0xff]
      %v586 = vld [vmem:[#allocation2 + $0x99] sm:$0xff]
      %v587 = vld [vmem:[#allocation2 + $0xa9] sm:$0xff]
      %v588 = vld [vmem:[#allocation2 + $0xb1] sm:$0xff]
      %v589 = vld [vmem:[#allocation2 + $0xc1] sm:$0xff]
      %v590 = vld [vmem:[#allocation2 + $0xc9] sm:$0xff]
      %v591 = vld [vmem:[#allocation2 + $0xd9] sm:$0xff]
      %v592 = vld [vmem:[#allocation2 + $0xe1] sm:$0xff]
      %v593 = vld [vmem:[#allocation2 + $0xf1] sm:$0xff]
      %v594 = vld [vmem:[#allocation2 + $0xf9] sm:$0xff]
      %v595 = vld [vmem:[#allocation2 + $0x109] sm:$0xff]
      %v596 = vld [vmem:[#allocation2 + $0x111] sm:$0xff]
      %v597 = vld [vmem:[#allocation2 + $0x121] sm:$0xff]
      %v598 = vld [vmem:[#allocation2 + $0x129] sm:$0xff]
      %v599 = vld [vmem:[#allocation2 + $0x139] sm:$0xff]
      %v600 = vld [vmem:[#allocation2 + $0x141] sm:$0xff]
      %v601 = vld [vmem:[#allocation2 + $0x151] sm:$0xff]
      %v602 = vld [vmem:[#allocation2 + $0x159] sm:$0xff]
      %v603 = vld [vmem:[#allocation2 + $0x169] sm:$0xff]
      %v604 = vld [vmem:[#allocation2 + $0x171] sm:$0xff]
      %v605 = vpack.c.bf16 %v574, %v573
      %v606 = vpack.c.bf16 %v576, %v575
      %v607 = vpack.c.bf16 %v578, %v577
      %v608 = vpack.c.bf16 %v580, %v579
      %v609 = vpack.c.bf16 %v582, %v581
      %v610 = vpack.c.bf16 %v584, %v583
      %v611 = vpack.c.bf16 %v586, %v585
      %v612 = vpack.c.bf16 %v588, %v587
      %v613 = vpack.c.bf16 %v590, %v589
      %v614 = vpack.c.bf16 %v592, %v591
      %v615 = vpack.c.bf16 %v594, %v593
      %v616 = vpack.c.bf16 %v596, %v595
      %v617 = vpack.c.bf16 %v598, %v597
      %v618 = vpack.c.bf16 %v600, %v599
      %v619 = vpack.c.bf16 %v602, %v601
      %v620 = vpack.c.bf16 %v604, %v603
      %v621 = vld [vmem:[#allocation2 + $0x2] sm:$0xff]
      %v622 = vld [vmem:[#allocation2 + $0xa] sm:$0xff]
      %v623 = vld [vmem:[#allocation2 + $0x1a] sm:$0xff]
      %v624 = vld [vmem:[#allocation2 + $0x22] sm:$0xff]
      %v625 = vld [vmem:[#allocation2 + $0x32] sm:$0xff]
      %v626 = vld [vmem:[#allocation2 + $0x3a] sm:$0xff]
      %v627 = vld [vmem:[#allocation2 + $0x4a] sm:$0xff]
      %v628 = vld [vmem:[#allocation2 + $0x52] sm:$0xff]
      %v629 = vld [vmem:[#allocation2 + $0x62] sm:$0xff]
      %v630 = vld [vmem:[#allocation2 + $0x6a] sm:$0xff]
      %v631 = vld [vmem:[#allocation2 + $0x7a] sm:$0xff]
      %v632 = vld [vmem:[#allocation2 + $0x82] sm:$0xff]
      %v633 = vld [vmem:[#allocation2 + $0x92] sm:$0xff]
      %v634 = vld [vmem:[#allocation2 + $0x9a] sm:$0xff]
      %v635 = vld [vmem:[#allocation2 + $0xaa] sm:$0xff]
      %v636 = vld [vmem:[#allocation2 + $0xb2] sm:$0xff]
      %v637 = vld [vmem:[#allocation2 + $0xc2] sm:$0xff]
      %v638 = vld [vmem:[#allocation2 + $0xca] sm:$0xff]
      %v639 = vld [vmem:[#allocation2 + $0xda] sm:$0xff]
      %v640 = vld [vmem:[#allocation2 + $0xe2] sm:$0xff]
      %v641 = vld [vmem:[#allocation2 + $0xf2] sm:$0xff]
      %v642 = vld [vmem:[#allocation2 + $0xfa] sm:$0xff]
      %v643 = vld [vmem:[#allocation2 + $0x10a] sm:$0xff]
      %v644 = vld [vmem:[#allocation2 + $0x112] sm:$0xff]
      %v645 = vld [vmem:[#allocation2 + $0x122] sm:$0xff]
      %v646 = vld [vmem:[#allocation2 + $0x12a] sm:$0xff]
      %v647 = vld [vmem:[#allocation2 + $0x13a] sm:$0xff]
      %v648 = vld [vmem:[#allocation2 + $0x142] sm:$0xff]
      %v649 = vld [vmem:[#allocation2 + $0x152] sm:$0xff]
      %v650 = vld [vmem:[#allocation2 + $0x15a] sm:$0xff]
      %v651 = vld [vmem:[#allocation2 + $0x16a] sm:$0xff]
      %v652 = vld [vmem:[#allocation2 + $0x172] sm:$0xff]
      %v653 = vpack.c.bf16 %v622, %v621
      %v654 = vpack.c.bf16 %v624, %v623
      %v655 = vpack.c.bf16 %v626, %v625
      %v656 = vpack.c.bf16 %v628, %v627
      %v657 = vpack.c.bf16 %v630, %v629
      %v658 = vpack.c.bf16 %v632, %v631
      %v659 = vpack.c.bf16 %v634, %v633
      %v660 = vpack.c.bf16 %v636, %v635
      %v661 = vpack.c.bf16 %v638, %v637
      %v662 = vpack.c.bf16 %v640, %v639
      %v663 = vpack.c.bf16 %v642, %v641
      %v664 = vpack.c.bf16 %v644, %v643
      %v665 = vpack.c.bf16 %v646, %v645
      %v666 = vpack.c.bf16 %v648, %v647
      %v667 = vpack.c.bf16 %v650, %v649
      %v668 = vpack.c.bf16 %v652, %v651
      %v669 = vld [vmem:[%s492] sm:$0xff]
      %v670 = vld [vmem:[%s492 + $0x8] sm:$0xff]
      %v671 = vld [vmem:[%s492 + $0x18] sm:$0xff]
      %v672 = vld [vmem:[%s492 + $0x20] sm:$0xff]
      %v673 = vld [vmem:[%s492 + $0x30] sm:$0xff]
      %v674 = vld [vmem:[%s492 + $0x38] sm:$0xff]
      %v675 = vld [vmem:[%s492 + $0x48] sm:$0xff]
      %v676 = vld [vmem:[%s492 + $0x50] sm:$0xff]
      %v677 = vld [vmem:[%s492 + $0x60] sm:$0xff]
      %v678 = vld [vmem:[%s492 + $0x68] sm:$0xff]
      %v679 = vld [vmem:[%s492 + $0x78] sm:$0xff]
      %v680 = vld [vmem:[%s492 + $0x80] sm:$0xff]
      %v681 = vld [vmem:[%s492 + $0x90] sm:$0xff]
      %v682 = vld [vmem:[%s492 + $0x98] sm:$0xff]
      %v683 = vld [vmem:[%s492 + $0xa8] sm:$0xff]
      %v684 = vld [vmem:[%s492 + $0xb0] sm:$0xff]
      %v685 = vld [vmem:[%s492 + $0xc0] sm:$0xff]
      %v686 = vld [vmem:[%s492 + $0xc8] sm:$0xff]
      %v687 = vld [vmem:[%s492 + $0xd8] sm:$0xff]
      %v688 = vld [vmem:[%s492 + $0xe0] sm:$0xff]
      %v689 = vld [vmem:[%s492 + $0xf0] sm:$0xff]
      %v690 = vld [vmem:[%s492 + $0xf8] sm:$0xff]
      %v691 = vld [vmem:[%s492 + $0x108] sm:$0xff]
      %v692 = vld [vmem:[%s492 + $0x110] sm:$0xff]
      %v693 = vld [vmem:[%s492 + $0x120] sm:$0xff]
      %v694 = vld [vmem:[%s492 + $0x128] sm:$0xff]
      %v695 = vld [vmem:[%s492 + $0x138] sm:$0xff]
      %v696 = vld [vmem:[%s492 + $0x140] sm:$0xff]
      %v697 = vld [vmem:[%s492 + $0x150] sm:$0xff]
      %v698 = vld [vmem:[%s492 + $0x158] sm:$0xff]
      %v699 = vld [vmem:[%s492 + $0x168] sm:$0xff]
      %v700 = vld [vmem:[%s492 + $0x170] sm:$0xff]
      %v701 = vpack.c.bf16 %v670, %v669
      %v702 = vpack.c.bf16 %v672, %v671
      %v703 = vpack.c.bf16 %v674, %v673
      %v704 = vpack.c.bf16 %v676, %v675
      %v705 = vpack.c.bf16 %v678, %v677
      %v706 = vpack.c.bf16 %v680, %v679
      %v707 = vpack.c.bf16 %v682, %v681
      %v708 = vpack.c.bf16 %v684, %v683
      %v709 = vpack.c.bf16 %v686, %v685
      %v710 = vpack.c.bf16 %v688, %v687
      %v711 = vpack.c.bf16 %v690, %v689
      %v712 = vpack.c.bf16 %v692, %v691
      %v713 = vpack.c.bf16 %v694, %v693
      %v714 = vpack.c.bf16 %v696, %v695
      %v715 = vpack.c.bf16 %v698, %v697
      %v716 = vpack.c.bf16 %v700, %v699
      %v717 = vld [vmem:[%s492 + $0x1] sm:$0xff]
      %v718 = vld [vmem:[%s492 + $0x9] sm:$0xff]
      %v719 = vld [vmem:[%s492 + $0x19] sm:$0xff]
      %v720 = vld [vmem:[%s492 + $0x21] sm:$0xff]
      %v721 = vld [vmem:[%s492 + $0x31] sm:$0xff]
      %v722 = vld [vmem:[%s492 + $0x39] sm:$0xff]
      %v723 = vld [vmem:[%s492 + $0x49] sm:$0xff]
      %v724 = vld [vmem:[%s492 + $0x51] sm:$0xff]
      %v725 = vld [vmem:[%s492 + $0x61] sm:$0xff]
      %v726 = vld [vmem:[%s492 + $0x69] sm:$0xff]
      %v727 = vld [vmem:[%s492 + $0x79] sm:$0xff]
      %v728 = vld [vmem:[%s492 + $0x81] sm:$0xff]
      %v729 = vld [vmem:[%s492 + $0x91] sm:$0xff]
      %v730 = vld [vmem:[%s492 + $0x99] sm:$0xff]
      %v731 = vld [vmem:[%s492 + $0xa9] sm:$0xff]
      %v732 = vld [vmem:[%s492 + $0xb1] sm:$0xff]
      %v733 = vld [vmem:[%s492 + $0xc1] sm:$0xff]
      %v734 = vld [vmem:[%s492 + $0xc9] sm:$0xff]
      %v735 = vld [vmem:[%s492 + $0xd9] sm:$0xff]
      %v736 = vld [vmem:[%s492 + $0xe1] sm:$0xff]
      %v737 = vld [vmem:[%s492 + $0xf1] sm:$0xff]
      %v738 = vld [vmem:[%s492 + $0xf9] sm:$0xff]
      %v739 = vld [vmem:[%s492 + $0x109] sm:$0xff]
      %v740 = vld [vmem:[%s492 + $0x111] sm:$0xff]
      %v741 = vld [vmem:[%s492 + $0x121] sm:$0xff]
      %v742 = vld [vmem:[%s492 + $0x129] sm:$0xff]
      %v743 = vld [vmem:[%s492 + $0x139] sm:$0xff]
      %v744 = vld [vmem:[%s492 + $0x141] sm:$0xff]
      %v745 = vld [vmem:[%s492 + $0x151] sm:$0xff]
      %v746 = vld [vmem:[%s492 + $0x159] sm:$0xff]
      %v747 = vld [vmem:[%s492 + $0x169] sm:$0xff]
      %v748 = vld [vmem:[%s492 + $0x171] sm:$0xff]
      %v749 = vpack.c.bf16 %v718, %v717
      %v750 = vpack.c.bf16 %v720, %v719
      %v751 = vpack.c.bf16 %v722, %v721
      %v752 = vpack.c.bf16 %v724, %v723
      %v753 = vpack.c.bf16 %v726, %v725
      %v754 = vpack.c.bf16 %v728, %v727
      %v755 = vpack.c.bf16 %v730, %v729
      %v756 = vpack.c.bf16 %v732, %v731
      %v757 = vpack.c.bf16 %v734, %v733
      %v758 = vpack.c.bf16 %v736, %v735
      %v759 = vpack.c.bf16 %v738, %v737
      %v760 = vpack.c.bf16 %v740, %v739
      %v761 = vpack.c.bf16 %v742, %v741
      %v762 = vpack.c.bf16 %v744, %v743
      %v763 = vpack.c.bf16 %v746, %v745
      %v764 = vpack.c.bf16 %v748, %v747
      %v765 = vld [vmem:[%s492 + $0x2] sm:$0xff]
      %v766 = vld [vmem:[%s492 + $0xa] sm:$0xff]
      %v767 = vld [vmem:[%s492 + $0x1a] sm:$0xff]
      %v768 = vld [vmem:[%s492 + $0x22] sm:$0xff]
      %v769 = vld [vmem:[%s492 + $0x32] sm:$0xff]
      %v770 = vld [vmem:[%s492 + $0x3a] sm:$0xff]
      %v771 = vld [vmem:[%s492 + $0x4a] sm:$0xff]
      %v772 = vld [vmem:[%s492 + $0x52] sm:$0xff]
      %v773 = vld [vmem:[%s492 + $0x62] sm:$0xff]
      %v774 = vld [vmem:[%s492 + $0x6a] sm:$0xff]
      %v775 = vld [vmem:[%s492 + $0x7a] sm:$0xff]
      %v776 = vld [vmem:[%s492 + $0x82] sm:$0xff]
      %v777 = vld [vmem:[%s492 + $0x92] sm:$0xff]
      %v778 = vld [vmem:[%s492 + $0x9a] sm:$0xff]
      %v779 = vld [vmem:[%s492 + $0xaa] sm:$0xff]
      %v780 = vld [vmem:[%s492 + $0xb2] sm:$0xff]
      %v781 = vld [vmem:[%s492 + $0xc2] sm:$0xff]
      %v782 = vld [vmem:[%s492 + $0xca] sm:$0xff]
      %v783 = vld [vmem:[%s492 + $0xda] sm:$0xff]
      %v784 = vld [vmem:[%s492 + $0xe2] sm:$0xff]
      %v785 = vld [vmem:[%s492 + $0xf2] sm:$0xff]
      %v786 = vld [vmem:[%s492 + $0xfa] sm:$0xff]
      %v787 = vld [vmem:[%s492 + $0x10a] sm:$0xff]
      %v788 = vld [vmem:[%s492 + $0x112] sm:$0xff]
      %v789 = vld [vmem:[%s492 + $0x122] sm:$0xff]
      %v790 = vld [vmem:[%s492 + $0x12a] sm:$0xff]
      %v791 = vld [vmem:[%s492 + $0x13a] sm:$0xff]
      %v792 = vld [vmem:[%s492 + $0x142] sm:$0xff]
      %v793 = vld [vmem:[%s492 + $0x152] sm:$0xff]
      %v794 = vld [vmem:[%s492 + $0x15a] sm:$0xff]
      %v795 = vld [vmem:[%s492 + $0x16a] sm:$0xff]
      %v796 = vld [vmem:[%s492 + $0x172] sm:$0xff]
      %v797 = vpack.c.bf16 %v766, %v765
      %v798 = vpack.c.bf16 %v768, %v767
      %v799 = vpack.c.bf16 %v770, %v769
      %v800 = vpack.c.bf16 %v772, %v771
      %v801 = vpack.c.bf16 %v774, %v773
      %v802 = vpack.c.bf16 %v776, %v775
      %v803 = vpack.c.bf16 %v778, %v777
      %v804 = vpack.c.bf16 %v780, %v779
      %v805 = vpack.c.bf16 %v782, %v781
      %v806 = vpack.c.bf16 %v784, %v783
      %v807 = vpack.c.bf16 %v786, %v785
      %v808 = vpack.c.bf16 %v788, %v787
      %v809 = vpack.c.bf16 %v790, %v789
      %v810 = vpack.c.bf16 %v792, %v791
      %v811 = vpack.c.bf16 %v794, %v793
      %v812 = vpack.c.bf16 %v796, %v795
      %s813 = scalar_lea.vmem [#allocation2], 48
      %v814 = vld [vmem:[%s813] sm:$0xff]
      %v815 = vld [vmem:[%s813 + $0x8] sm:$0xff]
      %v816 = vld [vmem:[%s813 + $0x18] sm:$0xff]
      %v817 = vld [vmem:[%s813 + $0x20] sm:$0xff]
      %v818 = vld [vmem:[%s813 + $0x30] sm:$0xff]
      %v819 = vld [vmem:[%s813 + $0x38] sm:$0xff]
      %v820 = vld [vmem:[%s813 + $0x48] sm:$0xff]
      %v821 = vld [vmem:[%s813 + $0x50] sm:$0xff]
      %v822 = vld [vmem:[%s813 + $0x60] sm:$0xff]
      %v823 = vld [vmem:[%s813 + $0x68] sm:$0xff]
      %v824 = vld [vmem:[%s813 + $0x78] sm:$0xff]
      %v825 = vld [vmem:[%s813 + $0x80] sm:$0xff]
      %v826 = vld [vmem:[%s813 + $0x90] sm:$0xff]
      %v827 = vld [vmem:[%s813 + $0x98] sm:$0xff]
      %v828 = vld [vmem:[%s813 + $0xa8] sm:$0xff]
      %v829 = vld [vmem:[%s813 + $0xb0] sm:$0xff]
      %v830 = vld [vmem:[%s813 + $0xc0] sm:$0xff]
      %v831 = vld [vmem:[%s813 + $0xc8] sm:$0xff]
      %v832 = vld [vmem:[%s813 + $0xd8] sm:$0xff]
      %v833 = vld [vmem:[%s813 + $0xe0] sm:$0xff]
      %v834 = vld [vmem:[%s813 + $0xf0] sm:$0xff]
      %v835 = vld [vmem:[%s813 + $0xf8] sm:$0xff]
      %v836 = vld [vmem:[%s813 + $0x108] sm:$0xff]
      %v837 = vld [vmem:[%s813 + $0x110] sm:$0xff]
      %v838 = vld [vmem:[%s813 + $0x120] sm:$0xff]
      %v839 = vld [vmem:[%s813 + $0x128] sm:$0xff]
      %v840 = vld [vmem:[%s813 + $0x138] sm:$0xff]
      %v841 = vld [vmem:[%s813 + $0x140] sm:$0xff]
      %v842 = vld [vmem:[%s813 + $0x150] sm:$0xff]
      %v843 = vld [vmem:[%s813 + $0x158] sm:$0xff]
      %v844 = vld [vmem:[%s813 + $0x168] sm:$0xff]
      %v845 = vld [vmem:[%s813 + $0x170] sm:$0xff]
      %v846 = vpack.c.bf16 %v815, %v814
      %v847 = vpack.c.bf16 %v817, %v816
      %v848 = vpack.c.bf16 %v819, %v818
      %v849 = vpack.c.bf16 %v821, %v820
      %v850 = vpack.c.bf16 %v823, %v822
      %v851 = vpack.c.bf16 %v825, %v824
      %v852 = vpack.c.bf16 %v827, %v826
      %v853 = vpack.c.bf16 %v829, %v828
      %v854 = vpack.c.bf16 %v831, %v830
      %v855 = vpack.c.bf16 %v833, %v832
      %v856 = vpack.c.bf16 %v835, %v834
      %v857 = vpack.c.bf16 %v837, %v836
      %v858 = vpack.c.bf16 %v839, %v838
      %v859 = vpack.c.bf16 %v841, %v840
      %v860 = vpack.c.bf16 %v843, %v842
      %v861 = vpack.c.bf16 %v845, %v844
      %v862 = vld [vmem:[%s813 + $0x1] sm:$0xff]
      %v863 = vld [vmem:[%s813 + $0x9] sm:$0xff]
      %v864 = vld [vmem:[%s813 + $0x19] sm:$0xff]
      %v865 = vld [vmem:[%s813 + $0x21] sm:$0xff]
      %v866 = vld [vmem:[%s813 + $0x31] sm:$0xff]
      %v867 = vld [vmem:[%s813 + $0x39] sm:$0xff]
      %v868 = vld [vmem:[%s813 + $0x49] sm:$0xff]
      %v869 = vld [vmem:[%s813 + $0x51] sm:$0xff]
      %v870 = vld [vmem:[%s813 + $0x61] sm:$0xff]
      %v871 = vld [vmem:[%s813 + $0x69] sm:$0xff]
      %v872 = vld [vmem:[%s813 + $0x79] sm:$0xff]
      %v873 = vld [vmem:[%s813 + $0x81] sm:$0xff]
      %v874 = vld [vmem:[%s813 + $0x91] sm:$0xff]
      %v875 = vld [vmem:[%s813 + $0x99] sm:$0xff]
      %v876 = vld [vmem:[%s813 + $0xa9] sm:$0xff]
      %v877 = vld [vmem:[%s813 + $0xb1] sm:$0xff]
      %v878 = vld [vmem:[%s813 + $0xc1] sm:$0xff]
      %v879 = vld [vmem:[%s813 + $0xc9] sm:$0xff]
      %v880 = vld [vmem:[%s813 + $0xd9] sm:$0xff]
      %v881 = vld [vmem:[%s813 + $0xe1] sm:$0xff]
      %v882 = vld [vmem:[%s813 + $0xf1] sm:$0xff]
      %v883 = vld [vmem:[%s813 + $0xf9] sm:$0xff]
      %v884 = vld [vmem:[%s813 + $0x109] sm:$0xff]
      %v885 = vld [vmem:[%s813 + $0x111] sm:$0xff]
      %v886 = vld [vmem:[%s813 + $0x121] sm:$0xff]
      %v887 = vld [vmem:[%s813 + $0x129] sm:$0xff]
      %v888 = vld [vmem:[%s813 + $0x139] sm:$0xff]
      %v889 = vld [vmem:[%s813 + $0x141] sm:$0xff]
      %v890 = vld [vmem:[%s813 + $0x151] sm:$0xff]
      %v891 = vld [vmem:[%s813 + $0x159] sm:$0xff]
      %v892 = vld [vmem:[%s813 + $0x169] sm:$0xff]
      %v893 = vld [vmem:[%s813 + $0x171] sm:$0xff]
      %v894 = vpack.c.bf16 %v863, %v862
      %v895 = vpack.c.bf16 %v865, %v864
      %v896 = vpack.c.bf16 %v867, %v866
      %v897 = vpack.c.bf16 %v869, %v868
      %v898 = vpack.c.bf16 %v871, %v870
      %v899 = vpack.c.bf16 %v873, %v872
      %v900 = vpack.c.bf16 %v875, %v874
      %v901 = vpack.c.bf16 %v877, %v876
      %v902 = vpack.c.bf16 %v879, %v878
      %v903 = vpack.c.bf16 %v881, %v880
      %v904 = vpack.c.bf16 %v883, %v882
      %v905 = vpack.c.bf16 %v885, %v884
      %v906 = vpack.c.bf16 %v887, %v886
      %v907 = vpack.c.bf16 %v889, %v888
      %v908 = vpack.c.bf16 %v891, %v890
      %v909 = vpack.c.bf16 %v893, %v892
      %v910 = vld [vmem:[%s813 + $0x2] sm:$0xff]
      %v911 = vld [vmem:[%s813 + $0xa] sm:$0xff]
      %v912 = vld [vmem:[%s813 + $0x1a] sm:$0xff]
      %v913 = vld [vmem:[%s813 + $0x22] sm:$0xff]
      %v914 = vld [vmem:[%s813 + $0x32] sm:$0xff]
      %v915 = vld [vmem:[%s813 + $0x3a] sm:$0xff]
      %v916 = vld [vmem:[%s813 + $0x4a] sm:$0xff]
      %v917 = vld [vmem:[%s813 + $0x52] sm:$0xff]
      %v918 = vld [vmem:[%s813 + $0x62] sm:$0xff]
      %v919 = vld [vmem:[%s813 + $0x6a] sm:$0xff]
      %v920 = vld [vmem:[%s813 + $0x7a] sm:$0xff]
      %v921 = vld [vmem:[%s813 + $0x82] sm:$0xff]
      %v922 = vld [vmem:[%s813 + $0x92] sm:$0xff]
      %v923 = vld [vmem:[%s813 + $0x9a] sm:$0xff]
      %v924 = vld [vmem:[%s813 + $0xaa] sm:$0xff]
      %v925 = vld [vmem:[%s813 + $0xb2] sm:$0xff]
      %v926 = vld [vmem:[%s813 + $0xc2] sm:$0xff]
      %v927 = vld [vmem:[%s813 + $0xca] sm:$0xff]
      %v928 = vld [vmem:[%s813 + $0xda] sm:$0xff]
      %v929 = vld [vmem:[%s813 + $0xe2] sm:$0xff]
      %v930 = vld [vmem:[%s813 + $0xf2] sm:$0xff]
      %v931 = vld [vmem:[%s813 + $0xfa] sm:$0xff]
      %v932 = vld [vmem:[%s813 + $0x10a] sm:$0xff]
      %v933 = vld [vmem:[%s813 + $0x112] sm:$0xff]
      %v934 = vld [vmem:[%s813 + $0x122] sm:$0xff]
      %v935 = vld [vmem:[%s813 + $0x12a] sm:$0xff]
      %v936 = vld [vmem:[%s813 + $0x13a] sm:$0xff]
      %v937 = vld [vmem:[%s813 + $0x142] sm:$0xff]
      %v938 = vld [vmem:[%s813 + $0x152] sm:$0xff]
      %v939 = vld [vmem:[%s813 + $0x15a] sm:$0xff]
      %v940 = vld [vmem:[%s813 + $0x16a] sm:$0xff]
      %v941 = vld [vmem:[%s813 + $0x172] sm:$0xff]
      %v942 = vpack.c.bf16 %v911, %v910
      %v943 = vpack.c.bf16 %v913, %v912
      %v944 = vpack.c.bf16 %v915, %v914
      %v945 = vpack.c.bf16 %v917, %v916
      %v946 = vpack.c.bf16 %v919, %v918
      %v947 = vpack.c.bf16 %v921, %v920
      %v948 = vpack.c.bf16 %v923, %v922
      %v949 = vpack.c.bf16 %v925, %v924
      %v950 = vpack.c.bf16 %v927, %v926
      %v951 = vpack.c.bf16 %v929, %v928
      %v952 = vpack.c.bf16 %v931, %v930
      %v953 = vpack.c.bf16 %v933, %v932
      %v954 = vpack.c.bf16 %v935, %v934
      %v955 = vpack.c.bf16 %v937, %v936
      %v956 = vpack.c.bf16 %v939, %v938
      %v957 = vpack.c.bf16 %v941, %v940
      %974 = vrot.lane.b32.xlu0 %v605, 64
      %v975 = vpop.permute.xlu0 %974
      %976 = vrot.lane.b32.xlu0 %v606, 64
      %v977 = vpop.permute.xlu0 %976
      %978 = vrot.lane.b32.xlu0 %v607, 64
      %v979 = vpop.permute.xlu0 %978
      %980 = vrot.lane.b32.xlu0 %v608, 64
      %v981 = vpop.permute.xlu0 %980
      %982 = vrot.lane.b32.xlu0 %v609, 64
      %v983 = vpop.permute.xlu0 %982
      %984 = vrot.lane.b32.xlu0 %v610, 64
      %v985 = vpop.permute.xlu0 %984
      %986 = vrot.lane.b32.xlu0 %v611, 64
      %v987 = vpop.permute.xlu0 %986
      %988 = vrot.lane.b32.xlu0 %v612, 64
      %v989 = vpop.permute.xlu0 %988
      %990 = vrot.lane.b32.xlu0 %v613, 64
      %v991 = vpop.permute.xlu0 %990
      %992 = vrot.lane.b32.xlu0 %v614, 64
      %v993 = vpop.permute.xlu0 %992
      %994 = vrot.lane.b32.xlu0 %v615, 64
      %v995 = vpop.permute.xlu0 %994
      %996 = vrot.lane.b32.xlu0 %v616, 64
      %v997 = vpop.permute.xlu0 %996
      %998 = vrot.lane.b32.xlu0 %v617, 64
      %v999 = vpop.permute.xlu0 %998
      %1000 = vrot.lane.b32.xlu0 %v618, 64
      %v1001 = vpop.permute.xlu0 %1000
      %1002 = vrot.lane.b32.xlu0 %v619, 64
      %v1003 = vpop.permute.xlu0 %1002
      %1004 = vrot.lane.b32.xlu0 %v620, 64
      %v1005 = vpop.permute.xlu0 %1004
      %1022 = vrot.lane.b32.xlu0 %v749, 64
      %v1023 = vpop.permute.xlu0 %1022
      %1024 = vrot.lane.b32.xlu0 %v750, 64
      %v1025 = vpop.permute.xlu0 %1024
      %1026 = vrot.lane.b32.xlu0 %v751, 64
      %v1027 = vpop.permute.xlu0 %1026
      %1028 = vrot.lane.b32.xlu0 %v752, 64
      %v1029 = vpop.permute.xlu0 %1028
      %1030 = vrot.lane.b32.xlu0 %v753, 64
      %v1031 = vpop.permute.xlu0 %1030
      %1032 = vrot.lane.b32.xlu0 %v754, 64
      %v1033 = vpop.permute.xlu0 %1032
      %1034 = vrot.lane.b32.xlu0 %v755, 64
      %v1035 = vpop.permute.xlu0 %1034
      %1036 = vrot.lane.b32.xlu0 %v756, 64
      %v1037 = vpop.permute.xlu0 %1036
      %1038 = vrot.lane.b32.xlu0 %v757, 64
      %v1039 = vpop.permute.xlu0 %1038
      %1040 = vrot.lane.b32.xlu0 %v758, 64
      %v1041 = vpop.permute.xlu0 %1040
      %1042 = vrot.lane.b32.xlu0 %v759, 64
      %v1043 = vpop.permute.xlu0 %1042
      %1044 = vrot.lane.b32.xlu0 %v760, 64
      %v1045 = vpop.permute.xlu0 %1044
      %1046 = vrot.lane.b32.xlu0 %v761, 64
      %v1047 = vpop.permute.xlu0 %1046
      %1048 = vrot.lane.b32.xlu0 %v762, 64
      %v1049 = vpop.permute.xlu0 %1048
      %1050 = vrot.lane.b32.xlu0 %v763, 64
      %v1051 = vpop.permute.xlu0 %1050
      %1052 = vrot.lane.b32.xlu0 %v764, 64
      %v1053 = vpop.permute.xlu0 %1052
      %v1056 = vsel %vm198, %v557, %v975
      %v1060 = vsel %vm198, %v558, %v977
      %v1064 = vsel %vm198, %v559, %v979
      %v1068 = vsel %vm198, %v560, %v981
      %v1072 = vsel %vm198, %v561, %v983
      %v1076 = vsel %vm198, %v562, %v985
      %v1080 = vsel %vm198, %v563, %v987
      %v1084 = vsel %vm198, %v564, %v989
      %v1088 = vsel %vm198, %v565, %v991
      %v1092 = vsel %vm198, %v566, %v993
      %v1096 = vsel %vm198, %v567, %v995
      %v1100 = vsel %vm198, %v568, %v997
      %v1104 = vsel %vm198, %v569, %v999
      %v1108 = vsel %vm198, %v570, %v1001
      %v1112 = vsel %vm198, %v571, %v1003
      %v1116 = vsel %vm198, %v572, %v1005
      %v1120 = vsel %vm198, %v701, %v1023
      %v1124 = vsel %vm198, %v702, %v1025
      %v1128 = vsel %vm198, %v703, %v1027
      %v1132 = vsel %vm198, %v704, %v1029
      %v1136 = vsel %vm198, %v705, %v1031
      %v1140 = vsel %vm198, %v706, %v1033
      %v1144 = vsel %vm198, %v707, %v1035
      %v1148 = vsel %vm198, %v708, %v1037
      %v1152 = vsel %vm198, %v709, %v1039
      %v1156 = vsel %vm198, %v710, %v1041
      %v1160 = vsel %vm198, %v711, %v1043
      %v1164 = vsel %vm198, %v712, %v1045
      %v1168 = vsel %vm198, %v713, %v1047
      %v1172 = vsel %vm198, %v714, %v1049
      %v1176 = vsel %vm198, %v715, %v1051
      %v1180 = vsel %vm198, %v716, %v1053
      %v1182 = vld [vmem:[%s3] sm:$0xf]
      %v1185 = vunpack.c.l.s4 1983009808
      %v1186 = vunpack.c.0.s8 %v1185
      %v1187 = vlaneseq
      %v1188 = vshrl.u32 %v1187, 7
      %v1189 = vsub.s32 %v1186, %v1188
      %v1190 = vrot.slane %v1182, %v1189
      %v1191 = vcombine.high %v1190, %v1190
      %1194 = vmatprep.subr.bf16.mxu0 %v1120
      %1195 = vmatpush1.bf16.xpose.msra.mxu0 %v1056
      %1196 = vmatprep.subr.bf16.mxu0 %v1124
      %1197 = vmatpush1.bf16.xpose.msra.mxu0 %v1060
      %1198 = vmatprep.subr.bf16.mxu0 %v1128
      %1199 = vmatpush1.bf16.xpose.msra.mxu0 %v1064
      %1200 = vmatprep.subr.bf16.mxu0 %v1132
      %1201 = vmatpush1.bf16.xpose.msra.mxu0 %v1068
      %1202 = vmatprep.subr.bf16.mxu0 %v1136
      %1203 = vmatpush1.bf16.xpose.msra.mxu0 %v1072
      %1204 = vmatprep.subr.bf16.mxu0 %v1140
      %1205 = vmatpush1.bf16.xpose.msra.mxu0 %v1076
      %1206 = vmatprep.subr.bf16.mxu0 %v1144
      %1207 = vmatpush1.bf16.xpose.msra.mxu0 %v1080
      %1208 = vmatprep.subr.bf16.mxu0 %v1148
      %1209 = vmatpush1.bf16.xpose.msra.mxu0 %v1084
      %1210 = vmatprep.subr.bf16.mxu0 %v1152
      %1211 = vmatpush1.bf16.xpose.msra.mxu0 %v1088
      %1212 = vmatprep.subr.bf16.mxu0 %v1156
      %1213 = vmatpush1.bf16.xpose.msra.mxu0 %v1092
      %1214 = vmatprep.subr.bf16.mxu0 %v1160
      %1215 = vmatpush1.bf16.xpose.msra.mxu0 %v1096
      %1216 = vmatprep.subr.bf16.mxu0 %v1164
      %1217 = vmatpush1.bf16.xpose.msra.mxu0 %v1100
      %1218 = vmatprep.subr.bf16.mxu0 %v1168
      %1219 = vmatpush1.bf16.xpose.msra.mxu0 %v1104
      %1220 = vmatprep.subr.bf16.mxu0 %v1172
      %1221 = vmatpush1.bf16.xpose.msra.mxu0 %v1108
      %1222 = vmatprep.subr.bf16.mxu0 %v1176
      %1223 = vmatpush1.bf16.xpose.msra.mxu0 %v1112
      %1224 = vmatprep.subr.bf16.mxu0 %v1180
      %1225 = vmatpush1.bf16.xpose.msra.mxu0 %v1116
      %1226 = vmatprep.mubr.bf16.mxu0 %v1191
      %1227 = vmatmul.mubr.bf16.gmra.mrb[0].mxu0 %v1190
      %v1228 = vpop.f32.mrb[0].mxu0
      %v1229 = vadd.f32 0.0, %v1228
      %v1230 = vpop.f32.mrb[0].mxu0
      %v1231 = vadd.f32 0.0, %v1230
      %v1232 = vpop.f32.mrb[0].mxu0
      %v1233 = vpop.f32.mrb[0].mxu0
      %1234 = vdwg.mxu0
      %v1235 = vtanh.pop %v1229
      %v1236 = vtanh.pop %v1231
      %v1239 = vcombine.low %v1235, %v1236
      %1241 = vst [vmem:[%s197] sm:$0x77] %v1239
      %1258 = vrot.lane.b32.xlu0 %v653, 64
      %v1259 = vpop.permute.xlu0 %1258
      %1260 = vrot.lane.b32.xlu0 %v654, 64
      %v1261 = vpop.permute.xlu0 %1260
      %1262 = vrot.lane.b32.xlu0 %v655, 64
      %v1263 = vpop.permute.xlu0 %1262
      %1264 = vrot.lane.b32.xlu0 %v656, 64
      %v1265 = vpop.permute.xlu0 %1264
      %1266 = vrot.lane.b32.xlu0 %v657, 64
      %v1267 = vpop.permute.xlu0 %1266
      %1268 = vrot.lane.b32.xlu0 %v658, 64
      %v1269 = vpop.permute.xlu0 %1268
      %1270 = vrot.lane.b32.xlu0 %v659, 64
      %v1271 = vpop.permute.xlu0 %1270
      %1272 = vrot.lane.b32.xlu0 %v660, 64
      %v1273 = vpop.permute.xlu0 %1272
      %1274 = vrot.lane.b32.xlu0 %v661, 64
      %v1275 = vpop.permute.xlu0 %1274
      %1276 = vrot.lane.b32.xlu0 %v662, 64
      %v1277 = vpop.permute.xlu0 %1276
      %1278 = vrot.lane.b32.xlu0 %v663, 64
      %v1279 = vpop.permute.xlu0 %1278
      %1280 = vrot.lane.b32.xlu0 %v664, 64
      %v1281 = vpop.permute.xlu0 %1280
      %1282 = vrot.lane.b32.xlu0 %v665, 64
      %v1283 = vpop.permute.xlu0 %1282
      %1284 = vrot.lane.b32.xlu0 %v666, 64
      %v1285 = vpop.permute.xlu0 %1284
      %1286 = vrot.lane.b32.xlu0 %v667, 64
      %v1287 = vpop.permute.xlu0 %1286
      %1288 = vrot.lane.b32.xlu0 %v668, 64
      %v1289 = vpop.permute.xlu0 %1288
      %1306 = vrot.lane.b32.xlu0 %v797, 64
      %v1307 = vpop.permute.xlu0 %1306
      %1308 = vrot.lane.b32.xlu0 %v798, 64
      %v1309 = vpop.permute.xlu0 %1308
      %1310 = vrot.lane.b32.xlu0 %v799, 64
      %v1311 = vpop.permute.xlu0 %1310
      %1312 = vrot.lane.b32.xlu0 %v800, 64
      %v1313 = vpop.permute.xlu0 %1312
      %1314 = vrot.lane.b32.xlu0 %v801, 64
      %v1315 = vpop.permute.xlu0 %1314
      %1316 = vrot.lane.b32.xlu0 %v802, 64
      %v1317 = vpop.permute.xlu0 %1316
      %1318 = vrot.lane.b32.xlu0 %v803, 64
      %v1319 = vpop.permute.xlu0 %1318
      %1320 = vrot.lane.b32.xlu0 %v804, 64
      %v1321 = vpop.permute.xlu0 %1320
      %1322 = vrot.lane.b32.xlu0 %v805, 64
      %v1323 = vpop.permute.xlu0 %1322
      %1324 = vrot.lane.b32.xlu0 %v806, 64
      %v1325 = vpop.permute.xlu0 %1324
      %1326 = vrot.lane.b32.xlu0 %v807, 64
      %v1327 = vpop.permute.xlu0 %1326
      %1328 = vrot.lane.b32.xlu0 %v808, 64
      %v1329 = vpop.permute.xlu0 %1328
      %1330 = vrot.lane.b32.xlu0 %v809, 64
      %v1331 = vpop.permute.xlu0 %1330
      %1332 = vrot.lane.b32.xlu0 %v810, 64
      %v1333 = vpop.permute.xlu0 %1332
      %1334 = vrot.lane.b32.xlu0 %v811, 64
      %v1335 = vpop.permute.xlu0 %1334
      %1336 = vrot.lane.b32.xlu0 %v812, 64
      %v1337 = vpop.permute.xlu0 %1336
      %v1340 = vsel %vm198, %v605, %v1259
      %v1344 = vsel %vm198, %v606, %v1261
      %v1348 = vsel %vm198, %v607, %v1263
      %v1352 = vsel %vm198, %v608, %v1265
      %v1356 = vsel %vm198, %v609, %v1267
      %v1360 = vsel %vm198, %v610, %v1269
      %v1364 = vsel %vm198, %v611, %v1271
      %v1368 = vsel %vm198, %v612, %v1273
      %v1372 = vsel %vm198, %v613, %v1275
      %v1376 = vsel %vm198, %v614, %v1277
      %v1380 = vsel %vm198, %v615, %v1279
      %v1384 = vsel %vm198, %v616, %v1281
      %v1388 = vsel %vm198, %v617, %v1283
      %v1392 = vsel %vm198, %v618, %v1285
      %v1396 = vsel %vm198, %v619, %v1287
      %v1400 = vsel %vm198, %v620, %v1289
      %v1404 = vsel %vm198, %v749, %v1307
      %v1408 = vsel %vm198, %v750, %v1309
      %v1412 = vsel %vm198, %v751, %v1311
      %v1416 = vsel %vm198, %v752, %v1313
      %v1420 = vsel %vm198, %v753, %v1315
      %v1424 = vsel %vm198, %v754, %v1317
      %v1428 = vsel %vm198, %v755, %v1319
      %v1432 = vsel %vm198, %v756, %v1321
      %v1436 = vsel %vm198, %v757, %v1323
      %v1440 = vsel %vm198, %v758, %v1325
      %v1444 = vsel %vm198, %v759, %v1327
      %v1448 = vsel %vm198, %v760, %v1329
      %v1452 = vsel %vm198, %v761, %v1331
      %v1456 = vsel %vm198, %v762, %v1333
      %v1460 = vsel %vm198, %v763, %v1335
      %v1464 = vsel %vm198, %v764, %v1337
      %s1466 = scalar_lea.vmem %s3, 4
      %v1467 = vld [vmem:[%s1466] sm:$0xf]
      %v1470 = vunpack.c.l.s4 1983009808
      %v1471 = vunpack.c.0.s8 %v1470
      %v1472 = vlaneseq
      %v1473 = vshrl.u32 %v1472, 7
      %v1474 = vsub.s32 %v1471, %v1473
      %v1475 = vrot.slane %v1467, %v1474
      %v1476 = vcombine.high %v1475, %v1475
      %1479 = vmatprep.subr.bf16.mxu0 %v1404
      %1480 = vmatpush1.bf16.xpose.msra.mxu0 %v1340
      %1481 = vmatprep.subr.bf16.mxu0 %v1408
      %1482 = vmatpush1.bf16.xpose.msra.mxu0 %v1344
      %1483 = vmatprep.subr.bf16.mxu0 %v1412
      %1484 = vmatpush1.bf16.xpose.msra.mxu0 %v1348
      %1485 = vmatprep.subr.bf16.mxu0 %v1416
      %1486 = vmatpush1.bf16.xpose.msra.mxu0 %v1352
      %1487 = vmatprep.subr.bf16.mxu0 %v1420
      %1488 = vmatpush1.bf16.xpose.msra.mxu0 %v1356
      %1489 = vmatprep.subr.bf16.mxu0 %v1424
      %1490 = vmatpush1.bf16.xpose.msra.mxu0 %v1360
      %1491 = vmatprep.subr.bf16.mxu0 %v1428
      %1492 = vmatpush1.bf16.xpose.msra.mxu0 %v1364
      %1493 = vmatprep.subr.bf16.mxu0 %v1432
      %1494 = vmatpush1.bf16.xpose.msra.mxu0 %v1368
      %1495 = vmatprep.subr.bf16.mxu0 %v1436
      %1496 = vmatpush1.bf16.xpose.msra.mxu0 %v1372
      %1497 = vmatprep.subr.bf16.mxu0 %v1440
      %1498 = vmatpush1.bf16.xpose.msra.mxu0 %v1376
      %1499 = vmatprep.subr.bf16.mxu0 %v1444
      %1500 = vmatpush1.bf16.xpose.msra.mxu0 %v1380
      %1501 = vmatprep.subr.bf16.mxu0 %v1448
      %1502 = vmatpush1.bf16.xpose.msra.mxu0 %v1384
      %1503 = vmatprep.subr.bf16.mxu0 %v1452
      %1504 = vmatpush1.bf16.xpose.msra.mxu0 %v1388
      %1505 = vmatprep.subr.bf16.mxu0 %v1456
      %1506 = vmatpush1.bf16.xpose.msra.mxu0 %v1392
      %1507 = vmatprep.subr.bf16.mxu0 %v1460
      %1508 = vmatpush1.bf16.xpose.msra.mxu0 %v1396
      %1509 = vmatprep.subr.bf16.mxu0 %v1464
      %1510 = vmatpush1.bf16.xpose.msra.mxu0 %v1400
      %1511 = vmatprep.mubr.bf16.mxu0 %v1476
      %1512 = vmatmul.mubr.bf16.gmra.mrb[0].mxu0 %v1475
      %v1513 = vpop.f32.mrb[0].mxu0
      %v1514 = vadd.f32 0.0, %v1513
      %v1515 = vpop.f32.mrb[0].mxu0
      %v1516 = vadd.f32 0.0, %v1515
      %v1517 = vpop.f32.mrb[0].mxu0
      %v1518 = vpop.f32.mrb[0].mxu0
      %1519 = vdwg.mxu0
      %v1520 = vtanh.pop %v1514
      %v1521 = vtanh.pop %v1516
      %v1524 = vcombine.low %v1520, %v1521
      %s1526 = scalar_lea.vmem %s197, 8
      %1527 = vst [vmem:[%s1526] sm:$0x77] %v1524
      %1544 = vrot.lane.b32.xlu0 %v894, 64
      %v1545 = vpop.permute.xlu0 %1544
      %1546 = vrot.lane.b32.xlu0 %v895, 64
      %v1547 = vpop.permute.xlu0 %1546
      %1548 = vrot.lane.b32.xlu0 %v896, 64
      %v1549 = vpop.permute.xlu0 %1548
      %1550 = vrot.lane.b32.xlu0 %v897, 64
      %v1551 = vpop.permute.xlu0 %1550
      %1552 = vrot.lane.b32.xlu0 %v898, 64
      %v1553 = vpop.permute.xlu0 %1552
      %1554 = vrot.lane.b32.xlu0 %v899, 64
      %v1555 = vpop.permute.xlu0 %1554
      %1556 = vrot.lane.b32.xlu0 %v900, 64
      %v1557 = vpop.permute.xlu0 %1556
      %1558 = vrot.lane.b32.xlu0 %v901, 64
      %v1559 = vpop.permute.xlu0 %1558
      %1560 = vrot.lane.b32.xlu0 %v902, 64
      %v1561 = vpop.permute.xlu0 %1560
      %1562 = vrot.lane.b32.xlu0 %v903, 64
      %v1563 = vpop.permute.xlu0 %1562
      %1564 = vrot.lane.b32.xlu0 %v904, 64
      %v1565 = vpop.permute.xlu0 %1564
      %1566 = vrot.lane.b32.xlu0 %v905, 64
      %v1567 = vpop.permute.xlu0 %1566
      %1568 = vrot.lane.b32.xlu0 %v906, 64
      %v1569 = vpop.permute.xlu0 %1568
      %1570 = vrot.lane.b32.xlu0 %v907, 64
      %v1571 = vpop.permute.xlu0 %1570
      %1572 = vrot.lane.b32.xlu0 %v908, 64
      %v1573 = vpop.permute.xlu0 %1572
      %1574 = vrot.lane.b32.xlu0 %v909, 64
      %v1575 = vpop.permute.xlu0 %1574
      %v1578 = vsel %vm198, %v846, %v1545
      %v1582 = vsel %vm198, %v847, %v1547
      %v1586 = vsel %vm198, %v848, %v1549
      %v1590 = vsel %vm198, %v849, %v1551
      %v1594 = vsel %vm198, %v850, %v1553
      %v1598 = vsel %vm198, %v851, %v1555
      %v1602 = vsel %vm198, %v852, %v1557
      %v1606 = vsel %vm198, %v853, %v1559
      %v1610 = vsel %vm198, %v854, %v1561
      %v1614 = vsel %vm198, %v855, %v1563
      %v1618 = vsel %vm198, %v856, %v1565
      %v1622 = vsel %vm198, %v857, %v1567
      %v1626 = vsel %vm198, %v858, %v1569
      %v1630 = vsel %vm198, %v859, %v1571
      %v1634 = vsel %vm198, %v860, %v1573
      %v1638 = vsel %vm198, %v861, %v1575
      %s1640 = scalar_lea.vmem %s3, 8
      %v1641 = vld [vmem:[%s1640] sm:$0xf]
      %v1644 = vunpack.c.l.s4 1983009808
      %v1645 = vunpack.c.0.s8 %v1644
      %v1646 = vlaneseq
      %v1647 = vshrl.u32 %v1646, 7
      %v1648 = vsub.s32 %v1645, %v1647
      %v1649 = vrot.slane %v1641, %v1648
      %v1650 = vcombine.high %v1649, %v1649
      %1653 = vmatprep.subr.bf16.mxu0 %v1578
      %1654 = vmatpush1.bf16.xpose.msra.mxu0 %v1120
      %1655 = vmatprep.subr.bf16.mxu0 %v1582
      %1656 = vmatpush1.bf16.xpose.msra.mxu0 %v1124
      %1657 = vmatprep.subr.bf16.mxu0 %v1586
      %1658 = vmatpush1.bf16.xpose.msra.mxu0 %v1128
      %1659 = vmatprep.subr.bf16.mxu0 %v1590
      %1660 = vmatpush1.bf16.xpose.msra.mxu0 %v1132
      %1661 = vmatprep.subr.bf16.mxu0 %v1594
      %1662 = vmatpush1.bf16.xpose.msra.mxu0 %v1136
      %1663 = vmatprep.subr.bf16.mxu0 %v1598
      %1664 = vmatpush1.bf16.xpose.msra.mxu0 %v1140
      %1665 = vmatprep.subr.bf16.mxu0 %v1602
      %1666 = vmatpush1.bf16.xpose.msra.mxu0 %v1144
      %1667 = vmatprep.subr.bf16.mxu0 %v1606
      %1668 = vmatpush1.bf16.xpose.msra.mxu0 %v1148
      %1669 = vmatprep.subr.bf16.mxu0 %v1610
      %1670 = vmatpush1.bf16.xpose.msra.mxu0 %v1152
      %1671 = vmatprep.subr.bf16.mxu0 %v1614
      %1672 = vmatpush1.bf16.xpose.msra.mxu0 %v1156
      %1673 = vmatprep.subr.bf16.mxu0 %v1618
      %1674 = vmatpush1.bf16.xpose.msra.mxu0 %v1160
      %1675 = vmatprep.subr.bf16.mxu0 %v1622
      %1676 = vmatpush1.bf16.xpose.msra.mxu0 %v1164
      %1677 = vmatprep.subr.bf16.mxu0 %v1626
      %1678 = vmatpush1.bf16.xpose.msra.mxu0 %v1168
      %1679 = vmatprep.subr.bf16.mxu0 %v1630
      %1680 = vmatpush1.bf16.xpose.msra.mxu0 %v1172
      %1681 = vmatprep.subr.bf16.mxu0 %v1634
      %1682 = vmatpush1.bf16.xpose.msra.mxu0 %v1176
      %1683 = vmatprep.subr.bf16.mxu0 %v1638
      %1684 = vmatpush1.bf16.xpose.msra.mxu0 %v1180
      %1685 = vmatprep.mubr.bf16.mxu0 %v1650
      %1686 = vmatmul.mubr.bf16.gmra.mrb[0].mxu0 %v1649
      %v1687 = vpop.f32.mrb[0].mxu0
      %v1688 = vadd.f32 0.0, %v1687
      %v1689 = vpop.f32.mrb[0].mxu0
      %v1690 = vadd.f32 0.0, %v1689
      %v1691 = vpop.f32.mrb[0].mxu0
      %v1692 = vpop.f32.mrb[0].mxu0
      %1693 = vdwg.mxu0
      %v1694 = vtanh.pop %v1688
      %v1695 = vtanh.pop %v1690
      %v1698 = vcombine.low %v1694, %v1695
      %s1700 = scalar_lea.vmem %s197, 16
      %1701 = vst [vmem:[%s1700] sm:$0x77] %v1698
      %1718 = vrot.lane.b32.xlu0 %v942, 64
      %v1719 = vpop.permute.xlu0 %1718
      %1720 = vrot.lane.b32.xlu0 %v943, 64
      %v1721 = vpop.permute.xlu0 %1720
      %1722 = vrot.lane.b32.xlu0 %v944, 64
      %v1723 = vpop.permute.xlu0 %1722
      %1724 = vrot.lane.b32.xlu0 %v945, 64
      %v1725 = vpop.permute.xlu0 %1724
      %1726 = vrot.lane.b32.xlu0 %v946, 64
      %v1727 = vpop.permute.xlu0 %1726
      %1728 = vrot.lane.b32.xlu0 %v947, 64
      %v1729 = vpop.permute.xlu0 %1728
      %1730 = vrot.lane.b32.xlu0 %v948, 64
      %v1731 = vpop.permute.xlu0 %1730
      %1732 = vrot.lane.b32.xlu0 %v949, 64
      %v1733 = vpop.permute.xlu0 %1732
      %1734 = vrot.lane.b32.xlu0 %v950, 64
      %v1735 = vpop.permute.xlu0 %1734
      %1736 = vrot.lane.b32.xlu0 %v951, 64
      %v1737 = vpop.permute.xlu0 %1736
      %1738 = vrot.lane.b32.xlu0 %v952, 64
      %v1739 = vpop.permute.xlu0 %1738
      %1740 = vrot.lane.b32.xlu0 %v953, 64
      %v1741 = vpop.permute.xlu0 %1740
      %1742 = vrot.lane.b32.xlu0 %v954, 64
      %v1743 = vpop.permute.xlu0 %1742
      %1744 = vrot.lane.b32.xlu0 %v955, 64
      %v1745 = vpop.permute.xlu0 %1744
      %1746 = vrot.lane.b32.xlu0 %v956, 64
      %v1747 = vpop.permute.xlu0 %1746
      %1748 = vrot.lane.b32.xlu0 %v957, 64
      %v1749 = vpop.permute.xlu0 %1748
      %v1752 = vsel %vm198, %v894, %v1719
      %v1756 = vsel %vm198, %v895, %v1721
      %v1760 = vsel %vm198, %v896, %v1723
      %v1764 = vsel %vm198, %v897, %v1725
      %v1768 = vsel %vm198, %v898, %v1727
      %v1772 = vsel %vm198, %v899, %v1729
      %v1776 = vsel %vm198, %v900, %v1731
      %v1780 = vsel %vm198, %v901, %v1733
      %v1784 = vsel %vm198, %v902, %v1735
      %v1788 = vsel %vm198, %v903, %v1737
      %v1792 = vsel %vm198, %v904, %v1739
      %v1796 = vsel %vm198, %v905, %v1741
      %v1800 = vsel %vm198, %v906, %v1743
      %v1804 = vsel %vm198, %v907, %v1745
      %v1808 = vsel %vm198, %v908, %v1747
      %v1812 = vsel %vm198, %v909, %v1749
      %s1814 = scalar_lea.vmem %s3, 12
      %v1815 = vld [vmem:[%s1814] sm:$0xf]
      %v1818 = vunpack.c.l.s4 1983009808
      %v1819 = vunpack.c.0.s8 %v1818
      %v1820 = vlaneseq
      %v1821 = vshrl.u32 %v1820, 7
      %v1822 = vsub.s32 %v1819, %v1821
      %v1823 = vrot.slane %v1815, %v1822
      %v1824 = vcombine.high %v1823, %v1823
      %1827 = vmatprep.subr.bf16.mxu0 %v1752
      %1828 = vmatpush1.bf16.xpose.msra.mxu0 %v1404
      %1829 = vmatprep.subr.bf16.mxu0 %v1756
      %1830 = vmatpush1.bf16.xpose.msra.mxu0 %v1408
      %1831 = vmatprep.subr.bf16.mxu0 %v1760
      %1832 = vmatpush1.bf16.xpose.msra.mxu0 %v1412
      %1833 = vmatprep.subr.bf16.mxu0 %v1764
      %1834 = vmatpush1.bf16.xpose.msra.mxu0 %v1416
      %1835 = vmatprep.subr.bf16.mxu0 %v1768
      %1836 = vmatpush1.bf16.xpose.msra.mxu0 %v1420
      %1837 = vmatprep.subr.bf16.mxu0 %v1772
      %1838 = vmatpush1.bf16.xpose.msra.mxu0 %v1424
      %1839 = vmatprep.subr.bf16.mxu0 %v1776
      %1840 = vmatpush1.bf16.xpose.msra.mxu0 %v1428
      %1841 = vmatprep.subr.bf16.mxu0 %v1780
      %1842 = vmatpush1.bf16.xpose.msra.mxu0 %v1432
      %1843 = vmatprep.subr.bf16.mxu0 %v1784
      %1844 = vmatpush1.bf16.xpose.msra.mxu0 %v1436
      %1845 = vmatprep.subr.bf16.mxu0 %v1788
      %1846 = vmatpush1.bf16.xpose.msra.mxu0 %v1440
      %1847 = vmatprep.subr.bf16.mxu0 %v1792
      %1848 = vmatpush1.bf16.xpose.msra.mxu0 %v1444
      %1849 = vmatprep.subr.bf16.mxu0 %v1796
      %1850 = vmatpush1.bf16.xpose.msra.mxu0 %v1448
      %1851 = vmatprep.subr.bf16.mxu0 %v1800
      %1852 = vmatpush1.bf16.xpose.msra.mxu0 %v1452
      %1853 = vmatprep.subr.bf16.mxu0 %v1804
      %1854 = vmatpush1.bf16.xpose.msra.mxu0 %v1456
      %1855 = vmatprep.subr.bf16.mxu0 %v1808
      %1856 = vmatpush1.bf16.xpose.msra.mxu0 %v1460
      %1857 = vmatprep.subr.bf16.mxu0 %v1812
      %1858 = vmatpush1.bf16.xpose.msra.mxu0 %v1464
      %1859 = vmatprep.mubr.bf16.mxu0 %v1824
      %1860 = vmatmul.mubr.bf16.gmra.mrb[0].mxu0 %v1823
      %v1861 = vpop.f32.mrb[0].mxu0
      %v1862 = vadd.f32 0.0, %v1861
      %v1863 = vpop.f32.mrb[0].mxu0
      %v1864 = vadd.f32 0.0, %v1863
      %v1865 = vpop.f32.mrb[0].mxu0
      %v1866 = vpop.f32.mrb[0].mxu0
      %1867 = vdwg.mxu0
      %v1868 = vtanh.pop %v1862
      %v1869 = vtanh.pop %v1864
      %v1872 = vcombine.low %v1868, %v1869
      %s1874 = scalar_lea.vmem %s197, 24
      %1875 = vst [vmem:[%s1874] sm:$0x77] %v1872
      %p1876 = scmp.lt.s32.totalorder %s15, 1
      %s1877 = scalar_select %p1876, %s15, 1
      %s1878 = smul.addr %s1877, 8
      %s1879 = smul.addr %s1878, 4
      %s1880 = scalar_lea.vmem %s4, %s1879
      // Predicated region
      $region37: #{generator_forward.5} parent=35 // pred_check
        %p1881 = pneg %p122
      $region38: #{generator_forward.5} parent=35 // pred_check_branch
        %1883 = sbr.rel (%p1881) target = $region40
      $region39: #{generator_forward.5} parent=35 // pred_region
        _
      $region40: #{generator_forward.5} parent=35 // pred_fallthru
        _
    $region36: #{generator_forward.5} parent=5 // pred_fallthru
      _
    %p1884 = scmp.le.s32.totalorder 2, %s10
    // Predicated region
    $region41: #{generator_forward.5} parent=5 // pred_check
      %p1885 = pneg %p1884
    $region42: #{generator_forward.5} parent=5 // pred_check_branch
      %1887 = sbr.rel (%p1885) target = $region44
    $region43: #{generator_forward.5} parent=5 // pred_region
      %s1888 = ssub.s32 %s10, 2
      // Predicated region
      $region45: #{generator_forward.5} parent=43 // pred_check
        %p1889 = pneg %p128
      $region46: #{generator_forward.5} parent=43 // pred_check_branch
        %1891 = sbr.rel (%p1889) target = $region48
      $region47: #{generator_forward.5} parent=43 // pred_region
        %p1892 = scmp.lt.s32.totalorder %s16, 1
        %s1893 = scalar_select %p1892, %s16, 1
        %s1894 = smul.addr %s1893, 8
        %s1895 = smul.addr %s1894, 4
        %s1896 = scalar_lea.vmem %s4, %s1895
      $region48: #{generator_forward.5} parent=43 // pred_fallthru
        _
    $region44: #{generator_forward.5} parent=5 // pred_fallthru
      _
  $region6: #{generator_forward.5} parent=0 // loop_footer
    %s14 = sadd.s32 1, %s10
  $region7: #{generator_forward.5} parent=0 // loop_footer_branch
    %9 = sbr.rel target = $region3
  $region8: #{generator_forward.5} parent=0 // loop_exit
    _

</llo_original>
